<compile_context>
chip_gen: v5e
topology: v5e:2x2
jax: 0.10.0
libtpu: 0.0.40
codegen_flags: <defaults>
</compile_context>

<pallas_src>
import jax
import jax.numpy as jnp
from jax.experimental import pallas as pl
from jax.experimental.pallas import tpu as pltpu


def forecaster_kernel(
    x2d_ref,     # (T*B, F)        t-major flattened input
    wih_ref,     # (F, 4*GP)       gate-spread, pre-transposed W_ih
    whh_ref,     # (GP, 4*GP)      gate-spread, zero-row-padded, pre-transposed W_hh
    bg_ref,      # (1, 4*GP)       gate-spread (b_ih + b_hh)
    w1_ref,      # (T*GP, H)       zero-row-padded, pre-transposed fc1 weight
    b1_ref,      # (B, H)
    dw_ref,      # (n_deep-1, H, H) pre-transposed deep-layer weights
    db_ref,      # (n_deep-1, B, H) pre-broadcast deep-layer biases
    wout_ref,    # (H, NP)         zero-col-padded, pre-transposed output weight
    bout_ref,    # (B, NP)
    out_ref,     # (B, NP)
    xg_ref,      # VMEM scratch (T*B, 4*GP): all-timestep gate pre-activations
    hflat_ref,   # VMEM scratch (B, T*GP):   hidden-state history (fc1 input)
):
    B = out_ref.shape[0]
    GP = whh_ref.shape[0]           # gate pitch (H rounded up to 128 lanes)
    T = x2d_ref.shape[0] // B
    H = w1_ref.shape[1]
    n_deep_m1 = dw_ref.shape[0]

    # ---- 1. Hoisted input projection: one matmul for all T steps, bias folded in.
    xg_ref[...] = (
        jnp.dot(x2d_ref[...], wih_ref[...], preferred_element_type=jnp.float32)
        + bg_ref[...])

    h = jnp.zeros((B, GP), jnp.float32)
    c = jnp.zeros((B, GP), jnp.float32)

    # ---- LSTM recurrence (unrolled over the small static T).
    for t in range(T):
        xg_t = xg_ref[pl.ds(t * B, B), :]                       # (B, 4*GP)
        if t == 0:
            gates = xg_t                                        # h0 == 0
        else:
            gates = xg_t + jnp.dot(h, whh_ref[...],
                                   preferred_element_type=jnp.float32)
        # Gate blocks are 128-lane aligned -> free slices, no cross-lane rotates.
        i_g = jax.nn.sigmoid(gates[:, 0 * GP:1 * GP])
        f_g = jax.nn.sigmoid(gates[:, 1 * GP:2 * GP])
        g_g = jnp.tanh(gates[:, 2 * GP:3 * GP])
        o_g = jax.nn.sigmoid(gates[:, 3 * GP:4 * GP])
        c = f_g * c + i_g * g_g
        h = o_g * jnp.tanh(c)
        # Lane-aligned store into the hidden-state slab (padded lanes stay 0).
        hflat_ref[:, t * GP:(t + 1) * GP] = h

    # ---- 2. fc1 as a single large-K matmul (dropout = identity in eval mode).
    y = (jnp.dot(hflat_ref[...], w1_ref[...], preferred_element_type=jnp.float32)
         + b1_ref[...])

    # ---- Deep dense stack: 9 x (ReLU -> Linear(H, H)); dropout = identity.
    for i in range(n_deep_m1):
        y = jnp.maximum(y, 0.0)
        y = jnp.dot(y, dw_ref[i], preferred_element_type=jnp.float32) + db_ref[i]

    # ---- Final ReLU -> Linear(H, n_outputs), written as a lane-dense tile.
    y = jnp.maximum(y, 0.0)
    out_ref[...] = (jnp.dot(y, wout_ref[...], preferred_element_type=jnp.float32)
                    + bout_ref[...])


def _round_up(v, m):
    return ((v + m - 1) // m) * m


@jax.jit
def lstm_forecaster_forward(x, params):
    """x: (B, T, F) float32. Returns (B, n_outputs) float32."""
    (w_ih, w_hh, b_ih, b_hh, w1, b1, dw, db, wout, bout) = params
    B, T, F = x.shape
    H = w_hh.shape[1]
    n_out = wout.shape[0]
    GP = _round_up(H, 128)      # gate pitch: each gate gets a lane-aligned block
    NP = _round_up(n_out, 128)  # lane-dense output tile

    # t-major flatten so the whole input projection is ONE matmul in-kernel.
    x2d = jnp.transpose(x, (1, 0, 2)).reshape(T * B, F)

    # Spread each gate into its own GP-lane block (zero padded) so per-step gate
    # extraction in the kernel is a vreg-aligned slice.
    wih_s = jnp.pad(jnp.transpose(w_ih).reshape(F, 4, H),
                    ((0, 0), (0, 0), (0, GP - H))).reshape(F, 4 * GP)
    whh_s = jnp.pad(jnp.transpose(w_hh).reshape(H, 4, H),
                    ((0, GP - H), (0, 0), (0, GP - H))).reshape(GP, 4 * GP)
    bg_s = jnp.pad((b_ih + b_hh).reshape(4, H),
                   ((0, 0), (0, GP - H))).reshape(1, 4 * GP)

    # fc1 weight laid out to match the (B, T*GP) hidden-state slab.
    w1_p = jnp.pad(jnp.transpose(w1).reshape(T, H, H),
                   ((0, 0), (0, GP - H), (0, 0))).reshape(T * GP, H)
    b1_b = jnp.broadcast_to(b1[None, :], (B, H))

    dw_t = jnp.transpose(dw, (0, 2, 1))                          # (n_deep-1, H, H)
    db_b = jnp.broadcast_to(db[:, None, :], (db.shape[0], B, H))  # hoisted broadcast

    wout_p = jnp.pad(jnp.transpose(wout), ((0, 0), (0, NP - n_out)))   # (H, NP)
    bout_b = jnp.broadcast_to(jnp.pad(bout, (0, NP - n_out))[None, :], (B, NP))

    args = (x2d, wih_s, whh_s, bg_s, w1_p, b1_b, dw_t, db_b, wout_p, bout_b)

    vmem = pl.BlockSpec(memory_space=pltpu.MemorySpace.VMEM)
    out_padded = pl.pallas_call(
        forecaster_kernel,
        out_shape=jax.ShapeDtypeStruct((B, NP), jnp.float32),
        in_specs=[vmem] * len(args),
        out_specs=vmem,
        scratch_shapes=[
            pltpu.VMEM((T * B, 4 * GP), jnp.float32),   # gate pre-activations
            pltpu.VMEM((B, T * GP), jnp.float32),       # hidden-state history
        ],
    )(*args)
    return out_padded[:, :n_out]


def ref_forward(x, params):
    """Pure-JAX reference mirroring the PyTorch forward (eval mode)."""
    (w_ih, w_hh, b_ih, b_hh, w1, b1, dw, db, wout, bout) = params
    B, T, F = x.shape
    H = w_hh.shape[1]
    h = jnp.zeros((B, H), jnp.float32)
    c = jnp.zeros((B, H), jnp.float32)
    outs = []
    for t in range(T):
        gates = x[:, t, :] @ w_ih.T + b_ih + h @ w_hh.T + b_hh
        i_g = jax.nn.sigmoid(gates[:, 0 * H:1 * H])
        f_g = jax.nn.sigmoid(gates[:, 1 * H:2 * H])
        g_g = jnp.tanh(gates[:, 2 * H:3 * H])
        o_g = jax.nn.sigmoid(gates[:, 3 * H:4 * H])
        c = f_g * c + i_g * g_g
        h = o_g * jnp.tanh(c)
        outs.append(h)
    flat = jnp.stack(outs, axis=1).reshape(B, -1)       # (B, T*H)
    y = flat @ w1.T + b1
    for i in range(dw.shape[0]):
        y = jnp.maximum(y, 0.0) @ dw[i].T + db[i]
    y = jnp.maximum(y, 0.0) @ wout.T + bout
    return y


def init_params(key, n_features, n_hidden, n_outputs, sequence_len, n_deep_layers):
    """Deterministic synthetic init (uniform, PyTorch-like ranges)."""
    ks = jax.random.split(key, 10)
    H = n_hidden
    s_lstm = 1.0 / jnp.sqrt(H)

    def u(k, shape, scale):
        return jax.random.uniform(k, shape, jnp.float32, -scale, scale)

    w_ih = u(ks[0], (4 * H, n_features), s_lstm)
    w_hh = u(ks[1], (4 * H, H), s_lstm)
    b_ih = u(ks[2], (4 * H,), s_lstm)
    b_hh = u(ks[3], (4 * H,), s_lstm)
    w1 = u(ks[4], (H, H * sequence_len), 1.0 / jnp.sqrt(H * sequence_len))
    b1 = u(ks[5], (H,), 1.0 / jnp.sqrt(H * sequence_len))
    dw = u(ks[6], (n_deep_layers - 1, H, H), 1.0 / jnp.sqrt(H))
    db = u(ks[7], (n_deep_layers - 1, H), 1.0 / jnp.sqrt(H))
    wout = u(ks[8], (n_outputs, H), 1.0 / jnp.sqrt(H))
    bout = u(ks[9], (n_outputs,), 1.0 / jnp.sqrt(H))
    return (w_ih, w_hh, b_ih, b_hh, w1, b1, dw, db, wout, bout)


if __name__ == "__main__":
    # Small, forward-consistent shapes.
    B, T, F, H, n_out = 2, 8, 4, 32, 1
    n_deep_layers = 10

    key = jax.random.PRNGKey(0)
    k_x, k_p = jax.random.split(key)
    x = jax.random.normal(k_x, (B, T, F), dtype=jnp.float32)
    params = init_params(k_p, F, H, n_out, T, n_deep_layers)

    out = jax.block_until_ready(lstm_forecaster_forward(x, params))
    expected = jax.block_until_ready(ref_forward(x, params))

    assert out.shape == (B, n_out)
    assert jnp.allclose(out, expected, rtol=1e-4, atol=1e-4), (out, expected)
    print("KERNEL_OK")
</pallas_src>

<mosaic_0001>
module attributes {stable_mosaic.version = 11 : i64} {
  func.func @forecaster_kernel(%arg0: memref<16x4xf32, #tpu.memory_space<vmem>>, %arg1: memref<4x512xf32, #tpu.memory_space<vmem>>, %arg2: memref<128x512xf32, #tpu.memory_space<vmem>>, %arg3: memref<1x512xf32, #tpu.memory_space<vmem>>, %arg4: memref<1024x32xf32, #tpu.memory_space<vmem>>, %arg5: memref<2x32xf32, #tpu.memory_space<vmem>>, %arg6: memref<9x32x32xf32, #tpu.memory_space<vmem>>, %arg7: memref<9x2x32xf32, #tpu.memory_space<vmem>>, %arg8: memref<32x128xf32, #tpu.memory_space<vmem>>, %arg9: memref<2x128xf32, #tpu.memory_space<vmem>>, %arg10: memref<2x128xf32, #tpu.memory_space<vmem>>, %arg11: memref<16x512xf32, #tpu.memory_space<vmem>>, %arg12: memref<2x1024xf32, #tpu.memory_space<vmem>>) attributes {dimension_semantics = [], scalar_prefetch = 0 : i64, scratch_operands = 2 : i64, tpu.core_type = #tpu.core_type<tc>} {
    %c0 = arith.constant 0 : index
    %c0_0 = arith.constant 0 : index
    %0 = vector.load %arg0[%c0, %c0_0] : memref<16x4xf32, #tpu.memory_space<vmem>>, vector<16x4xf32>
    %c0_1 = arith.constant 0 : index
    %c0_2 = arith.constant 0 : index
    %1 = vector.load %arg1[%c0_1, %c0_2] : memref<4x512xf32, #tpu.memory_space<vmem>>, vector<4x512xf32>
    %cst = arith.constant dense<0.000000e+00> : vector<16x512xf32>
    %2 = tpu.matmul %0, %1, %cst {dimension_numbers = #tpu.dot_dimension_numbers<[1], [0], [0], [1], [0, 0, 1, 1], [], []>} : vector<16x4xf32>, vector<4x512xf32>, vector<16x512xf32> -> vector<16x512xf32>
    %c0_3 = arith.constant 0 : index
    %c0_4 = arith.constant 0 : index
    %3 = vector.load %arg3[%c0_3, %c0_4] : memref<1x512xf32, #tpu.memory_space<vmem>>, vector<1x512xf32>
    %4 = vector.broadcast %3 : vector<1x512xf32> to vector<16x512xf32>
    %5 = arith.addf %2, %4 : vector<16x512xf32>
    %c0_5 = arith.constant 0 : index
    %c0_6 = arith.constant 0 : index
    %6 = vector.load %arg11[%c0_5, %c0_6] : memref<16x512xf32, #tpu.memory_space<vmem>>, vector<16x512xf32>
    tpu.vector_store %arg11[%c0_5, %c0_6], %5 {strides = array<i32>} : memref<16x512xf32, #tpu.memory_space<vmem>>, vector<16x512xf32>,
    %cst_7 = arith.constant 0.000000e+00 : f32
    %7 = vector.broadcast %cst_7 : f32 to vector<2x128xf32>
    %c0_8 = arith.constant 0 : index
    %c0_9 = arith.constant 0 : index
    %8 = vector.load %arg11[%c0_8, %c0_9] : memref<16x512xf32, #tpu.memory_space<vmem>>, vector<2x512xf32>
    %9 = vector.extract_strided_slice %8 {offsets = [0, 0], sizes = [2, 128], strides = [1, 1]} : vector<2x512xf32> to vector<2x128xf32>
    %10 = arith.negf %9 : vector<2x128xf32>
    %11 = math.exp %10 : vector<2x128xf32>
    %cst_10 = arith.constant 1.000000e+00 : f32
    %12 = vector.broadcast %cst_10 : f32 to vector<2x128xf32>
    %13 = arith.addf %12, %11 : vector<2x128xf32>
    %14 = arith.divf %12, %13 : vector<2x128xf32>
    %15 = vector.extract_strided_slice %8 {offsets = [0, 128], sizes = [2, 128], strides = [1, 1]} : vector<2x512xf32> to vector<2x128xf32>
    %16 = arith.negf %15 : vector<2x128xf32>
    %17 = math.exp %16 : vector<2x128xf32>
    %cst_11 = arith.constant 1.000000e+00 : f32
    %18 = vector.broadcast %cst_11 : f32 to vector<2x128xf32>
    %19 = arith.addf %18, %17 : vector<2x128xf32>
    %20 = arith.divf %18, %19 : vector<2x128xf32>
    %21 = vector.extract_strided_slice %8 {offsets = [0, 256], sizes = [2, 128], strides = [1, 1]} : vector<2x512xf32> to vector<2x128xf32>
    %22 = math.tanh %21 : vector<2x128xf32>
    %23 = vector.extract_strided_slice %8 {offsets = [0, 384], sizes = [2, 128], strides = [1, 1]} : vector<2x512xf32> to vector<2x128xf32>
    %24 = arith.negf %23 : vector<2x128xf32>
    %25 = math.exp %24 : vector<2x128xf32>
    %cst_12 = arith.constant 1.000000e+00 : f32
    %26 = vector.broadcast %cst_12 : f32 to vector<2x128xf32>
    %27 = arith.addf %26, %25 : vector<2x128xf32>
    %28 = arith.divf %26, %27 : vector<2x128xf32>
    %29 = arith.mulf %20, %7 : vector<2x128xf32>
    %30 = arith.mulf %14, %22 : vector<2x128xf32>
    %31 = arith.addf %29, %30 : vector<2x128xf32>
    %32 = math.tanh %31 : vector<2x128xf32>
    %33 = arith.mulf %28, %32 : vector<2x128xf32>
    %c0_13 = arith.constant 0 : index
    %c0_14 = arith.constant 0 : index
    %34 = vector.load %arg12[%c0_13, %c0_14] : memref<2x1024xf32, #tpu.memory_space<vmem>>, vector<2x128xf32>
    tpu.vector_store %arg12[%c0_13, %c0_14], %33 {strides = array<i32>} : memref<2x1024xf32, #tpu.memory_space<vmem>>, vector<2x128xf32>,
    %c2 = arith.constant 2 : index
    %c0_15 = arith.constant 0 : index
    %35 = vector.load %arg11[%c2, %c0_15] : memref<16x512xf32, #tpu.memory_space<vmem>>, vector<2x512xf32>
    %c0_16 = arith.constant 0 : index
    %c0_17 = arith.constant 0 : index
    %36 = vector.load %arg2[%c0_16, %c0_17] : memref<128x512xf32, #tpu.memory_space<vmem>>, vector<128x512xf32>
    %cst_18 = arith.constant dense<0.000000e+00> : vector<2x512xf32>
    %37 = tpu.matmul %33, %36, %cst_18 {dimension_numbers = #tpu.dot_dimension_numbers<[1], [0], [0], [1], [0, 0, 1, 1], [], []>} : vector<2x128xf32>, vector<128x512xf32>, vector<2x512xf32> -> vector<2x512xf32>
    %38 = arith.addf %35, %37 : vector<2x512xf32>
    %39 = vector.extract_strided_slice %38 {offsets = [0, 0], sizes = [2, 128], strides = [1, 1]} : vector<2x512xf32> to vector<2x128xf32>
    %40 = arith.negf %39 : vector<2x128xf32>
    %41 = math.exp %40 : vector<2x128xf32>
    %cst_19 = arith.constant 1.000000e+00 : f32
    %42 = vector.broadcast %cst_19 : f32 to vector<2x128xf32>
    %43 = arith.addf %42, %41 : vector<2x128xf32>
    %44 = arith.divf %42, %43 : vector<2x128xf32>
    %45 = vector.extract_strided_slice %38 {offsets = [0, 128], sizes = [2, 128], strides = [1, 1]} : vector<2x512xf32> to vector<2x128xf32>
    %46 = arith.negf %45 : vector<2x128xf32>
    %47 = math.exp %46 : vector<2x128xf32>
    %cst_20 = arith.constant 1.000000e+00 : f32
    %48 = vector.broadcast %cst_20 : f32 to vector<2x128xf32>
    %49 = arith.addf %48, %47 : vector<2x128xf32>
    %50 = arith.divf %48, %49 : vector<2x128xf32>
    %51 = vector.extract_strided_slice %38 {offsets = [0, 256], sizes = [2, 128], strides = [1, 1]} : vector<2x512xf32> to vector<2x128xf32>
    %52 = math.tanh %51 : vector<2x128xf32>
    %53 = vector.extract_strided_slice %38 {offsets = [0, 384], sizes = [2, 128], strides = [1, 1]} : vector<2x512xf32> to vector<2x128xf32>
    %54 = arith.negf %53 : vector<2x128xf32>
    %55 = math.exp %54 : vector<2x128xf32>
    %cst_21 = arith.constant 1.000000e+00 : f32
    %56 = vector.broadcast %cst_21 : f32 to vector<2x128xf32>
    %57 = arith.addf %56, %55 : vector<2x128xf32>
    %58 = arith.divf %56, %57 : vector<2x128xf32>
    %59 = arith.mulf %50, %31 : vector<2x128xf32>
    %60 = arith.mulf %44, %52 : vector<2x128xf32>
    %61 = arith.addf %59, %60 : vector<2x128xf32>
    %62 = math.tanh %61 : vector<2x128xf32>
    %63 = arith.mulf %58, %62 : vector<2x128xf32>
    %c0_22 = arith.constant 0 : index
    %c128 = arith.constant 128 : index
    %64 = vector.load %arg12[%c0_22, %c128] : memref<2x1024xf32, #tpu.memory_space<vmem>>, vector<2x128xf32>
    tpu.vector_store %arg12[%c0_22, %c128], %63 {strides = array<i32>} : memref<2x1024xf32, #tpu.memory_space<vmem>>, vector<2x128xf32>,
    %c4 = arith.constant 4 : index
    %c0_23 = arith.constant 0 : index
    %65 = vector.load %arg11[%c4, %c0_23] : memref<16x512xf32, #tpu.memory_space<vmem>>, vector<2x512xf32>
    %c0_24 = arith.constant 0 : index
    %c0_25 = arith.constant 0 : index
    %66 = vector.load %arg2[%c0_24, %c0_25] : memref<128x512xf32, #tpu.memory_space<vmem>>, vector<128x512xf32>
    %cst_26 = arith.constant dense<0.000000e+00> : vector<2x512xf32>
    %67 = tpu.matmul %63, %66, %cst_26 {dimension_numbers = #tpu.dot_dimension_numbers<[1], [0], [0], [1], [0, 0, 1, 1], [], []>} : vector<2x128xf32>, vector<128x512xf32>, vector<2x512xf32> -> vector<2x512xf32>
    %68 = arith.addf %65, %67 : vector<2x512xf32>
    %69 = vector.extract_strided_slice %68 {offsets = [0, 0], sizes = [2, 128], strides = [1, 1]} : vector<2x512xf32> to vector<2x128xf32>
    %70 = arith.negf %69 : vector<2x128xf32>
    %71 = math.exp %70 : vector<2x128xf32>
    %cst_27 = arith.constant 1.000000e+00 : f32
    %72 = vector.broadcast %cst_27 : f32 to vector<2x128xf32>
    %73 = arith.addf %72, %71 : vector<2x128xf32>
    %74 = arith.divf %72, %73 : vector<2x128xf32>
    %75 = vector.extract_strided_slice %68 {offsets = [0, 128], sizes = [2, 128], strides = [1, 1]} : vector<2x512xf32> to vector<2x128xf32>
    %76 = arith.negf %75 : vector<2x128xf32>
    %77 = math.exp %76 : vector<2x128xf32>
    %cst_28 = arith.constant 1.000000e+00 : f32
    %78 = vector.broadcast %cst_28 : f32 to vector<2x128xf32>
    %79 = arith.addf %78, %77 : vector<2x128xf32>
    %80 = arith.divf %78, %79 : vector<2x128xf32>
    %81 = vector.extract_strided_slice %68 {offsets = [0, 256], sizes = [2, 128], strides = [1, 1]} : vector<2x512xf32> to vector<2x128xf32>
    %82 = math.tanh %81 : vector<2x128xf32>
    %83 = vector.extract_strided_slice %68 {offsets = [0, 384], sizes = [2, 128], strides = [1, 1]} : vector<2x512xf32> to vector<2x128xf32>
    %84 = arith.negf %83 : vector<2x128xf32>
    %85 = math.exp %84 : vector<2x128xf32>
    %cst_29 = arith.constant 1.000000e+00 : f32
    %86 = vector.broadcast %cst_29 : f32 to vector<2x128xf32>
    %87 = arith.addf %86, %85 : vector<2x128xf32>
    %88 = arith.divf %86, %87 : vector<2x128xf32>
    %89 = arith.mulf %80, %61 : vector<2x128xf32>
    %90 = arith.mulf %74, %82 : vector<2x128xf32>
    %91 = arith.addf %89, %90 : vector<2x128xf32>
    %92 = math.tanh %91 : vector<2x128xf32>
    %93 = arith.mulf %88, %92 : vector<2x128xf32>
    %c0_30 = arith.constant 0 : index
    %c256 = arith.constant 256 : index
    %94 = vector.load %arg12[%c0_30, %c256] : memref<2x1024xf32, #tpu.memory_space<vmem>>, vector<2x128xf32>
    tpu.vector_store %arg12[%c0_30, %c256], %93 {strides = array<i32>} : memref<2x1024xf32, #tpu.memory_space<vmem>>, vector<2x128xf32>,
    %c6 = arith.constant 6 : index
    %c0_31 = arith.constant 0 : index
    %95 = vector.load %arg11[%c6, %c0_31] : memref<16x512xf32, #tpu.memory_space<vmem>>, vector<2x512xf32>
    %c0_32 = arith.constant 0 : index
    %c0_33 = arith.constant 0 : index
    %96 = vector.load %arg2[%c0_32, %c0_33] : memref<128x512xf32, #tpu.memory_space<vmem>>, vector<128x512xf32>
    %cst_34 = arith.constant dense<0.000000e+00> : vector<2x512xf32>
    %97 = tpu.matmul %93, %96, %cst_34 {dimension_numbers = #tpu.dot_dimension_numbers<[1], [0], [0], [1], [0, 0, 1, 1], [], []>} : vector<2x128xf32>, vector<128x512xf32>, vector<2x512xf32> -> vector<2x512xf32>
    %98 = arith.addf %95, %97 : vector<2x512xf32>
    %99 = vector.extract_strided_slice %98 {offsets = [0, 0], sizes = [2, 128], strides = [1, 1]} : vector<2x512xf32> to vector<2x128xf32>
    %100 = arith.negf %99 : vector<2x128xf32>
    %101 = math.exp %100 : vector<2x128xf32>
    %cst_35 = arith.constant 1.000000e+00 : f32
    %102 = vector.broadcast %cst_35 : f32 to vector<2x128xf32>
    %103 = arith.addf %102, %101 : vector<2x128xf32>
    %104 = arith.divf %102, %103 : vector<2x128xf32>
    %105 = vector.extract_strided_slice %98 {offsets = [0, 128], sizes = [2, 128], strides = [1, 1]} : vector<2x512xf32> to vector<2x128xf32>
    %106 = arith.negf %105 : vector<2x128xf32>
    %107 = math.exp %106 : vector<2x128xf32>
    %cst_36 = arith.constant 1.000000e+00 : f32
    %108 = vector.broadcast %cst_36 : f32 to vector<2x128xf32>
    %109 = arith.addf %108, %107 : vector<2x128xf32>
    %110 = arith.divf %108, %109 : vector<2x128xf32>
    %111 = vector.extract_strided_slice %98 {offsets = [0, 256], sizes = [2, 128], strides = [1, 1]} : vector<2x512xf32> to vector<2x128xf32>
    %112 = math.tanh %111 : vector<2x128xf32>
    %113 = vector.extract_strided_slice %98 {offsets = [0, 384], sizes = [2, 128], strides = [1, 1]} : vector<2x512xf32> to vector<2x128xf32>
    %114 = arith.negf %113 : vector<2x128xf32>
    %115 = math.exp %114 : vector<2x128xf32>
    %cst_37 = arith.constant 1.000000e+00 : f32
    %116 = vector.broadcast %cst_37 : f32 to vector<2x128xf32>
    %117 = arith.addf %116, %115 : vector<2x128xf32>
    %118 = arith.divf %116, %117 : vector<2x128xf32>
    %119 = arith.mulf %110, %91 : vector<2x128xf32>
    %120 = arith.mulf %104, %112 : vector<2x128xf32>
    %121 = arith.addf %119, %120 : vector<2x128xf32>
    %122 = math.tanh %121 : vector<2x128xf32>
    %123 = arith.mulf %118, %122 : vector<2x128xf32>
    %c0_38 = arith.constant 0 : index
    %c384 = arith.constant 384 : index
    %124 = vector.load %arg12[%c0_38, %c384] : memref<2x1024xf32, #tpu.memory_space<vmem>>, vector<2x128xf32>
    tpu.vector_store %arg12[%c0_38, %c384], %123 {strides = array<i32>} : memref<2x1024xf32, #tpu.memory_space<vmem>>, vector<2x128xf32>,
    %c8 = arith.constant 8 : index
    %c0_39 = arith.constant 0 : index
    %125 = vector.load %arg11[%c8, %c0_39] : memref<16x512xf32, #tpu.memory_space<vmem>>, vector<2x512xf32>
    %c0_40 = arith.constant 0 : index
    %c0_41 = arith.constant 0 : index
    %126 = vector.load %arg2[%c0_40, %c0_41] : memref<128x512xf32, #tpu.memory_space<vmem>>, vector<128x512xf32>
    %cst_42 = arith.constant dense<0.000000e+00> : vector<2x512xf32>
    %127 = tpu.matmul %123, %126, %cst_42 {dimension_numbers = #tpu.dot_dimension_numbers<[1], [0], [0], [1], [0, 0, 1, 1], [], []>} : vector<2x128xf32>, vector<128x512xf32>, vector<2x512xf32> -> vector<2x512xf32>
    %128 = arith.addf %125, %127 : vector<2x512xf32>
    %129 = vector.extract_strided_slice %128 {offsets = [0, 0], sizes = [2, 128], strides = [1, 1]} : vector<2x512xf32> to vector<2x128xf32>
    %130 = arith.negf %129 : vector<2x128xf32>
    %131 = math.exp %130 : vector<2x128xf32>
    %cst_43 = arith.constant 1.000000e+00 : f32
    %132 = vector.broadcast %cst_43 : f32 to vector<2x128xf32>
    %133 = arith.addf %132, %131 : vector<2x128xf32>
    %134 = arith.divf %132, %133 : vector<2x128xf32>
    %135 = vector.extract_strided_slice %128 {offsets = [0, 128], sizes = [2, 128], strides = [1, 1]} : vector<2x512xf32> to vector<2x128xf32>
    %136 = arith.negf %135 : vector<2x128xf32>
    %137 = math.exp %136 : vector<2x128xf32>
    %cst_44 = arith.constant 1.000000e+00 : f32
    %138 = vector.broadcast %cst_44 : f32 to vector<2x128xf32>
    %139 = arith.addf %138, %137 : vector<2x128xf32>
    %140 = arith.divf %138, %139 : vector<2x128xf32>
    %141 = vector.extract_strided_slice %128 {offsets = [0, 256], sizes = [2, 128], strides = [1, 1]} : vector<2x512xf32> to vector<2x128xf32>
    %142 = math.tanh %141 : vector<2x128xf32>
    %143 = vector.extract_strided_slice %128 {offsets = [0, 384], sizes = [2, 128], strides = [1, 1]} : vector<2x512xf32> to vector<2x128xf32>
    %144 = arith.negf %143 : vector<2x128xf32>
    %145 = math.exp %144 : vector<2x128xf32>
    %cst_45 = arith.constant 1.000000e+00 : f32
    %146 = vector.broadcast %cst_45 : f32 to vector<2x128xf32>
    %147 = arith.addf %146, %145 : vector<2x128xf32>
    %148 = arith.divf %146, %147 : vector<2x128xf32>
    %149 = arith.mulf %140, %121 : vector<2x128xf32>
    %150 = arith.mulf %134, %142 : vector<2x128xf32>
    %151 = arith.addf %149, %150 : vector<2x128xf32>
    %152 = math.tanh %151 : vector<2x128xf32>
    %153 = arith.mulf %148, %152 : vector<2x128xf32>
    %c0_46 = arith.constant 0 : index
    %c512 = arith.constant 512 : index
    %154 = vector.load %arg12[%c0_46, %c512] : memref<2x1024xf32, #tpu.memory_space<vmem>>, vector<2x128xf32>
    tpu.vector_store %arg12[%c0_46, %c512], %153 {strides = array<i32>} : memref<2x1024xf32, #tpu.memory_space<vmem>>, vector<2x128xf32>,
    %c10 = arith.constant 10 : index
    %c0_47 = arith.constant 0 : index
    %155 = vector.load %arg11[%c10, %c0_47] : memref<16x512xf32, #tpu.memory_space<vmem>>, vector<2x512xf32>
    %c0_48 = arith.constant 0 : index
    %c0_49 = arith.constant 0 : index
    %156 = vector.load %arg2[%c0_48, %c0_49] : memref<128x512xf32, #tpu.memory_space<vmem>>, vector<128x512xf32>
    %cst_50 = arith.constant dense<0.000000e+00> : vector<2x512xf32>
    %157 = tpu.matmul %153, %156, %cst_50 {dimension_numbers = #tpu.dot_dimension_numbers<[1], [0], [0], [1], [0, 0, 1, 1], [], []>} : vector<2x128xf32>, vector<128x512xf32>, vector<2x512xf32> -> vector<2x512xf32>
    %158 = arith.addf %155, %157 : vector<2x512xf32>
    %159 = vector.extract_strided_slice %158 {offsets = [0, 0], sizes = [2, 128], strides = [1, 1]} : vector<2x512xf32> to vector<2x128xf32>
    %160 = arith.negf %159 : vector<2x128xf32>
    %161 = math.exp %160 : vector<2x128xf32>
    %cst_51 = arith.constant 1.000000e+00 : f32
    %162 = vector.broadcast %cst_51 : f32 to vector<2x128xf32>
    %163 = arith.addf %162, %161 : vector<2x128xf32>
    %164 = arith.divf %162, %163 : vector<2x128xf32>
    %165 = vector.extract_strided_slice %158 {offsets = [0, 128], sizes = [2, 128], strides = [1, 1]} : vector<2x512xf32> to vector<2x128xf32>
    %166 = arith.negf %165 : vector<2x128xf32>
    %167 = math.exp %166 : vector<2x128xf32>
    %cst_52 = arith.constant 1.000000e+00 : f32
    %168 = vector.broadcast %cst_52 : f32 to vector<2x128xf32>
    %169 = arith.addf %168, %167 : vector<2x128xf32>
    %170 = arith.divf %168, %169 : vector<2x128xf32>
    %171 = vector.extract_strided_slice %158 {offsets = [0, 256], sizes = [2, 128], strides = [1, 1]} : vector<2x512xf32> to vector<2x128xf32>
    %172 = math.tanh %171 : vector<2x128xf32>
    %173 = vector.extract_strided_slice %158 {offsets = [0, 384], sizes = [2, 128], strides = [1, 1]} : vector<2x512xf32> to vector<2x128xf32>
    %174 = arith.negf %173 : vector<2x128xf32>
    %175 = math.exp %174 : vector<2x128xf32>
    %cst_53 = arith.constant 1.000000e+00 : f32
    %176 = vector.broadcast %cst_53 : f32 to vector<2x128xf32>
    %177 = arith.addf %176, %175 : vector<2x128xf32>
    %178 = arith.divf %176, %177 : vector<2x128xf32>
    %179 = arith.mulf %170, %151 : vector<2x128xf32>
    %180 = arith.mulf %164, %172 : vector<2x128xf32>
    %181 = arith.addf %179, %180 : vector<2x128xf32>
    %182 = math.tanh %181 : vector<2x128xf32>
    %183 = arith.mulf %178, %182 : vector<2x128xf32>
    %c0_54 = arith.constant 0 : index
    %c640 = arith.constant 640 : index
    %184 = vector.load %arg12[%c0_54, %c640] : memref<2x1024xf32, #tpu.memory_space<vmem>>, vector<2x128xf32>
    tpu.vector_store %arg12[%c0_54, %c640], %183 {strides = array<i32>} : memref<2x1024xf32, #tpu.memory_space<vmem>>, vector<2x128xf32>,
    %c12 = arith.constant 12 : index
    %c0_55 = arith.constant 0 : index
    %185 = vector.load %arg11[%c12, %c0_55] : memref<16x512xf32, #tpu.memory_space<vmem>>, vector<2x512xf32>
    %c0_56 = arith.constant 0 : index
    %c0_57 = arith.constant 0 : index
    %186 = vector.load %arg2[%c0_56, %c0_57] : memref<128x512xf32, #tpu.memory_space<vmem>>, vector<128x512xf32>
    %cst_58 = arith.constant dense<0.000000e+00> : vector<2x512xf32>
    %187 = tpu.matmul %183, %186, %cst_58 {dimension_numbers = #tpu.dot_dimension_numbers<[1], [0], [0], [1], [0, 0, 1, 1], [], []>} : vector<2x128xf32>, vector<128x512xf32>, vector<2x512xf32> -> vector<2x512xf32>
    %188 = arith.addf %185, %187 : vector<2x512xf32>
    %189 = vector.extract_strided_slice %188 {offsets = [0, 0], sizes = [2, 128], strides = [1, 1]} : vector<2x512xf32> to vector<2x128xf32>
    %190 = arith.negf %189 : vector<2x128xf32>
    %191 = math.exp %190 : vector<2x128xf32>
    %cst_59 = arith.constant 1.000000e+00 : f32
    %192 = vector.broadcast %cst_59 : f32 to vector<2x128xf32>
    %193 = arith.addf %192, %191 : vector<2x128xf32>
    %194 = arith.divf %192, %193 : vector<2x128xf32>
    %195 = vector.extract_strided_slice %188 {offsets = [0, 128], sizes = [2, 128], strides = [1, 1]} : vector<2x512xf32> to vector<2x128xf32>
    %196 = arith.negf %195 : vector<2x128xf32>
    %197 = math.exp %196 : vector<2x128xf32>
    %cst_60 = arith.constant 1.000000e+00 : f32
    %198 = vector.broadcast %cst_60 : f32 to vector<2x128xf32>
    %199 = arith.addf %198, %197 : vector<2x128xf32>
    %200 = arith.divf %198, %199 : vector<2x128xf32>
    %201 = vector.extract_strided_slice %188 {offsets = [0, 256], sizes = [2, 128], strides = [1, 1]} : vector<2x512xf32> to vector<2x128xf32>
    %202 = math.tanh %201 : vector<2x128xf32>
    %203 = vector.extract_strided_slice %188 {offsets = [0, 384], sizes = [2, 128], strides = [1, 1]} : vector<2x512xf32> to vector<2x128xf32>
    %204 = arith.negf %203 : vector<2x128xf32>
    %205 = math.exp %204 : vector<2x128xf32>
    %cst_61 = arith.constant 1.000000e+00 : f32
    %206 = vector.broadcast %cst_61 : f32 to vector<2x128xf32>
    %207 = arith.addf %206, %205 : vector<2x128xf32>
    %208 = arith.divf %206, %207 : vector<2x128xf32>
    %209 = arith.mulf %200, %181 : vector<2x128xf32>
    %210 = arith.mulf %194, %202 : vector<2x128xf32>
    %211 = arith.addf %209, %210 : vector<2x128xf32>
    %212 = math.tanh %211 : vector<2x128xf32>
    %213 = arith.mulf %208, %212 : vector<2x128xf32>
    %c0_62 = arith.constant 0 : index
    %c768 = arith.constant 768 : index
    %214 = vector.load %arg12[%c0_62, %c768] : memref<2x1024xf32, #tpu.memory_space<vmem>>, vector<2x128xf32>
    tpu.vector_store %arg12[%c0_62, %c768], %213 {strides = array<i32>} : memref<2x1024xf32, #tpu.memory_space<vmem>>, vector<2x128xf32>,
    %c14 = arith.constant 14 : index
    %c0_63 = arith.constant 0 : index
    %215 = vector.load %arg11[%c14, %c0_63] : memref<16x512xf32, #tpu.memory_space<vmem>>, vector<2x512xf32>
    %c0_64 = arith.constant 0 : index
    %c0_65 = arith.constant 0 : index
    %216 = vector.load %arg2[%c0_64, %c0_65] : memref<128x512xf32, #tpu.memory_space<vmem>>, vector<128x512xf32>
    %cst_66 = arith.constant dense<0.000000e+00> : vector<2x512xf32>
    %217 = tpu.matmul %213, %216, %cst_66 {dimension_numbers = #tpu.dot_dimension_numbers<[1], [0], [0], [1], [0, 0, 1, 1], [], []>} : vector<2x128xf32>, vector<128x512xf32>, vector<2x512xf32> -> vector<2x512xf32>
    %218 = arith.addf %215, %217 : vector<2x512xf32>
    %219 = vector.extract_strided_slice %218 {offsets = [0, 0], sizes = [2, 128], strides = [1, 1]} : vector<2x512xf32> to vector<2x128xf32>
    %220 = arith.negf %219 : vector<2x128xf32>
    %221 = math.exp %220 : vector<2x128xf32>
    %cst_67 = arith.constant 1.000000e+00 : f32
    %222 = vector.broadcast %cst_67 : f32 to vector<2x128xf32>
    %223 = arith.addf %222, %221 : vector<2x128xf32>
    %224 = arith.divf %222, %223 : vector<2x128xf32>
    %225 = vector.extract_strided_slice %218 {offsets = [0, 128], sizes = [2, 128], strides = [1, 1]} : vector<2x512xf32> to vector<2x128xf32>
    %226 = arith.negf %225 : vector<2x128xf32>
    %227 = math.exp %226 : vector<2x128xf32>
    %cst_68 = arith.constant 1.000000e+00 : f32
    %228 = vector.broadcast %cst_68 : f32 to vector<2x128xf32>
    %229 = arith.addf %228, %227 : vector<2x128xf32>
    %230 = arith.divf %228, %229 : vector<2x128xf32>
    %231 = vector.extract_strided_slice %218 {offsets = [0, 256], sizes = [2, 128], strides = [1, 1]} : vector<2x512xf32> to vector<2x128xf32>
    %232 = math.tanh %231 : vector<2x128xf32>
    %233 = vector.extract_strided_slice %218 {offsets = [0, 384], sizes = [2, 128], strides = [1, 1]} : vector<2x512xf32> to vector<2x128xf32>
    %234 = arith.negf %233 : vector<2x128xf32>
    %235 = math.exp %234 : vector<2x128xf32>
    %cst_69 = arith.constant 1.000000e+00 : f32
    %236 = vector.broadcast %cst_69 : f32 to vector<2x128xf32>
    %237 = arith.addf %236, %235 : vector<2x128xf32>
    %238 = arith.divf %236, %237 : vector<2x128xf32>
    %239 = arith.mulf %230, %211 : vector<2x128xf32>
    %240 = arith.mulf %224, %232 : vector<2x128xf32>
    %241 = arith.addf %239, %240 : vector<2x128xf32>
    %242 = math.tanh %241 : vector<2x128xf32>
    %243 = arith.mulf %238, %242 : vector<2x128xf32>
    %c0_70 = arith.constant 0 : index
    %c896 = arith.constant 896 : index
    %244 = vector.load %arg12[%c0_70, %c896] : memref<2x1024xf32, #tpu.memory_space<vmem>>, vector<2x128xf32>
    tpu.vector_store %arg12[%c0_70, %c896], %243 {strides = array<i32>} : memref<2x1024xf32, #tpu.memory_space<vmem>>, vector<2x128xf32>,
    %c0_71 = arith.constant 0 : index
    %c0_72 = arith.constant 0 : index
    %245 = vector.load %arg12[%c0_71, %c0_72] : memref<2x1024xf32, #tpu.memory_space<vmem>>, vector<2x1024xf32>
    %c0_73 = arith.constant 0 : index
    %c0_74 = arith.constant 0 : index
    %246 = vector.load %arg4[%c0_73, %c0_74] : memref<1024x32xf32, #tpu.memory_space<vmem>>, vector<1024x32xf32>
    %cst_75 = arith.constant dense<0.000000e+00> : vector<2x32xf32>
    %247 = tpu.matmul %245, %246, %cst_75 {dimension_numbers = #tpu.dot_dimension_numbers<[1], [0], [0], [1], [0, 0, 1, 1], [], []>} : vector<2x1024xf32>, vector<1024x32xf32>, vector<2x32xf32> -> vector<2x32xf32>
    %c0_76 = arith.constant 0 : index
    %c0_77 = arith.constant 0 : index
    %248 = vector.load %arg5[%c0_76, %c0_77] : memref<2x32xf32, #tpu.memory_space<vmem>>, vector<2x32xf32>
    %249 = arith.addf %247, %248 : vector<2x32xf32>
    %cst_78 = arith.constant 0.000000e+00 : f32
    %250 = vector.broadcast %cst_78 : f32 to vector<2x32xf32>
    %251 = arith.maximumf %249, %250 : vector<2x32xf32>
    %c0_79 = arith.constant 0 : index
    %c0_80 = arith.constant 0 : index
    %c0_81 = arith.constant 0 : index
    %252 = vector.load %arg6[%c0_79, %c0_80, %c0_81] : memref<9x32x32xf32, #tpu.memory_space<vmem>>, vector<1x32x32xf32>
    %253 = vector.shape_cast %252 : vector<1x32x32xf32> to vector<32x32xf32>
    %cst_82 = arith.constant dense<0.000000e+00> : vector<2x32xf32>
    %254 = tpu.matmul %251, %253, %cst_82 {dimension_numbers = #tpu.dot_dimension_numbers<[1], [0], [0], [1], [0, 0, 1, 1], [], []>} : vector<2x32xf32>, vector<32x32xf32>, vector<2x32xf32> -> vector<2x32xf32>
    %c0_83 = arith.constant 0 : index
    %c0_84 = arith.constant 0 : index
    %c0_85 = arith.constant 0 : index
    %255 = vector.load %arg7[%c0_83, %c0_84, %c0_85] : memref<9x2x32xf32, #tpu.memory_space<vmem>>, vector<1x2x32xf32>
    %256 = vector.shape_cast %255 : vector<1x2x32xf32> to vector<2x32xf32>
    %257 = arith.addf %254, %256 : vector<2x32xf32>
    %cst_86 = arith.constant 0.000000e+00 : f32
    %258 = vector.broadcast %cst_86 : f32 to vector<2x32xf32>
    %259 = arith.maximumf %257, %258 : vector<2x32xf32>
    %c1 = arith.constant 1 : index
    %c0_87 = arith.constant 0 : index
    %c0_88 = arith.constant 0 : index
    %260 = vector.load %arg6[%c1, %c0_87, %c0_88] : memref<9x32x32xf32, #tpu.memory_space<vmem>>, vector<1x32x32xf32>
    %261 = vector.shape_cast %260 : vector<1x32x32xf32> to vector<32x32xf32>
    %cst_89 = arith.constant dense<0.000000e+00> : vector<2x32xf32>
    %262 = tpu.matmul %259, %261, %cst_89 {dimension_numbers = #tpu.dot_dimension_numbers<[1], [0], [0], [1], [0, 0, 1, 1], [], []>} : vector<2x32xf32>, vector<32x32xf32>, vector<2x32xf32> -> vector<2x32xf32>
    %c1_90 = arith.constant 1 : index
    %c0_91 = arith.constant 0 : index
    %c0_92 = arith.constant 0 : index
    %263 = vector.load %arg7[%c1_90, %c0_91, %c0_92] : memref<9x2x32xf32, #tpu.memory_space<vmem>>, vector<1x2x32xf32>
    %264 = vector.shape_cast %263 : vector<1x2x32xf32> to vector<2x32xf32>
    %265 = arith.addf %262, %264 : vector<2x32xf32>
    %cst_93 = arith.constant 0.000000e+00 : f32
    %266 = vector.broadcast %cst_93 : f32 to vector<2x32xf32>
    %267 = arith.maximumf %265, %266 : vector<2x32xf32>
    %c2_94 = arith.constant 2 : index
    %c0_95 = arith.constant 0 : index
    %c0_96 = arith.constant 0 : index
    %268 = vector.load %arg6[%c2_94, %c0_95, %c0_96] : memref<9x32x32xf32, #tpu.memory_space<vmem>>, vector<1x32x32xf32>
    %269 = vector.shape_cast %268 : vector<1x32x32xf32> to vector<32x32xf32>
    %cst_97 = arith.constant dense<0.000000e+00> : vector<2x32xf32>
    %270 = tpu.matmul %267, %269, %cst_97 {dimension_numbers = #tpu.dot_dimension_numbers<[1], [0], [0], [1], [0, 0, 1, 1], [], []>} : vector<2x32xf32>, vector<32x32xf32>, vector<2x32xf32> -> vector<2x32xf32>
    %c2_98 = arith.constant 2 : index
    %c0_99 = arith.constant 0 : index
    %c0_100 = arith.constant 0 : index
    %271 = vector.load %arg7[%c2_98, %c0_99, %c0_100] : memref<9x2x32xf32, #tpu.memory_space<vmem>>, vector<1x2x32xf32>
    %272 = vector.shape_cast %271 : vector<1x2x32xf32> to vector<2x32xf32>
    %273 = arith.addf %270, %272 : vector<2x32xf32>
    %cst_101 = arith.constant 0.000000e+00 : f32
    %274 = vector.broadcast %cst_101 : f32 to vector<2x32xf32>
    %275 = arith.maximumf %273, %274 : vector<2x32xf32>
    %c3 = arith.constant 3 : index
    %c0_102 = arith.constant 0 : index
    %c0_103 = arith.constant 0 : index
    %276 = vector.load %arg6[%c3, %c0_102, %c0_103] : memref<9x32x32xf32, #tpu.memory_space<vmem>>, vector<1x32x32xf32>
    %277 = vector.shape_cast %276 : vector<1x32x32xf32> to vector<32x32xf32>
    %cst_104 = arith.constant dense<0.000000e+00> : vector<2x32xf32>
    %278 = tpu.matmul %275, %277, %cst_104 {dimension_numbers = #tpu.dot_dimension_numbers<[1], [0], [0], [1], [0, 0, 1, 1], [], []>} : vector<2x32xf32>, vector<32x32xf32>, vector<2x32xf32> -> vector<2x32xf32>
    %c3_105 = arith.constant 3 : index
    %c0_106 = arith.constant 0 : index
    %c0_107 = arith.constant 0 : index
    %279 = vector.load %arg7[%c3_105, %c0_106, %c0_107] : memref<9x2x32xf32, #tpu.memory_space<vmem>>, vector<1x2x32xf32>
    %280 = vector.shape_cast %279 : vector<1x2x32xf32> to vector<2x32xf32>
    %281 = arith.addf %278, %280 : vector<2x32xf32>
    %cst_108 = arith.constant 0.000000e+00 : f32
    %282 = vector.broadcast %cst_108 : f32 to vector<2x32xf32>
    %283 = arith.maximumf %281, %282 : vector<2x32xf32>
    %c4_109 = arith.constant 4 : index
    %c0_110 = arith.constant 0 : index
    %c0_111 = arith.constant 0 : index
    %284 = vector.load %arg6[%c4_109, %c0_110, %c0_111] : memref<9x32x32xf32, #tpu.memory_space<vmem>>, vector<1x32x32xf32>
    %285 = vector.shape_cast %284 : vector<1x32x32xf32> to vector<32x32xf32>
    %cst_112 = arith.constant dense<0.000000e+00> : vector<2x32xf32>
    %286 = tpu.matmul %283, %285, %cst_112 {dimension_numbers = #tpu.dot_dimension_numbers<[1], [0], [0], [1], [0, 0, 1, 1], [], []>} : vector<2x32xf32>, vector<32x32xf32>, vector<2x32xf32> -> vector<2x32xf32>
    %c4_113 = arith.constant 4 : index
    %c0_114 = arith.constant 0 : index
    %c0_115 = arith.constant 0 : index
    %287 = vector.load %arg7[%c4_113, %c0_114, %c0_115] : memref<9x2x32xf32, #tpu.memory_space<vmem>>, vector<1x2x32xf32>
    %288 = vector.shape_cast %287 : vector<1x2x32xf32> to vector<2x32xf32>
    %289 = arith.addf %286, %288 : vector<2x32xf32>
    %cst_116 = arith.constant 0.000000e+00 : f32
    %290 = vector.broadcast %cst_116 : f32 to vector<2x32xf32>
    %291 = arith.maximumf %289, %290 : vector<2x32xf32>
    %c5 = arith.constant 5 : index
    %c0_117 = arith.constant 0 : index
    %c0_118 = arith.constant 0 : index
    %292 = vector.load %arg6[%c5, %c0_117, %c0_118] : memref<9x32x32xf32, #tpu.memory_space<vmem>>, vector<1x32x32xf32>
    %293 = vector.shape_cast %292 : vector<1x32x32xf32> to vector<32x32xf32>
    %cst_119 = arith.constant dense<0.000000e+00> : vector<2x32xf32>
    %294 = tpu.matmul %291, %293, %cst_119 {dimension_numbers = #tpu.dot_dimension_numbers<[1], [0], [0], [1], [0, 0, 1, 1], [], []>} : vector<2x32xf32>, vector<32x32xf32>, vector<2x32xf32> -> vector<2x32xf32>
    %c5_120 = arith.constant 5 : index
    %c0_121 = arith.constant 0 : index
    %c0_122 = arith.constant 0 : index
    %295 = vector.load %arg7[%c5_120, %c0_121, %c0_122] : memref<9x2x32xf32, #tpu.memory_space<vmem>>, vector<1x2x32xf32>
    %296 = vector.shape_cast %295 : vector<1x2x32xf32> to vector<2x32xf32>
    %297 = arith.addf %294, %296 : vector<2x32xf32>
    %cst_123 = arith.constant 0.000000e+00 : f32
    %298 = vector.broadcast %cst_123 : f32 to vector<2x32xf32>
    %299 = arith.maximumf %297, %298 : vector<2x32xf32>
    %c6_124 = arith.constant 6 : index
    %c0_125 = arith.constant 0 : index
    %c0_126 = arith.constant 0 : index
    %300 = vector.load %arg6[%c6_124, %c0_125, %c0_126] : memref<9x32x32xf32, #tpu.memory_space<vmem>>, vector<1x32x32xf32>
    %301 = vector.shape_cast %300 : vector<1x32x32xf32> to vector<32x32xf32>
    %cst_127 = arith.constant dense<0.000000e+00> : vector<2x32xf32>
    %302 = tpu.matmul %299, %301, %cst_127 {dimension_numbers = #tpu.dot_dimension_numbers<[1], [0], [0], [1], [0, 0, 1, 1], [], []>} : vector<2x32xf32>, vector<32x32xf32>, vector<2x32xf32> -> vector<2x32xf32>
    %c6_128 = arith.constant 6 : index
    %c0_129 = arith.constant 0 : index
    %c0_130 = arith.constant 0 : index
    %303 = vector.load %arg7[%c6_128, %c0_129, %c0_130] : memref<9x2x32xf32, #tpu.memory_space<vmem>>, vector<1x2x32xf32>
    %304 = vector.shape_cast %303 : vector<1x2x32xf32> to vector<2x32xf32>
    %305 = arith.addf %302, %304 : vector<2x32xf32>
    %cst_131 = arith.constant 0.000000e+00 : f32
    %306 = vector.broadcast %cst_131 : f32 to vector<2x32xf32>
    %307 = arith.maximumf %305, %306 : vector<2x32xf32>
    %c7 = arith.constant 7 : index
    %c0_132 = arith.constant 0 : index
    %c0_133 = arith.constant 0 : index
    %308 = vector.load %arg6[%c7, %c0_132, %c0_133] : memref<9x32x32xf32, #tpu.memory_space<vmem>>, vector<1x32x32xf32>
    %309 = vector.shape_cast %308 : vector<1x32x32xf32> to vector<32x32xf32>
    %cst_134 = arith.constant dense<0.000000e+00> : vector<2x32xf32>
    %310 = tpu.matmul %307, %309, %cst_134 {dimension_numbers = #tpu.dot_dimension_numbers<[1], [0], [0], [1], [0, 0, 1, 1], [], []>} : vector<2x32xf32>, vector<32x32xf32>, vector<2x32xf32> -> vector<2x32xf32>
    %c7_135 = arith.constant 7 : index
    %c0_136 = arith.constant 0 : index
    %c0_137 = arith.constant 0 : index
    %311 = vector.load %arg7[%c7_135, %c0_136, %c0_137] : memref<9x2x32xf32, #tpu.memory_space<vmem>>, vector<1x2x32xf32>
    %312 = vector.shape_cast %311 : vector<1x2x32xf32> to vector<2x32xf32>
    %313 = arith.addf %310, %312 : vector<2x32xf32>
    %cst_138 = arith.constant 0.000000e+00 : f32
    %314 = vector.broadcast %cst_138 : f32 to vector<2x32xf32>
    %315 = arith.maximumf %313, %314 : vector<2x32xf32>
    %c8_139 = arith.constant 8 : index
    %c0_140 = arith.constant 0 : index
    %c0_141 = arith.constant 0 : index
    %316 = vector.load %arg6[%c8_139, %c0_140, %c0_141] : memref<9x32x32xf32, #tpu.memory_space<vmem>>, vector<1x32x32xf32>
    %317 = vector.shape_cast %316 : vector<1x32x32xf32> to vector<32x32xf32>
    %cst_142 = arith.constant dense<0.000000e+00> : vector<2x32xf32>
    %318 = tpu.matmul %315, %317, %cst_142 {dimension_numbers = #tpu.dot_dimension_numbers<[1], [0], [0], [1], [0, 0, 1, 1], [], []>} : vector<2x32xf32>, vector<32x32xf32>, vector<2x32xf32> -> vector<2x32xf32>
    %c8_143 = arith.constant 8 : index
    %c0_144 = arith.constant 0 : index
    %c0_145 = arith.constant 0 : index
    %319 = vector.load %arg7[%c8_143, %c0_144, %c0_145] : memref<9x2x32xf32, #tpu.memory_space<vmem>>, vector<1x2x32xf32>
    %320 = vector.shape_cast %319 : vector<1x2x32xf32> to vector<2x32xf32>
    %321 = arith.addf %318, %320 : vector<2x32xf32>
    %cst_146 = arith.constant 0.000000e+00 : f32
    %322 = vector.broadcast %cst_146 : f32 to vector<2x32xf32>
    %323 = arith.maximumf %321, %322 : vector<2x32xf32>
    %c0_147 = arith.constant 0 : index
    %c0_148 = arith.constant 0 : index
    %324 = vector.load %arg8[%c0_147, %c0_148] : memref<32x128xf32, #tpu.memory_space<vmem>>, vector<32x128xf32>
    %cst_149 = arith.constant dense<0.000000e+00> : vector<2x128xf32>
    %325 = tpu.matmul %323, %324, %cst_149 {dimension_numbers = #tpu.dot_dimension_numbers<[1], [0], [0], [1], [0, 0, 1, 1], [], []>} : vector<2x32xf32>, vector<32x128xf32>, vector<2x128xf32> -> vector<2x128xf32>
    %c0_150 = arith.constant 0 : index
    %c0_151 = arith.constant 0 : index
    %326 = vector.load %arg9[%c0_150, %c0_151] : memref<2x128xf32, #tpu.memory_space<vmem>>, vector<2x128xf32>
    %327 = arith.addf %325, %326 : vector<2x128xf32>
    %c0_152 = arith.constant 0 : index
    %c0_153 = arith.constant 0 : index
    %328 = vector.load %arg10[%c0_152, %c0_153] : memref<2x128xf32, #tpu.memory_space<vmem>>, vector<2x128xf32>
    tpu.vector_store %arg10[%c0_152, %c0_153], %327 {strides = array<i32>} : memref<2x128xf32, #tpu.memory_space<vmem>>, vector<2x128xf32>,
    return
  }
}

</mosaic_0001>

<llo_original>
// kernel: lstm_forecaster_forward.1
$region0: #{lstm_forecaster_forward.1}
  #allocation0 [shape = 'u32[]', space=smem, size = 0x4, offset = 0x4, fixed_abs, tag = 'smem constant byte address 0x4 - core index']
  #allocation1 [shape = 'u32[72,128]{1,0:T(1,128)}', space=vmem, size = 0x9000, scoped, tag = 'internal scratch']
  #allocation2 [shape = 'f32[16,512]{1,0:T(8,128)}', space=vmem, size = 0x8000, scoped, tag = 'scratch operand']
  #allocation3 [shape = 'f32[2,1024]{1,0:T(2,128)}', space=vmem, size = 0x2000, scoped, tag = 'scratch operand']
  %s0 = inlined_call_operand.vmem [shape: f32[16,4], index: 0, kind: input, shape index: {}]
  %s1 = inlined_call_operand.vmem [shape: f32[4,512], index: 1, kind: input, shape index: {}]
  %s2 = inlined_call_operand.vmem [shape: f32[128,512], index: 2, kind: input, shape index: {}]
  %s3 = inlined_call_operand.vmem [shape: f32[1,512], index: 3, kind: input, shape index: {}]
  %s4 = inlined_call_operand.vmem [shape: f32[1024,32], index: 4, kind: input, shape index: {}]
  %s5 = inlined_call_operand.vmem [shape: f32[2,32], index: 5, kind: input, shape index: {}]
  %s6 = inlined_call_operand.vmem [shape: f32[9,32,32], index: 6, kind: input, shape index: {}]
  %s7 = inlined_call_operand.vmem [shape: f32[9,2,32], index: 7, kind: input, shape index: {}]
  %s8 = inlined_call_operand.vmem [shape: f32[32,128], index: 8, kind: input, shape index: {}]
  %s9 = inlined_call_operand.vmem [shape: f32[2,128], index: 9, kind: input, shape index: {}]
  %s10 = inlined_call_operand.vmem [shape: f32[2,128], index: 10, kind: output, shape index: {}]
  %s11 = sld [smem:[#allocation0]]
  $region50: #{lstm_forecaster_forward.1} parent=0
    _
  %s13 = ssub.s32 1, %s11
  %s14 = scalar_select 0, %s13, %s11
  // Predicated region
  $region2: #{lstm_forecaster_forward.1} parent=0 // pred_check
    _
  $region3: #{lstm_forecaster_forward.1} parent=0 // pred_check_branch
    %16 = sbr.rel (0) target = $region5
  $region4: #{lstm_forecaster_forward.1} parent=0 // pred_region
    _
  $region5: #{lstm_forecaster_forward.1} parent=0 // pred_fallthru
    _
  // Predicated region
  $region6: #{lstm_forecaster_forward.1} parent=0 // pred_check
    _
  $region7: #{lstm_forecaster_forward.1} parent=0 // pred_check_branch
    %18 = sbr.rel (0) target = $region9
  $region8: #{lstm_forecaster_forward.1} parent=0 // pred_region
    _
  $region9: #{lstm_forecaster_forward.1} parent=0 // pred_fallthru
    _
  // Predicated region
  $region10: #{lstm_forecaster_forward.1} parent=0 // pred_check
    _
  $region11: #{lstm_forecaster_forward.1} parent=0 // pred_check_branch
    %20 = sbr.rel (0) target = $region13
  $region12: #{lstm_forecaster_forward.1} parent=0 // pred_region
    _
  $region13: #{lstm_forecaster_forward.1} parent=0 // pred_fallthru
    _
  // Predicated region
  $region14: #{lstm_forecaster_forward.1} parent=0 // pred_check
    _
  $region15: #{lstm_forecaster_forward.1} parent=0 // pred_check_branch
    %22 = sbr.rel (0) target = $region17
  $region16: #{lstm_forecaster_forward.1} parent=0 // pred_region
    _
  $region17: #{lstm_forecaster_forward.1} parent=0 // pred_fallthru
    _
  // Predicated region
  $region18: #{lstm_forecaster_forward.1} parent=0 // pred_check
    _
  $region19: #{lstm_forecaster_forward.1} parent=0 // pred_check_branch
    %24 = sbr.rel (0) target = $region21
  $region20: #{lstm_forecaster_forward.1} parent=0 // pred_region
    _
  $region21: #{lstm_forecaster_forward.1} parent=0 // pred_fallthru
    _
  // Predicated region
  $region22: #{lstm_forecaster_forward.1} parent=0 // pred_check
    _
  $region23: #{lstm_forecaster_forward.1} parent=0 // pred_check_branch
    %26 = sbr.rel (0) target = $region25
  $region24: #{lstm_forecaster_forward.1} parent=0 // pred_region
    _
  $region25: #{lstm_forecaster_forward.1} parent=0 // pred_fallthru
    _
  // Predicated region
  $region26: #{lstm_forecaster_forward.1} parent=0 // pred_check
    _
  $region27: #{lstm_forecaster_forward.1} parent=0 // pred_check_branch
    %28 = sbr.rel (0) target = $region29
  $region28: #{lstm_forecaster_forward.1} parent=0 // pred_region
    _
  $region29: #{lstm_forecaster_forward.1} parent=0 // pred_fallthru
    _
  // Predicated region
  $region30: #{lstm_forecaster_forward.1} parent=0 // pred_check
    _
  $region31: #{lstm_forecaster_forward.1} parent=0 // pred_check_branch
    %30 = sbr.rel (0) target = $region33
  $region32: #{lstm_forecaster_forward.1} parent=0 // pred_region
    _
  $region33: #{lstm_forecaster_forward.1} parent=0 // pred_fallthru
    _
  // Predicated region
  $region34: #{lstm_forecaster_forward.1} parent=0 // pred_check
    _
  $region35: #{lstm_forecaster_forward.1} parent=0 // pred_check_branch
    %32 = sbr.rel (0) target = $region37
  $region36: #{lstm_forecaster_forward.1} parent=0 // pred_region
    _
  $region37: #{lstm_forecaster_forward.1} parent=0 // pred_fallthru
    _
  // Predicated region
  $region38: #{lstm_forecaster_forward.1} parent=0 // pred_check
    _
  $region39: #{lstm_forecaster_forward.1} parent=0 // pred_check_branch
    %34 = sbr.rel (0) target = $region41
  $region40: #{lstm_forecaster_forward.1} parent=0 // pred_region
    _
  $region41: #{lstm_forecaster_forward.1} parent=0 // pred_fallthru
    _
  %v35 = vld [vmem:[%s0] sm:$0xff]
  %v36 = vld [vmem:[%s0 + $0x8] sm:$0xff]
  %v37 = vld [vmem:[%s1] sm:$0xff]
  %v38 = vld [vmem:[%s1 + $0x8] sm:$0xff]
  %v39 = vld [vmem:[%s3] sm:$0xf]
  %v41 = vperm.slane %v39, 0
  %v42 = vperm.slane %v39, 1
  %v43 = vperm.slane %v39, 2
  %v44 = vperm.slane %v39, 3
  %51 = vst [vmem:[#allocation1] ss:$2 sm:$0xff] %v37
  %s52 = scalar_lea.vmem [#allocation1], 16
  %53 = vst [vmem:[%s52] ss:$2 sm:$0xff] %v38
  %v54 = vld.sshfl [vmem:[#allocation1] sm:$0xff pattern:$0x75316420]
  %v55 = vld.sshfl [vmem:[#allocation1 + $0x8] sm:$0xff pattern:$0x75316420]
  %v56 = vld.sshfl [vmem:[#allocation1 + $0x10] sm:$0xff pattern:$0x75316420]
  %v57 = vld.sshfl [vmem:[#allocation1 + $0x18] sm:$0xff pattern:$0x75316420]
  %vm58 = vcmask 31744
  %v60 = vsel %vm58, %v35, 0
  %v63 = vsel %vm58, %v36, 0
  %vm65 = vcmask 1043456
  %v66 = vsel %vm65, %v54, 0
  %v68 = vsel %vm65, %v55, 0
  %v70 = vsel %vm65, %v56, 0
  %v72 = vsel %vm65, %v57, 0
  %74 = vmatpush.msra.mxu0 0.0
  %75 = vmatpush.msra.mxu0 0.0
  %76 = vmatpush.msra.mxu0 0.0
  %77 = vmatpush.msra.mxu0 0.0
  %78 = vmatpush.msra.mxu0 0.0
  %79 = vmatpush.msra.mxu0 0.0
  %80 = vmatpush.msra.mxu0 0.0
  %81 = vmatpush.msra.mxu0 0.0
  %82 = vmatpush.msra.mxu0 0.0
  %83 = vmatpush.msra.mxu0 0.0
  %84 = vmatpush.msra.mxu0 0.0
  %85 = vmatpush.msra.mxu0 0.0
  %86 = vmatpush.msra.mxu0 0.0
  %87 = vmatpush.msra.mxu0 0.0
  %88 = vmatpush.msra.mxu0 0.0
  %89 = vmatpush.msra.mxu0 %v66
  %90 = vmatmul.f32.gmra.mxu0 %v60
  %v91 = vpop.f32.mrf.mxu0
  %v92 = vadd.f32 %v41, %v91
  %93 = vmatmul.f32.gmra.mxu0 %v63
  %v94 = vpop.f32.mrf.mxu0
  %v95 = vadd.f32 %v41, %v94
  %96 = vdwg.mxu0
  %97 = vmatpush.msra.mxu0 0.0
  %98 = vmatpush.msra.mxu0 0.0
  %99 = vmatpush.msra.mxu0 0.0
  %100 = vmatpush.msra.mxu0 0.0
  %101 = vmatpush.msra.mxu0 0.0
  %102 = vmatpush.msra.mxu0 0.0
  %103 = vmatpush.msra.mxu0 0.0
  %104 = vmatpush.msra.mxu0 0.0
  %105 = vmatpush.msra.mxu0 0.0
  %106 = vmatpush.msra.mxu0 0.0
  %107 = vmatpush.msra.mxu0 0.0
  %108 = vmatpush.msra.mxu0 0.0
  %109 = vmatpush.msra.mxu0 0.0
  %110 = vmatpush.msra.mxu0 0.0
  %111 = vmatpush.msra.mxu0 0.0
  %112 = vmatpush.msra.mxu0 %v68
  %113 = vmatmul.f32.gmra.mxu0 %v60
  %v114 = vpop.f32.mrf.mxu0
  %v115 = vadd.f32 %v42, %v114
  %116 = vmatmul.f32.gmra.mxu0 %v63
  %v117 = vpop.f32.mrf.mxu0
  %v118 = vadd.f32 %v42, %v117
  %119 = vdwg.mxu0
  %120 = vmatpush.msra.mxu0 0.0
  %121 = vmatpush.msra.mxu0 0.0
  %122 = vmatpush.msra.mxu0 0.0
  %123 = vmatpush.msra.mxu0 0.0
  %124 = vmatpush.msra.mxu0 0.0
  %125 = vmatpush.msra.mxu0 0.0
  %126 = vmatpush.msra.mxu0 0.0
  %127 = vmatpush.msra.mxu0 0.0
  %128 = vmatpush.msra.mxu0 0.0
  %129 = vmatpush.msra.mxu0 0.0
  %130 = vmatpush.msra.mxu0 0.0
  %131 = vmatpush.msra.mxu0 0.0
  %132 = vmatpush.msra.mxu0 0.0
  %133 = vmatpush.msra.mxu0 0.0
  %134 = vmatpush.msra.mxu0 0.0
  %135 = vmatpush.msra.mxu0 %v70
  %136 = vmatmul.f32.gmra.mxu0 %v60
  %v137 = vpop.f32.mrf.mxu0
  %v138 = vadd.f32 %v43, %v137
  %139 = vmatmul.f32.gmra.mxu0 %v63
  %v140 = vpop.f32.mrf.mxu0
  %v141 = vadd.f32 %v43, %v140
  %142 = vdwg.mxu0
  %143 = vmatpush.msra.mxu0 0.0
  %144 = vmatpush.msra.mxu0 0.0
  %145 = vmatpush.msra.mxu0 0.0
  %146 = vmatpush.msra.mxu0 0.0
  %147 = vmatpush.msra.mxu0 0.0
  %148 = vmatpush.msra.mxu0 0.0
  %149 = vmatpush.msra.mxu0 0.0
  %150 = vmatpush.msra.mxu0 0.0
  %151 = vmatpush.msra.mxu0 0.0
  %152 = vmatpush.msra.mxu0 0.0
  %153 = vmatpush.msra.mxu0 0.0
  %154 = vmatpush.msra.mxu0 0.0
  %155 = vmatpush.msra.mxu0 0.0
  %156 = vmatpush.msra.mxu0 0.0
  %157 = vmatpush.msra.mxu0 0.0
  %158 = vmatpush.msra.mxu0 %v72
  %159 = vmatmul.f32.gmra.mxu0 %v60
  %v160 = vpop.f32.mrf.mxu0
  %v161 = vadd.f32 %v44, %v160
  %162 = vmatmul.f32.gmra.mxu0 %v63
  %v163 = vpop.f32.mrf.mxu0
  %v164 = vadd.f32 %v44, %v163
  %165 = vdwg.mxu0
  %166 = vst [vmem:[#allocation2] sm:$0xff] %v92
  %167 = vst [vmem:[#allocation2 + $0x8] sm:$0xff] %v115
  %168 = vst [vmem:[#allocation2 + $0x10] sm:$0xff] %v138
  %169 = vst [vmem:[#allocation2 + $0x18] sm:$0xff] %v161
  %170 = vst [vmem:[#allocation2 + $0x20] sm:$0xff] %v95
  %171 = vst [vmem:[#allocation2 + $0x28] sm:$0xff] %v118
  %172 = vst [vmem:[#allocation2 + $0x30] sm:$0xff] %v141
  %173 = vst [vmem:[#allocation2 + $0x38] sm:$0xff] %v164
  %v174 = vld [vmem:[#allocation2] sm:$0x3]
  %v175 = vld [vmem:[#allocation2 + $0x8] sm:$0x3]
  %v176 = vld [vmem:[#allocation2 + $0x10] sm:$0x3]
  %v177 = vld [vmem:[#allocation2 + $0x18] sm:$0x3]
  %v178 = vxor.u32 %v174, 2147483648
  %v179 = vmul.f32 %v178, 1.442695
  %v180 = vpow.pop %v179
  %v181 = vadd.f32 %v180, 1.0
  %v182 = vrcp.pop %v181
  %v183 = vmul.f32 %v181, %v182
  %v184 = vsub.f32 1.0, %v183
  %v185 = vmul.f32 %v182, %v184
  %v186 = vadd.f32 %v182, %v185
  %vm187 = vweird.f32 %v181
  %vm188 = vweird.f32 %v182
  %vm189 = vmor %vm187, %vm188
  %v190 = vsel %vm189, %v182, %v186
  %v191 = vand.u32 2147483647, %v181
  %vm192 = vcmp.eq.f32.partialorder %v191, 8.507059e+37
  %v193 = vand.u32 %v181, 2147483648
  %v194 = vor.u32 1.1754944e-38, %v193
  %v195 = vsel %vm192, %v194, %v190
  %v196 = vmul.f32 1.0, %v195
  %v197 = vxor.u32 %v175, 2147483648
  %v198 = vmul.f32 %v197, 1.442695
  %v199 = vpow.pop %v198
  %v200 = vadd.f32 %v199, 1.0
  %v201 = vrcp.pop %v200
  %v202 = vmul.f32 %v200, %v201
  %v203 = vsub.f32 1.0, %v202
  %v204 = vmul.f32 %v201, %v203
  %v205 = vadd.f32 %v201, %v204
  %vm206 = vweird.f32 %v200
  %vm207 = vweird.f32 %v201
  %vm208 = vmor %vm206, %vm207
  %v209 = vsel %vm208, %v201, %v205
  %v210 = vand.u32 2147483647, %v200
  %vm211 = vcmp.eq.f32.partialorder %v210, 8.507059e+37
  %v212 = vand.u32 %v200, 2147483648
  %v213 = vor.u32 1.1754944e-38, %v212
  %v214 = vsel %vm211, %v213, %v209
  %v215 = vmul.f32 1.0, %v214
  %v216 = vtanh.pop %v176
  %v217 = vxor.u32 %v177, 2147483648
  %v218 = vmul.f32 %v217, 1.442695
  %v219 = vpow.pop %v218
  %v220 = vadd.f32 %v219, 1.0
  %v221 = vrcp.pop %v220
  %v222 = vmul.f32 %v220, %v221
  %v223 = vsub.f32 1.0, %v222
  %v224 = vmul.f32 %v221, %v223
  %v225 = vadd.f32 %v221, %v224
  %vm226 = vweird.f32 %v220
  %vm227 = vweird.f32 %v221
  %vm228 = vmor %vm226, %vm227
  %v229 = vsel %vm228, %v221, %v225
  %v230 = vand.u32 2147483647, %v220
  %vm231 = vcmp.eq.f32.partialorder %v230, 8.507059e+37
  %v232 = vand.u32 %v220, 2147483648
  %v233 = vor.u32 1.1754944e-38, %v232
  %v234 = vsel %vm231, %v233, %v229
  %v235 = vmul.f32 1.0, %v234
  %v236 = vmul.f32 %v215, 0.0
  %v237 = vmul.f32 %v196, %v216
  %v238 = vadd.f32 %v236, %v237
  %v239 = vtanh.pop %v238
  %v240 = vmul.f32 %v235, %v239
  %241 = vst [vmem:[#allocation3] sm:$0x3] %v240
  %v242 = vld [vmem:[#allocation2] sm:$0xc]
  %v243 = vld [vmem:[#allocation2 + $0x8] sm:$0xc]
  %v244 = vld [vmem:[#allocation2 + $0x10] sm:$0xc]
  %v245 = vld [vmem:[#allocation2 + $0x18] sm:$0xc]
  %v246 = vld [vmem:[%s2] sm:$0xff]
  %v247 = vld [vmem:[%s2 + $0x8] sm:$0xff]
  %v248 = vld [vmem:[%s2 + $0x10] sm:$0xff]
  %v249 = vld [vmem:[%s2 + $0x18] sm:$0xff]
  %v250 = vld [vmem:[%s2 + $0x20] sm:$0xff]
  %v251 = vld [vmem:[%s2 + $0x28] sm:$0xff]
  %v252 = vld [vmem:[%s2 + $0x30] sm:$0xff]
  %v253 = vld [vmem:[%s2 + $0x38] sm:$0xff]
  %v254 = vld [vmem:[%s2 + $0x40] sm:$0xff]
  %v255 = vld [vmem:[%s2 + $0x48] sm:$0xff]
  %v256 = vld [vmem:[%s2 + $0x50] sm:$0xff]
  %v257 = vld [vmem:[%s2 + $0x58] sm:$0xff]
  %v258 = vld [vmem:[%s2 + $0x60] sm:$0xff]
  %v259 = vld [vmem:[%s2 + $0x68] sm:$0xff]
  %v260 = vld [vmem:[%s2 + $0x70] sm:$0xff]
  %v261 = vld [vmem:[%s2 + $0x78] sm:$0xff]
  %v262 = vld [vmem:[%s2 + $0x80] sm:$0xff]
  %v263 = vld [vmem:[%s2 + $0x88] sm:$0xff]
  %v264 = vld [vmem:[%s2 + $0x90] sm:$0xff]
  %v265 = vld [vmem:[%s2 + $0x98] sm:$0xff]
  %v266 = vld [vmem:[%s2 + $0xa0] sm:$0xff]
  %v267 = vld [vmem:[%s2 + $0xa8] sm:$0xff]
  %v268 = vld [vmem:[%s2 + $0xb0] sm:$0xff]
  %v269 = vld [vmem:[%s2 + $0xb8] sm:$0xff]
  %v270 = vld [vmem:[%s2 + $0xc0] sm:$0xff]
  %v271 = vld [vmem:[%s2 + $0xc8] sm:$0xff]
  %v272 = vld [vmem:[%s2 + $0xd0] sm:$0xff]
  %v273 = vld [vmem:[%s2 + $0xd8] sm:$0xff]
  %v274 = vld [vmem:[%s2 + $0xe0] sm:$0xff]
  %v275 = vld [vmem:[%s2 + $0xe8] sm:$0xff]
  %v276 = vld [vmem:[%s2 + $0xf0] sm:$0xff]
  %v277 = vld [vmem:[%s2 + $0xf8] sm:$0xff]
  %v278 = vld [vmem:[%s2 + $0x100] sm:$0xff]
  %v279 = vld [vmem:[%s2 + $0x108] sm:$0xff]
  %v280 = vld [vmem:[%s2 + $0x110] sm:$0xff]
  %v281 = vld [vmem:[%s2 + $0x118] sm:$0xff]
  %v282 = vld [vmem:[%s2 + $0x120] sm:$0xff]
  %v283 = vld [vmem:[%s2 + $0x128] sm:$0xff]
  %v284 = vld [vmem:[%s2 + $0x130] sm:$0xff]
  %v285 = vld [vmem:[%s2 + $0x138] sm:$0xff]
  %v286 = vld [vmem:[%s2 + $0x140] sm:$0xff]
  %v287 = vld [vmem:[%s2 + $0x148] sm:$0xff]
  %v288 = vld [vmem:[%s2 + $0x150] sm:$0xff]
  %v289 = vld [vmem:[%s2 + $0x158] sm:$0xff]
  %v290 = vld [vmem:[%s2 + $0x160] sm:$0xff]
  %v291 = vld [vmem:[%s2 + $0x168] sm:$0xff]
  %v292 = vld [vmem:[%s2 + $0x170] sm:$0xff]
  %v293 = vld [vmem:[%s2 + $0x178] sm:$0xff]
  %v294 = vld [vmem:[%s2 + $0x180] sm:$0xff]
  %v295 = vld [vmem:[%s2 + $0x188] sm:$0xff]
  %v296 = vld [vmem:[%s2 + $0x190] sm:$0xff]
  %v297 = vld [vmem:[%s2 + $0x198] sm:$0xff]
  %v298 = vld [vmem:[%s2 + $0x1a0] sm:$0xff]
  %v299 = vld [vmem:[%s2 + $0x1a8] sm:$0xff]
  %v300 = vld [vmem:[%s2 + $0x1b0] sm:$0xff]
  %v301 = vld [vmem:[%s2 + $0x1b8] sm:$0xff]
  %v302 = vld [vmem:[%s2 + $0x1c0] sm:$0xff]
  %v303 = vld [vmem:[%s2 + $0x1c8] sm:$0xff]
  %v304 = vld [vmem:[%s2 + $0x1d0] sm:$0xff]
  %v305 = vld [vmem:[%s2 + $0x1d8] sm:$0xff]
  %v306 = vld [vmem:[%s2 + $0x1e0] sm:$0xff]
  %v307 = vld [vmem:[%s2 + $0x1e8] sm:$0xff]
  %v308 = vld [vmem:[%s2 + $0x1f0] sm:$0xff]
  %v309 = vld [vmem:[%s2 + $0x1f8] sm:$0xff]
  %310 = vmatpush.msra.mxu0 %v306
  %311 = vmatpush.msra.mxu0 %v302
  %312 = vmatpush.msra.mxu0 %v298
  %313 = vmatpush.msra.mxu0 %v294
  %314 = vmatpush.msra.mxu0 %v290
  %315 = vmatpush.msra.mxu0 %v286
  %316 = vmatpush.msra.mxu0 %v282
  %317 = vmatpush.msra.mxu0 %v278
  %318 = vmatpush.msra.mxu0 %v274
  %319 = vmatpush.msra.mxu0 %v270
  %320 = vmatpush.msra.mxu0 %v266
  %321 = vmatpush.msra.mxu0 %v262
  %322 = vmatpush.msra.mxu0 %v258
  %323 = vmatpush.msra.mxu0 %v254
  %324 = vmatpush.msra.mxu0 %v250
  %325 = vmatpush.msra.mxu0 %v246
  %326 = vmatmul.f32.gmra.mxu0 %v240
  %v327 = vpop.f32.mrf.mxu0
  %v328 = vadd.f32 0.0, %v327
  %329 = vdwg.mxu0
  %330 = vmatpush.msra.mxu0 %v307
  %331 = vmatpush.msra.mxu0 %v303
  %332 = vmatpush.msra.mxu0 %v299
  %333 = vmatpush.msra.mxu0 %v295
  %334 = vmatpush.msra.mxu0 %v291
  %335 = vmatpush.msra.mxu0 %v287
  %336 = vmatpush.msra.mxu0 %v283
  %337 = vmatpush.msra.mxu0 %v279
  %338 = vmatpush.msra.mxu0 %v275
  %339 = vmatpush.msra.mxu0 %v271
  %340 = vmatpush.msra.mxu0 %v267
  %341 = vmatpush.msra.mxu0 %v263
  %342 = vmatpush.msra.mxu0 %v259
  %343 = vmatpush.msra.mxu0 %v255
  %344 = vmatpush.msra.mxu0 %v251
  %345 = vmatpush.msra.mxu0 %v247
  %346 = vmatmul.f32.gmra.mxu0 %v240
  %v347 = vpop.f32.mrf.mxu0
  %v348 = vadd.f32 0.0, %v347
  %349 = vdwg.mxu0
  %350 = vmatpush.msra.mxu0 %v308
  %351 = vmatpush.msra.mxu0 %v304
  %352 = vmatpush.msra.mxu0 %v300
  %353 = vmatpush.msra.mxu0 %v296
  %354 = vmatpush.msra.mxu0 %v292
  %355 = vmatpush.msra.mxu0 %v288
  %356 = vmatpush.msra.mxu0 %v284
  %357 = vmatpush.msra.mxu0 %v280
  %358 = vmatpush.msra.mxu0 %v276
  %359 = vmatpush.msra.mxu0 %v272
  %360 = vmatpush.msra.mxu0 %v268
  %361 = vmatpush.msra.mxu0 %v264
  %362 = vmatpush.msra.mxu0 %v260
  %363 = vmatpush.msra.mxu0 %v256
  %364 = vmatpush.msra.mxu0 %v252
  %365 = vmatpush.msra.mxu0 %v248
  %366 = vmatmul.f32.gmra.mxu0 %v240
  %v367 = vpop.f32.mrf.mxu0
  %v368 = vadd.f32 0.0, %v367
  %369 = vdwg.mxu0
  %370 = vmatpush.msra.mxu0 %v309
  %371 = vmatpush.msra.mxu0 %v305
  %372 = vmatpush.msra.mxu0 %v301
  %373 = vmatpush.msra.mxu0 %v297
  %374 = vmatpush.msra.mxu0 %v293
  %375 = vmatpush.msra.mxu0 %v289
  %376 = vmatpush.msra.mxu0 %v285
  %377 = vmatpush.msra.mxu0 %v281
  %378 = vmatpush.msra.mxu0 %v277
  %379 = vmatpush.msra.mxu0 %v273
  %380 = vmatpush.msra.mxu0 %v269
  %381 = vmatpush.msra.mxu0 %v265
  %382 = vmatpush.msra.mxu0 %v261
  %383 = vmatpush.msra.mxu0 %v257
  %384 = vmatpush.msra.mxu0 %v253
  %385 = vmatpush.msra.mxu0 %v249
  %386 = vmatmul.f32.gmra.mxu0 %v240
  %v387 = vpop.f32.mrf.mxu0
  %v388 = vadd.f32 0.0, %v387
  %389 = vdwg.mxu0
  %v394 = vrot.slane %v328, 6
  %v395 = vrot.slane %v348, 6
  %v396 = vrot.slane %v368, 6
  %v397 = vrot.slane %v388, 6
  %v402 = vadd.f32 %v242, %v394
  %v403 = vadd.f32 %v243, %v395
  %v404 = vadd.f32 %v244, %v396
  %v405 = vadd.f32 %v245, %v397
  %v406 = vxor.u32 %v402, 2147483648
  %v407 = vmul.f32 %v406, 1.442695
  %v408 = vpow.pop %v407
  %v409 = vadd.f32 %v408, 1.0
  %v410 = vrcp.pop %v409
  %v411 = vmul.f32 %v409, %v410
  %v412 = vsub.f32 1.0, %v411
  %v413 = vmul.f32 %v410, %v412
  %v414 = vadd.f32 %v410, %v413
  %vm415 = vweird.f32 %v409
  %vm416 = vweird.f32 %v410
  %vm417 = vmor %vm415, %vm416
  %v418 = vsel %vm417, %v410, %v414
  %v419 = vand.u32 2147483647, %v409
  %vm420 = vcmp.eq.f32.partialorder %v419, 8.507059e+37
  %v421 = vand.u32 %v409, 2147483648
  %v422 = vor.u32 1.1754944e-38, %v421
  %v423 = vsel %vm420, %v422, %v418
  %v424 = vmul.f32 1.0, %v423
  %v425 = vxor.u32 %v403, 2147483648
  %v426 = vmul.f32 %v425, 1.442695
  %v427 = vpow.pop %v426
  %v428 = vadd.f32 %v427, 1.0
  %v429 = vrcp.pop %v428
  %v430 = vmul.f32 %v428, %v429
  %v431 = vsub.f32 1.0, %v430
  %v432 = vmul.f32 %v429, %v431
  %v433 = vadd.f32 %v429, %v432
  %vm434 = vweird.f32 %v428
  %vm435 = vweird.f32 %v429
  %vm436 = vmor %vm434, %vm435
  %v437 = vsel %vm436, %v429, %v433
  %v438 = vand.u32 2147483647, %v428
  %vm439 = vcmp.eq.f32.partialorder %v438, 8.507059e+37
  %v440 = vand.u32 %v428, 2147483648
  %v441 = vor.u32 1.1754944e-38, %v440
  %v442 = vsel %vm439, %v441, %v437
  %v443 = vmul.f32 1.0, %v442
  %v444 = vtanh.pop %v404
  %v445 = vxor.u32 %v405, 2147483648
  %v446 = vmul.f32 %v445, 1.442695
  %v447 = vpow.pop %v446
  %v448 = vadd.f32 %v447, 1.0
  %v449 = vrcp.pop %v448
  %v450 = vmul.f32 %v448, %v449
  %v451 = vsub.f32 1.0, %v450
  %v452 = vmul.f32 %v449, %v451
  %v453 = vadd.f32 %v449, %v452
  %vm454 = vweird.f32 %v448
  %vm455 = vweird.f32 %v449
  %vm456 = vmor %vm454, %vm455
  %v457 = vsel %vm456, %v449, %v453
  %v458 = vand.u32 2147483647, %v448
  %vm459 = vcmp.eq.f32.partialorder %v458, 8.507059e+37
  %v460 = vand.u32 %v448, 2147483648
  %v461 = vor.u32 1.1754944e-38, %v460
  %v462 = vsel %vm459, %v461, %v457
  %v463 = vmul.f32 1.0, %v462
  %v465 = vrot.slane %v238, 6
  %v467 = vmul.f32 %v443, %v465
  %v468 = vmul.f32 %v424, %v444
  %v469 = vadd.f32 %v467, %v468
  %v470 = vtanh.pop %v469
  %v471 = vmul.f32 %v463, %v470
  %473 = vst.sshfl [vmem:[#allocation1] sm:$0xff pattern:$0x73625140] %v471
  %s474 = scalar_lea.vmem [#allocation1], 1
  %v475 = vld [vmem:[%s474] ss:$4 sm:$0xff]
  %477 = vst [vmem:[#allocation3 + $0x2] sm:$0x3] %v475
  %v478 = vld [vmem:[#allocation2] sm:$0x30]
  %v479 = vld [vmem:[#allocation2 + $0x8] sm:$0x30]
  %v480 = vld [vmem:[#allocation2 + $0x10] sm:$0x30]
  %v481 = vld [vmem:[#allocation2 + $0x18] sm:$0x30]
  %v482 = vld [vmem:[%s2] sm:$0xff]
  %v483 = vld [vmem:[%s2 + $0x8] sm:$0xff]
  %v484 = vld [vmem:[%s2 + $0x10] sm:$0xff]
  %v485 = vld [vmem:[%s2 + $0x18] sm:$0xff]
  %v486 = vld [vmem:[%s2 + $0x20] sm:$0xff]
  %v487 = vld [vmem:[%s2 + $0x28] sm:$0xff]
  %v488 = vld [vmem:[%s2 + $0x30] sm:$0xff]
  %v489 = vld [vmem:[%s2 + $0x38] sm:$0xff]
  %v490 = vld [vmem:[%s2 + $0x40] sm:$0xff]
  %v491 = vld [vmem:[%s2 + $0x48] sm:$0xff]
  %v492 = vld [vmem:[%s2 + $0x50] sm:$0xff]
  %v493 = vld [vmem:[%s2 + $0x58] sm:$0xff]
  %v494 = vld [vmem:[%s2 + $0x60] sm:$0xff]
  %v495 = vld [vmem:[%s2 + $0x68] sm:$0xff]
  %v496 = vld [vmem:[%s2 + $0x70] sm:$0xff]
  %v497 = vld [vmem:[%s2 + $0x78] sm:$0xff]
  %v498 = vld [vmem:[%s2 + $0x80] sm:$0xff]
  %v499 = vld [vmem:[%s2 + $0x88] sm:$0xff]
  %v500 = vld [vmem:[%s2 + $0x90] sm:$0xff]
  %v501 = vld [vmem:[%s2 + $0x98] sm:$0xff]
  %v502 = vld [vmem:[%s2 + $0xa0] sm:$0xff]
  %v503 = vld [vmem:[%s2 + $0xa8] sm:$0xff]
  %v504 = vld [vmem:[%s2 + $0xb0] sm:$0xff]
  %v505 = vld [vmem:[%s2 + $0xb8] sm:$0xff]
  %v506 = vld [vmem:[%s2 + $0xc0] sm:$0xff]
  %v507 = vld [vmem:[%s2 + $0xc8] sm:$0xff]
  %v508 = vld [vmem:[%s2 + $0xd0] sm:$0xff]
  %v509 = vld [vmem:[%s2 + $0xd8] sm:$0xff]
  %v510 = vld [vmem:[%s2 + $0xe0] sm:$0xff]
  %v511 = vld [vmem:[%s2 + $0xe8] sm:$0xff]
  %v512 = vld [vmem:[%s2 + $0xf0] sm:$0xff]
  %v513 = vld [vmem:[%s2 + $0xf8] sm:$0xff]
  %v514 = vld [vmem:[%s2 + $0x100] sm:$0xff]
  %v515 = vld [vmem:[%s2 + $0x108] sm:$0xff]
  %v516 = vld [vmem:[%s2 + $0x110] sm:$0xff]
  %v517 = vld [vmem:[%s2 + $0x118] sm:$0xff]
  %v518 = vld [vmem:[%s2 + $0x120] sm:$0xff]
  %v519 = vld [vmem:[%s2 + $0x128] sm:$0xff]
  %v520 = vld [vmem:[%s2 + $0x130] sm:$0xff]
  %v521 = vld [vmem:[%s2 + $0x138] sm:$0xff]
  %v522 = vld [vmem:[%s2 + $0x140] sm:$0xff]
  %v523 = vld [vmem:[%s2 + $0x148] sm:$0xff]
  %v524 = vld [vmem:[%s2 + $0x150] sm:$0xff]
  %v525 = vld [vmem:[%s2 + $0x158] sm:$0xff]
  %v526 = vld [vmem:[%s2 + $0x160] sm:$0xff]
  %v527 = vld [vmem:[%s2 + $0x168] sm:$0xff]
  %v528 = vld [vmem:[%s2 + $0x170] sm:$0xff]
  %v529 = vld [vmem:[%s2 + $0x178] sm:$0xff]
  %v530 = vld [vmem:[%s2 + $0x180] sm:$0xff]
  %v531 = vld [vmem:[%s2 + $0x188] sm:$0xff]
  %v532 = vld [vmem:[%s2 + $0x190] sm:$0xff]
  %v533 = vld [vmem:[%s2 + $0x198] sm:$0xff]
  %v534 = vld [vmem:[%s2 + $0x1a0] sm:$0xff]
  %v535 = vld [vmem:[%s2 + $0x1a8] sm:$0xff]
  %v536 = vld [vmem:[%s2 + $0x1b0] sm:$0xff]
  %v537 = vld [vmem:[%s2 + $0x1b8] sm:$0xff]
  %v538 = vld [vmem:[%s2 + $0x1c0] sm:$0xff]
  %v539 = vld [vmem:[%s2 + $0x1c8] sm:$0xff]
  %v540 = vld [vmem:[%s2 + $0x1d0] sm:$0xff]
  %v541 = vld [vmem:[%s2 + $0x1d8] sm:$0xff]
  %v542 = vld [vmem:[%s2 + $0x1e0] sm:$0xff]
  %v543 = vld [vmem:[%s2 + $0x1e8] sm:$0xff]
  %v544 = vld [vmem:[%s2 + $0x1f0] sm:$0xff]
  %v545 = vld [vmem:[%s2 + $0x1f8] sm:$0xff]
  %v546 = vrot.slane %v471, 2
  %548 = vmatpush.msra.mxu0 %v542
  %549 = vmatpush.msra.mxu0 %v538
  %550 = vmatpush.msra.mxu0 %v534
  %551 = vmatpush.msra.mxu0 %v530
  %552 = vmatpush.msra.mxu0 %v526
  %553 = vmatpush.msra.mxu0 %v522
  %554 = vmatpush.msra.mxu0 %v518
  %555 = vmatpush.msra.mxu0 %v514
  %556 = vmatpush.msra.mxu0 %v510
  %557 = vmatpush.msra.mxu0 %v506
  %558 = vmatpush.msra.mxu0 %v502
  %559 = vmatpush.msra.mxu0 %v498
  %560 = vmatpush.msra.mxu0 %v494
  %561 = vmatpush.msra.mxu0 %v490
  %562 = vmatpush.msra.mxu0 %v486
  %563 = vmatpush.msra.mxu0 %v482
  %564 = vmatmul.f32.gmra.mxu0 %v546
  %v565 = vpop.f32.mrf.mxu0
  %v566 = vadd.f32 0.0, %v565
  %567 = vdwg.mxu0
  %568 = vmatpush.msra.mxu0 %v543
  %569 = vmatpush.msra.mxu0 %v539
  %570 = vmatpush.msra.mxu0 %v535
  %571 = vmatpush.msra.mxu0 %v531
  %572 = vmatpush.msra.mxu0 %v527
  %573 = vmatpush.msra.mxu0 %v523
  %574 = vmatpush.msra.mxu0 %v519
  %575 = vmatpush.msra.mxu0 %v515
  %576 = vmatpush.msra.mxu0 %v511
  %577 = vmatpush.msra.mxu0 %v507
  %578 = vmatpush.msra.mxu0 %v503
  %579 = vmatpush.msra.mxu0 %v499
  %580 = vmatpush.msra.mxu0 %v495
  %581 = vmatpush.msra.mxu0 %v491
  %582 = vmatpush.msra.mxu0 %v487
  %583 = vmatpush.msra.mxu0 %v483
  %584 = vmatmul.f32.gmra.mxu0 %v546
  %v585 = vpop.f32.mrf.mxu0
  %v586 = vadd.f32 0.0, %v585
  %587 = vdwg.mxu0
  %588 = vmatpush.msra.mxu0 %v544
  %589 = vmatpush.msra.mxu0 %v540
  %590 = vmatpush.msra.mxu0 %v536
  %591 = vmatpush.msra.mxu0 %v532
  %592 = vmatpush.msra.mxu0 %v528
  %593 = vmatpush.msra.mxu0 %v524
  %594 = vmatpush.msra.mxu0 %v520
  %595 = vmatpush.msra.mxu0 %v516
  %596 = vmatpush.msra.mxu0 %v512
  %597 = vmatpush.msra.mxu0 %v508
  %598 = vmatpush.msra.mxu0 %v504
  %599 = vmatpush.msra.mxu0 %v500
  %600 = vmatpush.msra.mxu0 %v496
  %601 = vmatpush.msra.mxu0 %v492
  %602 = vmatpush.msra.mxu0 %v488
  %603 = vmatpush.msra.mxu0 %v484
  %604 = vmatmul.f32.gmra.mxu0 %v546
  %v605 = vpop.f32.mrf.mxu0
  %v606 = vadd.f32 0.0, %v605
  %607 = vdwg.mxu0
  %608 = vmatpush.msra.mxu0 %v545
  %609 = vmatpush.msra.mxu0 %v541
  %610 = vmatpush.msra.mxu0 %v537
  %611 = vmatpush.msra.mxu0 %v533
  %612 = vmatpush.msra.mxu0 %v529
  %613 = vmatpush.msra.mxu0 %v525
  %614 = vmatpush.msra.mxu0 %v521
  %615 = vmatpush.msra.mxu0 %v517
  %616 = vmatpush.msra.mxu0 %v513
  %617 = vmatpush.msra.mxu0 %v509
  %618 = vmatpush.msra.mxu0 %v505
  %619 = vmatpush.msra.mxu0 %v501
  %620 = vmatpush.msra.mxu0 %v497
  %621 = vmatpush.msra.mxu0 %v493
  %622 = vmatpush.msra.mxu0 %v489
  %623 = vmatpush.msra.mxu0 %v485
  %624 = vmatmul.f32.gmra.mxu0 %v546
  %v625 = vpop.f32.mrf.mxu0
  %v626 = vadd.f32 0.0, %v625
  %627 = vdwg.mxu0
  %v632 = vrot.slane %v566, 4
  %v633 = vrot.slane %v586, 4
  %v634 = vrot.slane %v606, 4
  %v635 = vrot.slane %v626, 4
  %v640 = vadd.f32 %v478, %v632
  %v641 = vadd.f32 %v479, %v633
  %v642 = vadd.f32 %v480, %v634
  %v643 = vadd.f32 %v481, %v635
  %v644 = vxor.u32 %v640, 2147483648
  %v645 = vmul.f32 %v644, 1.442695
  %v646 = vpow.pop %v645
  %v647 = vadd.f32 %v646, 1.0
  %v648 = vrcp.pop %v647
  %v649 = vmul.f32 %v647, %v648
  %v650 = vsub.f32 1.0, %v649
  %v651 = vmul.f32 %v648, %v650
  %v652 = vadd.f32 %v648, %v651
  %vm653 = vweird.f32 %v647
  %vm654 = vweird.f32 %v648
  %vm655 = vmor %vm653, %vm654
  %v656 = vsel %vm655, %v648, %v652
  %v657 = vand.u32 2147483647, %v647
  %vm658 = vcmp.eq.f32.partialorder %v657, 8.507059e+37
  %v659 = vand.u32 %v647, 2147483648
  %v660 = vor.u32 1.1754944e-38, %v659
  %v661 = vsel %vm658, %v660, %v656
  %v662 = vmul.f32 1.0, %v661
  %v663 = vxor.u32 %v641, 2147483648
  %v664 = vmul.f32 %v663, 1.442695
  %v665 = vpow.pop %v664
  %v666 = vadd.f32 %v665, 1.0
  %v667 = vrcp.pop %v666
  %v668 = vmul.f32 %v666, %v667
  %v669 = vsub.f32 1.0, %v668
  %v670 = vmul.f32 %v667, %v669
  %v671 = vadd.f32 %v667, %v670
  %vm672 = vweird.f32 %v666
  %vm673 = vweird.f32 %v667
  %vm674 = vmor %vm672, %vm673
  %v675 = vsel %vm674, %v667, %v671
  %v676 = vand.u32 2147483647, %v666
  %vm677 = vcmp.eq.f32.partialorder %v676, 8.507059e+37
  %v678 = vand.u32 %v666, 2147483648
  %v679 = vor.u32 1.1754944e-38, %v678
  %v680 = vsel %vm677, %v679, %v675
  %v681 = vmul.f32 1.0, %v680
  %v682 = vtanh.pop %v642
  %v683 = vxor.u32 %v643, 2147483648
  %v684 = vmul.f32 %v683, 1.442695
  %v685 = vpow.pop %v684
  %v686 = vadd.f32 %v685, 1.0
  %v687 = vrcp.pop %v686
  %v688 = vmul.f32 %v686, %v687
  %v689 = vsub.f32 1.0, %v688
  %v690 = vmul.f32 %v687, %v689
  %v691 = vadd.f32 %v687, %v690
  %vm692 = vweird.f32 %v686
  %vm693 = vweird.f32 %v687
  %vm694 = vmor %vm692, %vm693
  %v695 = vsel %vm694, %v687, %v691
  %v696 = vand.u32 2147483647, %v686
  %vm697 = vcmp.eq.f32.partialorder %v696, 8.507059e+37
  %v698 = vand.u32 %v686, 2147483648
  %v699 = vor.u32 1.1754944e-38, %v698
  %v700 = vsel %vm697, %v699, %v695
  %v701 = vmul.f32 1.0, %v700
  %v703 = vrot.slane %v469, 6
  %v705 = vmul.f32 %v681, %v703
  %v706 = vmul.f32 %v662, %v682
  %v707 = vadd.f32 %v705, %v706
  %v708 = vtanh.pop %v707
  %v709 = vmul.f32 %v701, %v708
  %711 = vst.sshfl [vmem:[#allocation1] sm:$0xff pattern:$0x73625140] %v709
  %s712 = scalar_lea.vmem [#allocation1], 2
  %v713 = vld [vmem:[%s712] ss:$4 sm:$0xff]
  %715 = vst [vmem:[#allocation3 + $0x4] sm:$0x3] %v713
  %v716 = vld [vmem:[#allocation2] sm:$0xc0]
  %v717 = vld [vmem:[#allocation2 + $0x8] sm:$0xc0]
  %v718 = vld [vmem:[#allocation2 + $0x10] sm:$0xc0]
  %v719 = vld [vmem:[#allocation2 + $0x18] sm:$0xc0]
  %v720 = vld [vmem:[%s2] sm:$0xff]
  %v721 = vld [vmem:[%s2 + $0x8] sm:$0xff]
  %v722 = vld [vmem:[%s2 + $0x10] sm:$0xff]
  %v723 = vld [vmem:[%s2 + $0x18] sm:$0xff]
  %v724 = vld [vmem:[%s2 + $0x20] sm:$0xff]
  %v725 = vld [vmem:[%s2 + $0x28] sm:$0xff]
  %v726 = vld [vmem:[%s2 + $0x30] sm:$0xff]
  %v727 = vld [vmem:[%s2 + $0x38] sm:$0xff]
  %v728 = vld [vmem:[%s2 + $0x40] sm:$0xff]
  %v729 = vld [vmem:[%s2 + $0x48] sm:$0xff]
  %v730 = vld [vmem:[%s2 + $0x50] sm:$0xff]
  %v731 = vld [vmem:[%s2 + $0x58] sm:$0xff]
  %v732 = vld [vmem:[%s2 + $0x60] sm:$0xff]
  %v733 = vld [vmem:[%s2 + $0x68] sm:$0xff]
  %v734 = vld [vmem:[%s2 + $0x70] sm:$0xff]
  %v735 = vld [vmem:[%s2 + $0x78] sm:$0xff]
  %v736 = vld [vmem:[%s2 + $0x80] sm:$0xff]
  %v737 = vld [vmem:[%s2 + $0x88] sm:$0xff]
  %v738 = vld [vmem:[%s2 + $0x90] sm:$0xff]
  %v739 = vld [vmem:[%s2 + $0x98] sm:$0xff]
  %v740 = vld [vmem:[%s2 + $0xa0] sm:$0xff]
  %v741 = vld [vmem:[%s2 + $0xa8] sm:$0xff]
  %v742 = vld [vmem:[%s2 + $0xb0] sm:$0xff]
  %v743 = vld [vmem:[%s2 + $0xb8] sm:$0xff]
  %v744 = vld [vmem:[%s2 + $0xc0] sm:$0xff]
  %v745 = vld [vmem:[%s2 + $0xc8] sm:$0xff]
  %v746 = vld [vmem:[%s2 + $0xd0] sm:$0xff]
  %v747 = vld [vmem:[%s2 + $0xd8] sm:$0xff]
  %v748 = vld [vmem:[%s2 + $0xe0] sm:$0xff]
  %v749 = vld [vmem:[%s2 + $0xe8] sm:$0xff]
  %v750 = vld [vmem:[%s2 + $0xf0] sm:$0xff]
  %v751 = vld [vmem:[%s2 + $0xf8] sm:$0xff]
  %v752 = vld [vmem:[%s2 + $0x100] sm:$0xff]
  %v753 = vld [vmem:[%s2 + $0x108] sm:$0xff]
  %v754 = vld [vmem:[%s2 + $0x110] sm:$0xff]
  %v755 = vld [vmem:[%s2 + $0x118] sm:$0xff]
  %v756 = vld [vmem:[%s2 + $0x120] sm:$0xff]
  %v757 = vld [vmem:[%s2 + $0x128] sm:$0xff]
  %v758 = vld [vmem:[%s2 + $0x130] sm:$0xff]
  %v759 = vld [vmem:[%s2 + $0x138] sm:$0xff]
  %v760 = vld [vmem:[%s2 + $0x140] sm:$0xff]
  %v761 = vld [vmem:[%s2 + $0x148] sm:$0xff]
  %v762 = vld [vmem:[%s2 + $0x150] sm:$0xff]
  %v763 = vld [vmem:[%s2 + $0x158] sm:$0xff]
  %v764 = vld [vmem:[%s2 + $0x160] sm:$0xff]
  %v765 = vld [vmem:[%s2 + $0x168] sm:$0xff]
  %v766 = vld [vmem:[%s2 + $0x170] sm:$0xff]
  %v767 = vld [vmem:[%s2 + $0x178] sm:$0xff]
  %v768 = vld [vmem:[%s2 + $0x180] sm:$0xff]
  %v769 = vld [vmem:[%s2 + $0x188] sm:$0xff]
  %v770 = vld [vmem:[%s2 + $0x190] sm:$0xff]
  %v771 = vld [vmem:[%s2 + $0x198] sm:$0xff]
  %v772 = vld [vmem:[%s2 + $0x1a0] sm:$0xff]
  %v773 = vld [vmem:[%s2 + $0x1a8] sm:$0xff]
  %v774 = vld [vmem:[%s2 + $0x1b0] sm:$0xff]
  %v775 = vld [vmem:[%s2 + $0x1b8] sm:$0xff]
  %v776 = vld [vmem:[%s2 + $0x1c0] sm:$0xff]
  %v777 = vld [vmem:[%s2 + $0x1c8] sm:$0xff]
  %v778 = vld [vmem:[%s2 + $0x1d0] sm:$0xff]
  %v779 = vld [vmem:[%s2 + $0x1d8] sm:$0xff]
  %v780 = vld [vmem:[%s2 + $0x1e0] sm:$0xff]
  %v781 = vld [vmem:[%s2 + $0x1e8] sm:$0xff]
  %v782 = vld [vmem:[%s2 + $0x1f0] sm:$0xff]
  %v783 = vld [vmem:[%s2 + $0x1f8] sm:$0xff]
  %v784 = vrot.slane %v709, 4
  %786 = vmatpush.msra.mxu0 %v780
  %787 = vmatpush.msra.mxu0 %v776
  %788 = vmatpush.msra.mxu0 %v772
  %789 = vmatpush.msra.mxu0 %v768
  %790 = vmatpush.msra.mxu0 %v764
  %791 = vmatpush.msra.mxu0 %v760
  %792 = vmatpush.msra.mxu0 %v756
  %793 = vmatpush.msra.mxu0 %v752
  %794 = vmatpush.msra.mxu0 %v748
  %795 = vmatpush.msra.mxu0 %v744
  %796 = vmatpush.msra.mxu0 %v740
  %797 = vmatpush.msra.mxu0 %v736
  %798 = vmatpush.msra.mxu0 %v732
  %799 = vmatpush.msra.mxu0 %v728
  %800 = vmatpush.msra.mxu0 %v724
  %801 = vmatpush.msra.mxu0 %v720
  %802 = vmatmul.f32.gmra.mxu0 %v784
  %v803 = vpop.f32.mrf.mxu0
  %v804 = vadd.f32 0.0, %v803
  %805 = vdwg.mxu0
  %806 = vmatpush.msra.mxu0 %v781
  %807 = vmatpush.msra.mxu0 %v777
  %808 = vmatpush.msra.mxu0 %v773
  %809 = vmatpush.msra.mxu0 %v769
  %810 = vmatpush.msra.mxu0 %v765
  %811 = vmatpush.msra.mxu0 %v761
  %812 = vmatpush.msra.mxu0 %v757
  %813 = vmatpush.msra.mxu0 %v753
  %814 = vmatpush.msra.mxu0 %v749
  %815 = vmatpush.msra.mxu0 %v745
  %816 = vmatpush.msra.mxu0 %v741
  %817 = vmatpush.msra.mxu0 %v737
  %818 = vmatpush.msra.mxu0 %v733
  %819 = vmatpush.msra.mxu0 %v729
  %820 = vmatpush.msra.mxu0 %v725
  %821 = vmatpush.msra.mxu0 %v721
  %822 = vmatmul.f32.gmra.mxu0 %v784
  %v823 = vpop.f32.mrf.mxu0
  %v824 = vadd.f32 0.0, %v823
  %825 = vdwg.mxu0
  %826 = vmatpush.msra.mxu0 %v782
  %827 = vmatpush.msra.mxu0 %v778
  %828 = vmatpush.msra.mxu0 %v774
  %829 = vmatpush.msra.mxu0 %v770
  %830 = vmatpush.msra.mxu0 %v766
  %831 = vmatpush.msra.mxu0 %v762
  %832 = vmatpush.msra.mxu0 %v758
  %833 = vmatpush.msra.mxu0 %v754
  %834 = vmatpush.msra.mxu0 %v750
  %835 = vmatpush.msra.mxu0 %v746
  %836 = vmatpush.msra.mxu0 %v742
  %837 = vmatpush.msra.mxu0 %v738
  %838 = vmatpush.msra.mxu0 %v734
  %839 = vmatpush.msra.mxu0 %v730
  %840 = vmatpush.msra.mxu0 %v726
  %841 = vmatpush.msra.mxu0 %v722
  %842 = vmatmul.f32.gmra.mxu0 %v784
  %v843 = vpop.f32.mrf.mxu0
  %v844 = vadd.f32 0.0, %v843
  %845 = vdwg.mxu0
  %846 = vmatpush.msra.mxu0 %v783
  %847 = vmatpush.msra.mxu0 %v779
  %848 = vmatpush.msra.mxu0 %v775
  %849 = vmatpush.msra.mxu0 %v771
  %850 = vmatpush.msra.mxu0 %v767
  %851 = vmatpush.msra.mxu0 %v763
  %852 = vmatpush.msra.mxu0 %v759
  %853 = vmatpush.msra.mxu0 %v755
  %854 = vmatpush.msra.mxu0 %v751
  %855 = vmatpush.msra.mxu0 %v747
  %856 = vmatpush.msra.mxu0 %v743
  %857 = vmatpush.msra.mxu0 %v739
  %858 = vmatpush.msra.mxu0 %v735
  %859 = vmatpush.msra.mxu0 %v731
  %860 = vmatpush.msra.mxu0 %v727
  %861 = vmatpush.msra.mxu0 %v723
  %862 = vmatmul.f32.gmra.mxu0 %v784
  %v863 = vpop.f32.mrf.mxu0
  %v864 = vadd.f32 0.0, %v863
  %865 = vdwg.mxu0
  %v870 = vrot.slane %v804, 2
  %v871 = vrot.slane %v824, 2
  %v872 = vrot.slane %v844, 2
  %v873 = vrot.slane %v864, 2
  %v878 = vadd.f32 %v716, %v870
  %v879 = vadd.f32 %v717, %v871
  %v880 = vadd.f32 %v718, %v872
  %v881 = vadd.f32 %v719, %v873
  %v882 = vxor.u32 %v878, 2147483648
  %v883 = vmul.f32 %v882, 1.442695
  %v884 = vpow.pop %v883
  %v885 = vadd.f32 %v884, 1.0
  %v886 = vrcp.pop %v885
  %v887 = vmul.f32 %v885, %v886
  %v888 = vsub.f32 1.0, %v887
  %v889 = vmul.f32 %v886, %v888
  %v890 = vadd.f32 %v886, %v889
  %vm891 = vweird.f32 %v885
  %vm892 = vweird.f32 %v886
  %vm893 = vmor %vm891, %vm892
  %v894 = vsel %vm893, %v886, %v890
  %v895 = vand.u32 2147483647, %v885
  %vm896 = vcmp.eq.f32.partialorder %v895, 8.507059e+37
  %v897 = vand.u32 %v885, 2147483648
  %v898 = vor.u32 1.1754944e-38, %v897
  %v899 = vsel %vm896, %v898, %v894
  %v900 = vmul.f32 1.0, %v899
  %v901 = vxor.u32 %v879, 2147483648
  %v902 = vmul.f32 %v901, 1.442695
  %v903 = vpow.pop %v902
  %v904 = vadd.f32 %v903, 1.0
  %v905 = vrcp.pop %v904
  %v906 = vmul.f32 %v904, %v905
  %v907 = vsub.f32 1.0, %v906
  %v908 = vmul.f32 %v905, %v907
  %v909 = vadd.f32 %v905, %v908
  %vm910 = vweird.f32 %v904
  %vm911 = vweird.f32 %v905
  %vm912 = vmor %vm910, %vm911
  %v913 = vsel %vm912, %v905, %v909
  %v914 = vand.u32 2147483647, %v904
  %vm915 = vcmp.eq.f32.partialorder %v914, 8.507059e+37
  %v916 = vand.u32 %v904, 2147483648
  %v917 = vor.u32 1.1754944e-38, %v916
  %v918 = vsel %vm915, %v917, %v913
  %v919 = vmul.f32 1.0, %v918
  %v920 = vtanh.pop %v880
  %v921 = vxor.u32 %v881, 2147483648
  %v922 = vmul.f32 %v921, 1.442695
  %v923 = vpow.pop %v922
  %v924 = vadd.f32 %v923, 1.0
  %v925 = vrcp.pop %v924
  %v926 = vmul.f32 %v924, %v925
  %v927 = vsub.f32 1.0, %v926
  %v928 = vmul.f32 %v925, %v927
  %v929 = vadd.f32 %v925, %v928
  %vm930 = vweird.f32 %v924
  %vm931 = vweird.f32 %v925
  %vm932 = vmor %vm930, %vm931
  %v933 = vsel %vm932, %v925, %v929
  %v934 = vand.u32 2147483647, %v924
  %vm935 = vcmp.eq.f32.partialorder %v934, 8.507059e+37
  %v936 = vand.u32 %v924, 2147483648
  %v937 = vor.u32 1.1754944e-38, %v936
  %v938 = vsel %vm935, %v937, %v933
  %v939 = vmul.f32 1.0, %v938
  %v941 = vrot.slane %v707, 6
  %v943 = vmul.f32 %v919, %v941
  %v944 = vmul.f32 %v900, %v920
  %v945 = vadd.f32 %v943, %v944
  %v946 = vtanh.pop %v945
  %v947 = vmul.f32 %v939, %v946
  %949 = vst.sshfl [vmem:[#allocation1] sm:$0xff pattern:$0x73625140] %v947
  %s950 = scalar_lea.vmem [#allocation1], 3
  %v951 = vld [vmem:[%s950] ss:$4 sm:$0xff]
  %953 = vst [vmem:[#allocation3 + $0x6] sm:$0x3] %v951
  %v954 = vld [vmem:[#allocation2 + $0x20] sm:$0x3]
  %v955 = vld [vmem:[#allocation2 + $0x28] sm:$0x3]
  %v956 = vld [vmem:[#allocation2 + $0x30] sm:$0x3]
  %v957 = vld [vmem:[#allocation2 + $0x38] sm:$0x3]
  %v958 = vld [vmem:[%s2] sm:$0xff]
  %v959 = vld [vmem:[%s2 + $0x8] sm:$0xff]
  %v960 = vld [vmem:[%s2 + $0x10] sm:$0xff]
  %v961 = vld [vmem:[%s2 + $0x18] sm:$0xff]
  %v962 = vld [vmem:[%s2 + $0x20] sm:$0xff]
  %v963 = vld [vmem:[%s2 + $0x28] sm:$0xff]
  %v964 = vld [vmem:[%s2 + $0x30] sm:$0xff]
  %v965 = vld [vmem:[%s2 + $0x38] sm:$0xff]
  %v966 = vld [vmem:[%s2 + $0x40] sm:$0xff]
  %v967 = vld [vmem:[%s2 + $0x48] sm:$0xff]
  %v968 = vld [vmem:[%s2 + $0x50] sm:$0xff]
  %v969 = vld [vmem:[%s2 + $0x58] sm:$0xff]
  %v970 = vld [vmem:[%s2 + $0x60] sm:$0xff]
  %v971 = vld [vmem:[%s2 + $0x68] sm:$0xff]
  %v972 = vld [vmem:[%s2 + $0x70] sm:$0xff]
  %v973 = vld [vmem:[%s2 + $0x78] sm:$0xff]
  %v974 = vld [vmem:[%s2 + $0x80] sm:$0xff]
  %v975 = vld [vmem:[%s2 + $0x88] sm:$0xff]
  %v976 = vld [vmem:[%s2 + $0x90] sm:$0xff]
  %v977 = vld [vmem:[%s2 + $0x98] sm:$0xff]
  %v978 = vld [vmem:[%s2 + $0xa0] sm:$0xff]
  %v979 = vld [vmem:[%s2 + $0xa8] sm:$0xff]
  %v980 = vld [vmem:[%s2 + $0xb0] sm:$0xff]
  %v981 = vld [vmem:[%s2 + $0xb8] sm:$0xff]
  %v982 = vld [vmem:[%s2 + $0xc0] sm:$0xff]
  %v983 = vld [vmem:[%s2 + $0xc8] sm:$0xff]
  %v984 = vld [vmem:[%s2 + $0xd0] sm:$0xff]
  %v985 = vld [vmem:[%s2 + $0xd8] sm:$0xff]
  %v986 = vld [vmem:[%s2 + $0xe0] sm:$0xff]
  %v987 = vld [vmem:[%s2 + $0xe8] sm:$0xff]
  %v988 = vld [vmem:[%s2 + $0xf0] sm:$0xff]
  %v989 = vld [vmem:[%s2 + $0xf8] sm:$0xff]
  %v990 = vld [vmem:[%s2 + $0x100] sm:$0xff]
  %v991 = vld [vmem:[%s2 + $0x108] sm:$0xff]
  %v992 = vld [vmem:[%s2 + $0x110] sm:$0xff]
  %v993 = vld [vmem:[%s2 + $0x118] sm:$0xff]
  %v994 = vld [vmem:[%s2 + $0x120] sm:$0xff]
  %v995 = vld [vmem:[%s2 + $0x128] sm:$0xff]
  %v996 = vld [vmem:[%s2 + $0x130] sm:$0xff]
  %v997 = vld [vmem:[%s2 + $0x138] sm:$0xff]
  %v998 = vld [vmem:[%s2 + $0x140] sm:$0xff]
  %v999 = vld [vmem:[%s2 + $0x148] sm:$0xff]
  %v1000 = vld [vmem:[%s2 + $0x150] sm:$0xff]
  %v1001 = vld [vmem:[%s2 + $0x158] sm:$0xff]
  %v1002 = vld [vmem:[%s2 + $0x160] sm:$0xff]
  %v1003 = vld [vmem:[%s2 + $0x168] sm:$0xff]
  %v1004 = vld [vmem:[%s2 + $0x170] sm:$0xff]
  %v1005 = vld [vmem:[%s2 + $0x178] sm:$0xff]
  %v1006 = vld [vmem:[%s2 + $0x180] sm:$0xff]
  %v1007 = vld [vmem:[%s2 + $0x188] sm:$0xff]
  %v1008 = vld [vmem:[%s2 + $0x190] sm:$0xff]
  %v1009 = vld [vmem:[%s2 + $0x198] sm:$0xff]
  %v1010 = vld [vmem:[%s2 + $0x1a0] sm:$0xff]
  %v1011 = vld [vmem:[%s2 + $0x1a8] sm:$0xff]
  %v1012 = vld [vmem:[%s2 + $0x1b0] sm:$0xff]
  %v1013 = vld [vmem:[%s2 + $0x1b8] sm:$0xff]
  %v1014 = vld [vmem:[%s2 + $0x1c0] sm:$0xff]
  %v1015 = vld [vmem:[%s2 + $0x1c8] sm:$0xff]
  %v1016 = vld [vmem:[%s2 + $0x1d0] sm:$0xff]
  %v1017 = vld [vmem:[%s2 + $0x1d8] sm:$0xff]
  %v1018 = vld [vmem:[%s2 + $0x1e0] sm:$0xff]
  %v1019 = vld [vmem:[%s2 + $0x1e8] sm:$0xff]
  %v1020 = vld [vmem:[%s2 + $0x1f0] sm:$0xff]
  %v1021 = vld [vmem:[%s2 + $0x1f8] sm:$0xff]
  %v1022 = vrot.slane %v947, 6
  %1024 = vmatpush.msra.mxu0 %v1018
  %1025 = vmatpush.msra.mxu0 %v1014
  %1026 = vmatpush.msra.mxu0 %v1010
  %1027 = vmatpush.msra.mxu0 %v1006
  %1028 = vmatpush.msra.mxu0 %v1002
  %1029 = vmatpush.msra.mxu0 %v998
  %1030 = vmatpush.msra.mxu0 %v994
  %1031 = vmatpush.msra.mxu0 %v990
  %1032 = vmatpush.msra.mxu0 %v986
  %1033 = vmatpush.msra.mxu0 %v982
  %1034 = vmatpush.msra.mxu0 %v978
  %1035 = vmatpush.msra.mxu0 %v974
  %1036 = vmatpush.msra.mxu0 %v970
  %1037 = vmatpush.msra.mxu0 %v966
  %1038 = vmatpush.msra.mxu0 %v962
  %1039 = vmatpush.msra.mxu0 %v958
  %1040 = vmatmul.f32.gmra.mxu0 %v1022
  %v1041 = vpop.f32.mrf.mxu0
  %v1042 = vadd.f32 0.0, %v1041
  %1043 = vdwg.mxu0
  %1044 = vmatpush.msra.mxu0 %v1019
  %1045 = vmatpush.msra.mxu0 %v1015
  %1046 = vmatpush.msra.mxu0 %v1011
  %1047 = vmatpush.msra.mxu0 %v1007
  %1048 = vmatpush.msra.mxu0 %v1003
  %1049 = vmatpush.msra.mxu0 %v999
  %1050 = vmatpush.msra.mxu0 %v995
  %1051 = vmatpush.msra.mxu0 %v991
  %1052 = vmatpush.msra.mxu0 %v987
  %1053 = vmatpush.msra.mxu0 %v983
  %1054 = vmatpush.msra.mxu0 %v979
  %1055 = vmatpush.msra.mxu0 %v975
  %1056 = vmatpush.msra.mxu0 %v971
  %1057 = vmatpush.msra.mxu0 %v967
  %1058 = vmatpush.msra.mxu0 %v963
  %1059 = vmatpush.msra.mxu0 %v959
  %1060 = vmatmul.f32.gmra.mxu0 %v1022
  %v1061 = vpop.f32.mrf.mxu0
  %v1062 = vadd.f32 0.0, %v1061
  %1063 = vdwg.mxu0
  %1064 = vmatpush.msra.mxu0 %v1020
  %1065 = vmatpush.msra.mxu0 %v1016
  %1066 = vmatpush.msra.mxu0 %v1012
  %1067 = vmatpush.msra.mxu0 %v1008
  %1068 = vmatpush.msra.mxu0 %v1004
  %1069 = vmatpush.msra.mxu0 %v1000
  %1070 = vmatpush.msra.mxu0 %v996
  %1071 = vmatpush.msra.mxu0 %v992
  %1072 = vmatpush.msra.mxu0 %v988
  %1073 = vmatpush.msra.mxu0 %v984
  %1074 = vmatpush.msra.mxu0 %v980
  %1075 = vmatpush.msra.mxu0 %v976
  %1076 = vmatpush.msra.mxu0 %v972
  %1077 = vmatpush.msra.mxu0 %v968
  %1078 = vmatpush.msra.mxu0 %v964
  %1079 = vmatpush.msra.mxu0 %v960
  %1080 = vmatmul.f32.gmra.mxu0 %v1022
  %v1081 = vpop.f32.mrf.mxu0
  %v1082 = vadd.f32 0.0, %v1081
  %1083 = vdwg.mxu0
  %1084 = vmatpush.msra.mxu0 %v1021
  %1085 = vmatpush.msra.mxu0 %v1017
  %1086 = vmatpush.msra.mxu0 %v1013
  %1087 = vmatpush.msra.mxu0 %v1009
  %1088 = vmatpush.msra.mxu0 %v1005
  %1089 = vmatpush.msra.mxu0 %v1001
  %1090 = vmatpush.msra.mxu0 %v997
  %1091 = vmatpush.msra.mxu0 %v993
  %1092 = vmatpush.msra.mxu0 %v989
  %1093 = vmatpush.msra.mxu0 %v985
  %1094 = vmatpush.msra.mxu0 %v981
  %1095 = vmatpush.msra.mxu0 %v977
  %1096 = vmatpush.msra.mxu0 %v973
  %1097 = vmatpush.msra.mxu0 %v969
  %1098 = vmatpush.msra.mxu0 %v965
  %1099 = vmatpush.msra.mxu0 %v961
  %1100 = vmatmul.f32.gmra.mxu0 %v1022
  %v1101 = vpop.f32.mrf.mxu0
  %v1102 = vadd.f32 0.0, %v1101
  %1103 = vdwg.mxu0
  %v1104 = vadd.f32 %v954, %v1042
  %v1105 = vadd.f32 %v955, %v1062
  %v1106 = vadd.f32 %v956, %v1082
  %v1107 = vadd.f32 %v957, %v1102
  %v1108 = vxor.u32 %v1104, 2147483648
  %v1109 = vmul.f32 %v1108, 1.442695
  %v1110 = vpow.pop %v1109
  %v1111 = vadd.f32 %v1110, 1.0
  %v1112 = vrcp.pop %v1111
  %v1113 = vmul.f32 %v1111, %v1112
  %v1114 = vsub.f32 1.0, %v1113
  %v1115 = vmul.f32 %v1112, %v1114
  %v1116 = vadd.f32 %v1112, %v1115
  %vm1117 = vweird.f32 %v1111
  %vm1118 = vweird.f32 %v1112
  %vm1119 = vmor %vm1117, %vm1118
  %v1120 = vsel %vm1119, %v1112, %v1116
  %v1121 = vand.u32 2147483647, %v1111
  %vm1122 = vcmp.eq.f32.partialorder %v1121, 8.507059e+37
  %v1123 = vand.u32 %v1111, 2147483648
  %v1124 = vor.u32 1.1754944e-38, %v1123
  %v1125 = vsel %vm1122, %v1124, %v1120
  %v1126 = vmul.f32 1.0, %v1125
  %v1127 = vxor.u32 %v1105, 2147483648
  %v1128 = vmul.f32 %v1127, 1.442695
  %v1129 = vpow.pop %v1128
  %v1130 = vadd.f32 %v1129, 1.0
  %v1131 = vrcp.pop %v1130
  %v1132 = vmul.f32 %v1130, %v1131
  %v1133 = vsub.f32 1.0, %v1132
  %v1134 = vmul.f32 %v1131, %v1133
  %v1135 = vadd.f32 %v1131, %v1134
  %vm1136 = vweird.f32 %v1130
  %vm1137 = vweird.f32 %v1131
  %vm1138 = vmor %vm1136, %vm1137
  %v1139 = vsel %vm1138, %v1131, %v1135
  %v1140 = vand.u32 2147483647, %v1130
  %vm1141 = vcmp.eq.f32.partialorder %v1140, 8.507059e+37
  %v1142 = vand.u32 %v1130, 2147483648
  %v1143 = vor.u32 1.1754944e-38, %v1142
  %v1144 = vsel %vm1141, %v1143, %v1139
  %v1145 = vmul.f32 1.0, %v1144
  %v1146 = vtanh.pop %v1106
  %v1147 = vxor.u32 %v1107, 2147483648
  %v1148 = vmul.f32 %v1147, 1.442695
  %v1149 = vpow.pop %v1148
  %v1150 = vadd.f32 %v1149, 1.0
  %v1151 = vrcp.pop %v1150
  %v1152 = vmul.f32 %v1150, %v1151
  %v1153 = vsub.f32 1.0, %v1152
  %v1154 = vmul.f32 %v1151, %v1153
  %v1155 = vadd.f32 %v1151, %v1154
  %vm1156 = vweird.f32 %v1150
  %vm1157 = vweird.f32 %v1151
  %vm1158 = vmor %vm1156, %vm1157
  %v1159 = vsel %vm1158, %v1151, %v1155
  %v1160 = vand.u32 2147483647, %v1150
  %vm1161 = vcmp.eq.f32.partialorder %v1160, 8.507059e+37
  %v1162 = vand.u32 %v1150, 2147483648
  %v1163 = vor.u32 1.1754944e-38, %v1162
  %v1164 = vsel %vm1161, %v1163, %v1159
  %v1165 = vmul.f32 1.0, %v1164
  %v1167 = vrot.slane %v945, 6
  %v1169 = vmul.f32 %v1145, %v1167
  %v1170 = vmul.f32 %v1126, %v1146
  %v1171 = vadd.f32 %v1169, %v1170
  %v1172 = vtanh.pop %v1171
  %v1173 = vmul.f32 %v1165, %v1172
  %1174 = vst [vmem:[#allocation3 + $0x8] sm:$0x3] %v1173
  %v1175 = vld [vmem:[#allocation2 + $0x20] sm:$0xc]
  %v1176 = vld [vmem:[#allocation2 + $0x28] sm:$0xc]
  %v1177 = vld [vmem:[#allocation2 + $0x30] sm:$0xc]
  %v1178 = vld [vmem:[#allocation2 + $0x38] sm:$0xc]
  %v1179 = vld [vmem:[%s2] sm:$0xff]
  %v1180 = vld [vmem:[%s2 + $0x8] sm:$0xff]
  %v1181 = vld [vmem:[%s2 + $0x10] sm:$0xff]
  %v1182 = vld [vmem:[%s2 + $0x18] sm:$0xff]
  %v1183 = vld [vmem:[%s2 + $0x20] sm:$0xff]
  %v1184 = vld [vmem:[%s2 + $0x28] sm:$0xff]
  %v1185 = vld [vmem:[%s2 + $0x30] sm:$0xff]
  %v1186 = vld [vmem:[%s2 + $0x38] sm:$0xff]
  %v1187 = vld [vmem:[%s2 + $0x40] sm:$0xff]
  %v1188 = vld [vmem:[%s2 + $0x48] sm:$0xff]
  %v1189 = vld [vmem:[%s2 + $0x50] sm:$0xff]
  %v1190 = vld [vmem:[%s2 + $0x58] sm:$0xff]
  %v1191 = vld [vmem:[%s2 + $0x60] sm:$0xff]
  %v1192 = vld [vmem:[%s2 + $0x68] sm:$0xff]
  %v1193 = vld [vmem:[%s2 + $0x70] sm:$0xff]
  %v1194 = vld [vmem:[%s2 + $0x78] sm:$0xff]
  %v1195 = vld [vmem:[%s2 + $0x80] sm:$0xff]
  %v1196 = vld [vmem:[%s2 + $0x88] sm:$0xff]
  %v1197 = vld [vmem:[%s2 + $0x90] sm:$0xff]
  %v1198 = vld [vmem:[%s2 + $0x98] sm:$0xff]
  %v1199 = vld [vmem:[%s2 + $0xa0] sm:$0xff]
  %v1200 = vld [vmem:[%s2 + $0xa8] sm:$0xff]
  %v1201 = vld [vmem:[%s2 + $0xb0] sm:$0xff]
  %v1202 = vld [vmem:[%s2 + $0xb8] sm:$0xff]
  %v1203 = vld [vmem:[%s2 + $0xc0] sm:$0xff]
  %v1204 = vld [vmem:[%s2 + $0xc8] sm:$0xff]
  %v1205 = vld [vmem:[%s2 + $0xd0] sm:$0xff]
  %v1206 = vld [vmem:[%s2 + $0xd8] sm:$0xff]
  %v1207 = vld [vmem:[%s2 + $0xe0] sm:$0xff]
  %v1208 = vld [vmem:[%s2 + $0xe8] sm:$0xff]
  %v1209 = vld [vmem:[%s2 + $0xf0] sm:$0xff]
  %v1210 = vld [vmem:[%s2 + $0xf8] sm:$0xff]
  %v1211 = vld [vmem:[%s2 + $0x100] sm:$0xff]
  %v1212 = vld [vmem:[%s2 + $0x108] sm:$0xff]
  %v1213 = vld [vmem:[%s2 + $0x110] sm:$0xff]
  %v1214 = vld [vmem:[%s2 + $0x118] sm:$0xff]
  %v1215 = vld [vmem:[%s2 + $0x120] sm:$0xff]
  %v1216 = vld [vmem:[%s2 + $0x128] sm:$0xff]
  %v1217 = vld [vmem:[%s2 + $0x130] sm:$0xff]
  %v1218 = vld [vmem:[%s2 + $0x138] sm:$0xff]
  %v1219 = vld [vmem:[%s2 + $0x140] sm:$0xff]
  %v1220 = vld [vmem:[%s2 + $0x148] sm:$0xff]
  %v1221 = vld [vmem:[%s2 + $0x150] sm:$0xff]
  %v1222 = vld [vmem:[%s2 + $0x158] sm:$0xff]
  %v1223 = vld [vmem:[%s2 + $0x160] sm:$0xff]
  %v1224 = vld [vmem:[%s2 + $0x168] sm:$0xff]
  %v1225 = vld [vmem:[%s2 + $0x170] sm:$0xff]
  %v1226 = vld [vmem:[%s2 + $0x178] sm:$0xff]
  %v1227 = vld [vmem:[%s2 + $0x180] sm:$0xff]
  %v1228 = vld [vmem:[%s2 + $0x188] sm:$0xff]
  %v1229 = vld [vmem:[%s2 + $0x190] sm:$0xff]
  %v1230 = vld [vmem:[%s2 + $0x198] sm:$0xff]
  %v1231 = vld [vmem:[%s2 + $0x1a0] sm:$0xff]
  %v1232 = vld [vmem:[%s2 + $0x1a8] sm:$0xff]
  %v1233 = vld [vmem:[%s2 + $0x1b0] sm:$0xff]
  %v1234 = vld [vmem:[%s2 + $0x1b8] sm:$0xff]
  %v1235 = vld [vmem:[%s2 + $0x1c0] sm:$0xff]
  %v1236 = vld [vmem:[%s2 + $0x1c8] sm:$0xff]
  %v1237 = vld [vmem:[%s2 + $0x1d0] sm:$0xff]
  %v1238 = vld [vmem:[%s2 + $0x1d8] sm:$0xff]
  %v1239 = vld [vmem:[%s2 + $0x1e0] sm:$0xff]
  %v1240 = vld [vmem:[%s2 + $0x1e8] sm:$0xff]
  %v1241 = vld [vmem:[%s2 + $0x1f0] sm:$0xff]
  %v1242 = vld [vmem:[%s2 + $0x1f8] sm:$0xff]
  %1243 = vmatpush.msra.mxu0 %v1239
  %1244 = vmatpush.msra.mxu0 %v1235
  %1245 = vmatpush.msra.mxu0 %v1231
  %1246 = vmatpush.msra.mxu0 %v1227
  %1247 = vmatpush.msra.mxu0 %v1223
  %1248 = vmatpush.msra.mxu0 %v1219
  %1249 = vmatpush.msra.mxu0 %v1215
  %1250 = vmatpush.msra.mxu0 %v1211
  %1251 = vmatpush.msra.mxu0 %v1207
  %1252 = vmatpush.msra.mxu0 %v1203
  %1253 = vmatpush.msra.mxu0 %v1199
  %1254 = vmatpush.msra.mxu0 %v1195
  %1255 = vmatpush.msra.mxu0 %v1191
  %1256 = vmatpush.msra.mxu0 %v1187
  %1257 = vmatpush.msra.mxu0 %v1183
  %1258 = vmatpush.msra.mxu0 %v1179
  %1259 = vmatmul.f32.gmra.mxu0 %v1173
  %v1260 = vpop.f32.mrf.mxu0
  %v1261 = vadd.f32 0.0, %v1260
  %1262 = vdwg.mxu0
  %1263 = vmatpush.msra.mxu0 %v1240
  %1264 = vmatpush.msra.mxu0 %v1236
  %1265 = vmatpush.msra.mxu0 %v1232
  %1266 = vmatpush.msra.mxu0 %v1228
  %1267 = vmatpush.msra.mxu0 %v1224
  %1268 = vmatpush.msra.mxu0 %v1220
  %1269 = vmatpush.msra.mxu0 %v1216
  %1270 = vmatpush.msra.mxu0 %v1212
  %1271 = vmatpush.msra.mxu0 %v1208
  %1272 = vmatpush.msra.mxu0 %v1204
  %1273 = vmatpush.msra.mxu0 %v1200
  %1274 = vmatpush.msra.mxu0 %v1196
  %1275 = vmatpush.msra.mxu0 %v1192
  %1276 = vmatpush.msra.mxu0 %v1188
  %1277 = vmatpush.msra.mxu0 %v1184
  %1278 = vmatpush.msra.mxu0 %v1180
  %1279 = vmatmul.f32.gmra.mxu0 %v1173
  %v1280 = vpop.f32.mrf.mxu0
  %v1281 = vadd.f32 0.0, %v1280
  %1282 = vdwg.mxu0
  %1283 = vmatpush.msra.mxu0 %v1241
  %1284 = vmatpush.msra.mxu0 %v1237
  %1285 = vmatpush.msra.mxu0 %v1233
  %1286 = vmatpush.msra.mxu0 %v1229
  %1287 = vmatpush.msra.mxu0 %v1225
  %1288 = vmatpush.msra.mxu0 %v1221
  %1289 = vmatpush.msra.mxu0 %v1217
  %1290 = vmatpush.msra.mxu0 %v1213
  %1291 = vmatpush.msra.mxu0 %v1209
  %1292 = vmatpush.msra.mxu0 %v1205
  %1293 = vmatpush.msra.mxu0 %v1201
  %1294 = vmatpush.msra.mxu0 %v1197
  %1295 = vmatpush.msra.mxu0 %v1193
  %1296 = vmatpush.msra.mxu0 %v1189
  %1297 = vmatpush.msra.mxu0 %v1185
  %1298 = vmatpush.msra.mxu0 %v1181
  %1299 = vmatmul.f32.gmra.mxu0 %v1173
  %v1300 = vpop.f32.mrf.mxu0
  %v1301 = vadd.f32 0.0, %v1300
  %1302 = vdwg.mxu0
  %1303 = vmatpush.msra.mxu0 %v1242
  %1304 = vmatpush.msra.mxu0 %v1238
  %1305 = vmatpush.msra.mxu0 %v1234
  %1306 = vmatpush.msra.mxu0 %v1230
  %1307 = vmatpush.msra.mxu0 %v1226
  %1308 = vmatpush.msra.mxu0 %v1222
  %1309 = vmatpush.msra.mxu0 %v1218
  %1310 = vmatpush.msra.mxu0 %v1214
  %1311 = vmatpush.msra.mxu0 %v1210
  %1312 = vmatpush.msra.mxu0 %v1206
  %1313 = vmatpush.msra.mxu0 %v1202
  %1314 = vmatpush.msra.mxu0 %v1198
  %1315 = vmatpush.msra.mxu0 %v1194
  %1316 = vmatpush.msra.mxu0 %v1190
  %1317 = vmatpush.msra.mxu0 %v1186
  %1318 = vmatpush.msra.mxu0 %v1182
  %1319 = vmatmul.f32.gmra.mxu0 %v1173
  %v1320 = vpop.f32.mrf.mxu0
  %v1321 = vadd.f32 0.0, %v1320
  %1322 = vdwg.mxu0
  %v1327 = vrot.slane %v1261, 6
  %v1328 = vrot.slane %v1281, 6
  %v1329 = vrot.slane %v1301, 6
  %v1330 = vrot.slane %v1321, 6
  %v1335 = vadd.f32 %v1175, %v1327
  %v1336 = vadd.f32 %v1176, %v1328
  %v1337 = vadd.f32 %v1177, %v1329
  %v1338 = vadd.f32 %v1178, %v1330
  %v1339 = vxor.u32 %v1335, 2147483648
  %v1340 = vmul.f32 %v1339, 1.442695
  %v1341 = vpow.pop %v1340
  %v1342 = vadd.f32 %v1341, 1.0
  %v1343 = vrcp.pop %v1342
  %v1344 = vmul.f32 %v1342, %v1343
  %v1345 = vsub.f32 1.0, %v1344
  %v1346 = vmul.f32 %v1343, %v1345
  %v1347 = vadd.f32 %v1343, %v1346
  %vm1348 = vweird.f32 %v1342
  %vm1349 = vweird.f32 %v1343
  %vm1350 = vmor %vm1348, %vm1349
  %v1351 = vsel %vm1350, %v1343, %v1347
  %v1352 = vand.u32 2147483647, %v1342
  %vm1353 = vcmp.eq.f32.partialorder %v1352, 8.507059e+37
  %v1354 = vand.u32 %v1342, 2147483648
  %v1355 = vor.u32 1.1754944e-38, %v1354
  %v1356 = vsel %vm1353, %v1355, %v1351
  %v1357 = vmul.f32 1.0, %v1356
  %v1358 = vxor.u32 %v1336, 2147483648
  %v1359 = vmul.f32 %v1358, 1.442695
  %v1360 = vpow.pop %v1359
  %v1361 = vadd.f32 %v1360, 1.0
  %v1362 = vrcp.pop %v1361
  %v1363 = vmul.f32 %v1361, %v1362
  %v1364 = vsub.f32 1.0, %v1363
  %v1365 = vmul.f32 %v1362, %v1364
  %v1366 = vadd.f32 %v1362, %v1365
  %vm1367 = vweird.f32 %v1361
  %vm1368 = vweird.f32 %v1362
  %vm1369 = vmor %vm1367, %vm1368
  %v1370 = vsel %vm1369, %v1362, %v1366
  %v1371 = vand.u32 2147483647, %v1361
  %vm1372 = vcmp.eq.f32.partialorder %v1371, 8.507059e+37
  %v1373 = vand.u32 %v1361, 2147483648
  %v1374 = vor.u32 1.1754944e-38, %v1373
  %v1375 = vsel %vm1372, %v1374, %v1370
  %v1376 = vmul.f32 1.0, %v1375
  %v1377 = vtanh.pop %v1337
  %v1378 = vxor.u32 %v1338, 2147483648
  %v1379 = vmul.f32 %v1378, 1.442695
  %v1380 = vpow.pop %v1379
  %v1381 = vadd.f32 %v1380, 1.0
  %v1382 = vrcp.pop %v1381
  %v1383 = vmul.f32 %v1381, %v1382
  %v1384 = vsub.f32 1.0, %v1383
  %v1385 = vmul.f32 %v1382, %v1384
  %v1386 = vadd.f32 %v1382, %v1385
  %vm1387 = vweird.f32 %v1381
  %vm1388 = vweird.f32 %v1382
  %vm1389 = vmor %vm1387, %vm1388
  %v1390 = vsel %vm1389, %v1382, %v1386
  %v1391 = vand.u32 2147483647, %v1381
  %vm1392 = vcmp.eq.f32.partialorder %v1391, 8.507059e+37
  %v1393 = vand.u32 %v1381, 2147483648
  %v1394 = vor.u32 1.1754944e-38, %v1393
  %v1395 = vsel %vm1392, %v1394, %v1390
  %v1396 = vmul.f32 1.0, %v1395
  %v1398 = vrot.slane %v1171, 6
  %v1400 = vmul.f32 %v1376, %v1398
  %v1401 = vmul.f32 %v1357, %v1377
  %v1402 = vadd.f32 %v1400, %v1401
  %v1403 = vtanh.pop %v1402
  %v1404 = vmul.f32 %v1396, %v1403
  %1406 = vst.sshfl [vmem:[#allocation1] sm:$0xff pattern:$0x73625140] %v1404
  %s1407 = scalar_lea.vmem [#allocation1], 1
  %v1408 = vld [vmem:[%s1407] ss:$4 sm:$0xff]
  %1410 = vst [vmem:[#allocation3 + $0xa] sm:$0x3] %v1408
  %v1411 = vld [vmem:[#allocation2 + $0x20] sm:$0x30]
  %v1412 = vld [vmem:[#allocation2 + $0x28] sm:$0x30]
  %v1413 = vld [vmem:[#allocation2 + $0x30] sm:$0x30]
  %v1414 = vld [vmem:[#allocation2 + $0x38] sm:$0x30]
  %v1415 = vld [vmem:[%s2] sm:$0xff]
  %v1416 = vld [vmem:[%s2 + $0x8] sm:$0xff]
  %v1417 = vld [vmem:[%s2 + $0x10] sm:$0xff]
  %v1418 = vld [vmem:[%s2 + $0x18] sm:$0xff]
  %v1419 = vld [vmem:[%s2 + $0x20] sm:$0xff]
  %v1420 = vld [vmem:[%s2 + $0x28] sm:$0xff]
  %v1421 = vld [vmem:[%s2 + $0x30] sm:$0xff]
  %v1422 = vld [vmem:[%s2 + $0x38] sm:$0xff]
  %v1423 = vld [vmem:[%s2 + $0x40] sm:$0xff]
  %v1424 = vld [vmem:[%s2 + $0x48] sm:$0xff]
  %v1425 = vld [vmem:[%s2 + $0x50] sm:$0xff]
  %v1426 = vld [vmem:[%s2 + $0x58] sm:$0xff]
  %v1427 = vld [vmem:[%s2 + $0x60] sm:$0xff]
  %v1428 = vld [vmem:[%s2 + $0x68] sm:$0xff]
  %v1429 = vld [vmem:[%s2 + $0x70] sm:$0xff]
  %v1430 = vld [vmem:[%s2 + $0x78] sm:$0xff]
  %v1431 = vld [vmem:[%s2 + $0x80] sm:$0xff]
  %v1432 = vld [vmem:[%s2 + $0x88] sm:$0xff]
  %v1433 = vld [vmem:[%s2 + $0x90] sm:$0xff]
  %v1434 = vld [vmem:[%s2 + $0x98] sm:$0xff]
  %v1435 = vld [vmem:[%s2 + $0xa0] sm:$0xff]
  %v1436 = vld [vmem:[%s2 + $0xa8] sm:$0xff]
  %v1437 = vld [vmem:[%s2 + $0xb0] sm:$0xff]
  %v1438 = vld [vmem:[%s2 + $0xb8] sm:$0xff]
  %v1439 = vld [vmem:[%s2 + $0xc0] sm:$0xff]
  %v1440 = vld [vmem:[%s2 + $0xc8] sm:$0xff]
  %v1441 = vld [vmem:[%s2 + $0xd0] sm:$0xff]
  %v1442 = vld [vmem:[%s2 + $0xd8] sm:$0xff]
  %v1443 = vld [vmem:[%s2 + $0xe0] sm:$0xff]
  %v1444 = vld [vmem:[%s2 + $0xe8] sm:$0xff]
  %v1445 = vld [vmem:[%s2 + $0xf0] sm:$0xff]
  %v1446 = vld [vmem:[%s2 + $0xf8] sm:$0xff]
  %v1447 = vld [vmem:[%s2 + $0x100] sm:$0xff]
  %v1448 = vld [vmem:[%s2 + $0x108] sm:$0xff]
  %v1449 = vld [vmem:[%s2 + $0x110] sm:$0xff]
  %v1450 = vld [vmem:[%s2 + $0x118] sm:$0xff]
  %v1451 = vld [vmem:[%s2 + $0x120] sm:$0xff]
  %v1452 = vld [vmem:[%s2 + $0x128] sm:$0xff]
  %v1453 = vld [vmem:[%s2 + $0x130] sm:$0xff]
  %v1454 = vld [vmem:[%s2 + $0x138] sm:$0xff]
  %v1455 = vld [vmem:[%s2 + $0x140] sm:$0xff]
  %v1456 = vld [vmem:[%s2 + $0x148] sm:$0xff]
  %v1457 = vld [vmem:[%s2 + $0x150] sm:$0xff]
  %v1458 = vld [vmem:[%s2 + $0x158] sm:$0xff]
  %v1459 = vld [vmem:[%s2 + $0x160] sm:$0xff]
  %v1460 = vld [vmem:[%s2 + $0x168] sm:$0xff]
  %v1461 = vld [vmem:[%s2 + $0x170] sm:$0xff]
  %v1462 = vld [vmem:[%s2 + $0x178] sm:$0xff]
  %v1463 = vld [vmem:[%s2 + $0x180] sm:$0xff]
  %v1464 = vld [vmem:[%s2 + $0x188] sm:$0xff]
  %v1465 = vld [vmem:[%s2 + $0x190] sm:$0xff]
  %v1466 = vld [vmem:[%s2 + $0x198] sm:$0xff]
  %v1467 = vld [vmem:[%s2 + $0x1a0] sm:$0xff]
  %v1468 = vld [vmem:[%s2 + $0x1a8] sm:$0xff]
  %v1469 = vld [vmem:[%s2 + $0x1b0] sm:$0xff]
  %v1470 = vld [vmem:[%s2 + $0x1b8] sm:$0xff]
  %v1471 = vld [vmem:[%s2 + $0x1c0] sm:$0xff]
  %v1472 = vld [vmem:[%s2 + $0x1c8] sm:$0xff]
  %v1473 = vld [vmem:[%s2 + $0x1d0] sm:$0xff]
  %v1474 = vld [vmem:[%s2 + $0x1d8] sm:$0xff]
  %v1475 = vld [vmem:[%s2 + $0x1e0] sm:$0xff]
  %v1476 = vld [vmem:[%s2 + $0x1e8] sm:$0xff]
  %v1477 = vld [vmem:[%s2 + $0x1f0] sm:$0xff]
  %v1478 = vld [vmem:[%s2 + $0x1f8] sm:$0xff]
  %v1479 = vrot.slane %v1404, 2
  %1481 = vmatpush.msra.mxu0 %v1475
  %1482 = vmatpush.msra.mxu0 %v1471
  %1483 = vmatpush.msra.mxu0 %v1467
  %1484 = vmatpush.msra.mxu0 %v1463
  %1485 = vmatpush.msra.mxu0 %v1459
  %1486 = vmatpush.msra.mxu0 %v1455
  %1487 = vmatpush.msra.mxu0 %v1451
  %1488 = vmatpush.msra.mxu0 %v1447
  %1489 = vmatpush.msra.mxu0 %v1443
  %1490 = vmatpush.msra.mxu0 %v1439
  %1491 = vmatpush.msra.mxu0 %v1435
  %1492 = vmatpush.msra.mxu0 %v1431
  %1493 = vmatpush.msra.mxu0 %v1427
  %1494 = vmatpush.msra.mxu0 %v1423
  %1495 = vmatpush.msra.mxu0 %v1419
  %1496 = vmatpush.msra.mxu0 %v1415
  %1497 = vmatmul.f32.gmra.mxu0 %v1479
  %v1498 = vpop.f32.mrf.mxu0
  %v1499 = vadd.f32 0.0, %v1498
  %1500 = vdwg.mxu0
  %1501 = vmatpush.msra.mxu0 %v1476
  %1502 = vmatpush.msra.mxu0 %v1472
  %1503 = vmatpush.msra.mxu0 %v1468
  %1504 = vmatpush.msra.mxu0 %v1464
  %1505 = vmatpush.msra.mxu0 %v1460
  %1506 = vmatpush.msra.mxu0 %v1456
  %1507 = vmatpush.msra.mxu0 %v1452
  %1508 = vmatpush.msra.mxu0 %v1448
  %1509 = vmatpush.msra.mxu0 %v1444
  %1510 = vmatpush.msra.mxu0 %v1440
  %1511 = vmatpush.msra.mxu0 %v1436
  %1512 = vmatpush.msra.mxu0 %v1432
  %1513 = vmatpush.msra.mxu0 %v1428
  %1514 = vmatpush.msra.mxu0 %v1424
  %1515 = vmatpush.msra.mxu0 %v1420
  %1516 = vmatpush.msra.mxu0 %v1416
  %1517 = vmatmul.f32.gmra.mxu0 %v1479
  %v1518 = vpop.f32.mrf.mxu0
  %v1519 = vadd.f32 0.0, %v1518
  %1520 = vdwg.mxu0
  %1521 = vmatpush.msra.mxu0 %v1477
  %1522 = vmatpush.msra.mxu0 %v1473
  %1523 = vmatpush.msra.mxu0 %v1469
  %1524 = vmatpush.msra.mxu0 %v1465
  %1525 = vmatpush.msra.mxu0 %v1461
  %1526 = vmatpush.msra.mxu0 %v1457
  %1527 = vmatpush.msra.mxu0 %v1453
  %1528 = vmatpush.msra.mxu0 %v1449
  %1529 = vmatpush.msra.mxu0 %v1445
  %1530 = vmatpush.msra.mxu0 %v1441
  %1531 = vmatpush.msra.mxu0 %v1437
  %1532 = vmatpush.msra.mxu0 %v1433
  %1533 = vmatpush.msra.mxu0 %v1429
  %1534 = vmatpush.msra.mxu0 %v1425
  %1535 = vmatpush.msra.mxu0 %v1421
  %1536 = vmatpush.msra.mxu0 %v1417
  %1537 = vmatmul.f32.gmra.mxu0 %v1479
  %v1538 = vpop.f32.mrf.mxu0
  %v1539 = vadd.f32 0.0, %v1538
  %1540 = vdwg.mxu0
  %1541 = vmatpush.msra.mxu0 %v1478
  %1542 = vmatpush.msra.mxu0 %v1474
  %1543 = vmatpush.msra.mxu0 %v1470
  %1544 = vmatpush.msra.mxu0 %v1466
  %1545 = vmatpush.msra.mxu0 %v1462
  %1546 = vmatpush.msra.mxu0 %v1458
  %1547 = vmatpush.msra.mxu0 %v1454
  %1548 = vmatpush.msra.mxu0 %v1450
  %1549 = vmatpush.msra.mxu0 %v1446
  %1550 = vmatpush.msra.mxu0 %v1442
  %1551 = vmatpush.msra.mxu0 %v1438
  %1552 = vmatpush.msra.mxu0 %v1434
  %1553 = vmatpush.msra.mxu0 %v1430
  %1554 = vmatpush.msra.mxu0 %v1426
  %1555 = vmatpush.msra.mxu0 %v1422
  %1556 = vmatpush.msra.mxu0 %v1418
  %1557 = vmatmul.f32.gmra.mxu0 %v1479
  %v1558 = vpop.f32.mrf.mxu0
  %v1559 = vadd.f32 0.0, %v1558
  %1560 = vdwg.mxu0
  %v1565 = vrot.slane %v1499, 4
  %v1566 = vrot.slane %v1519, 4
  %v1567 = vrot.slane %v1539, 4
  %v1568 = vrot.slane %v1559, 4
  %v1573 = vadd.f32 %v1411, %v1565
  %v1574 = vadd.f32 %v1412, %v1566
  %v1575 = vadd.f32 %v1413, %v1567
  %v1576 = vadd.f32 %v1414, %v1568
  %v1577 = vxor.u32 %v1573, 2147483648
  %v1578 = vmul.f32 %v1577, 1.442695
  %v1579 = vpow.pop %v1578
  %v1580 = vadd.f32 %v1579, 1.0
  %v1581 = vrcp.pop %v1580
  %v1582 = vmul.f32 %v1580, %v1581
  %v1583 = vsub.f32 1.0, %v1582
  %v1584 = vmul.f32 %v1581, %v1583
  %v1585 = vadd.f32 %v1581, %v1584
  %vm1586 = vweird.f32 %v1580
  %vm1587 = vweird.f32 %v1581
  %vm1588 = vmor %vm1586, %vm1587
  %v1589 = vsel %vm1588, %v1581, %v1585
  %v1590 = vand.u32 2147483647, %v1580
  %vm1591 = vcmp.eq.f32.partialorder %v1590, 8.507059e+37
  %v1592 = vand.u32 %v1580, 2147483648
  %v1593 = vor.u32 1.1754944e-38, %v1592
  %v1594 = vsel %vm1591, %v1593, %v1589
  %v1595 = vmul.f32 1.0, %v1594
  %v1596 = vxor.u32 %v1574, 2147483648
  %v1597 = vmul.f32 %v1596, 1.442695
  %v1598 = vpow.pop %v1597
  %v1599 = vadd.f32 %v1598, 1.0
  %v1600 = vrcp.pop %v1599
  %v1601 = vmul.f32 %v1599, %v1600
  %v1602 = vsub.f32 1.0, %v1601
  %v1603 = vmul.f32 %v1600, %v1602
  %v1604 = vadd.f32 %v1600, %v1603
  %vm1605 = vweird.f32 %v1599
  %vm1606 = vweird.f32 %v1600
  %vm1607 = vmor %vm1605, %vm1606
  %v1608 = vsel %vm1607, %v1600, %v1604
  %v1609 = vand.u32 2147483647, %v1599
  %vm1610 = vcmp.eq.f32.partialorder %v1609, 8.507059e+37
  %v1611 = vand.u32 %v1599, 2147483648
  %v1612 = vor.u32 1.1754944e-38, %v1611
  %v1613 = vsel %vm1610, %v1612, %v1608
  %v1614 = vmul.f32 1.0, %v1613
  %v1615 = vtanh.pop %v1575
  %v1616 = vxor.u32 %v1576, 2147483648
  %v1617 = vmul.f32 %v1616, 1.442695
  %v1618 = vpow.pop %v1617
  %v1619 = vadd.f32 %v1618, 1.0
  %v1620 = vrcp.pop %v1619
  %v1621 = vmul.f32 %v1619, %v1620
  %v1622 = vsub.f32 1.0, %v1621
  %v1623 = vmul.f32 %v1620, %v1622
  %v1624 = vadd.f32 %v1620, %v1623
  %vm1625 = vweird.f32 %v1619
  %vm1626 = vweird.f32 %v1620
  %vm1627 = vmor %vm1625, %vm1626
  %v1628 = vsel %vm1627, %v1620, %v1624
  %v1629 = vand.u32 2147483647, %v1619
  %vm1630 = vcmp.eq.f32.partialorder %v1629, 8.507059e+37
  %v1631 = vand.u32 %v1619, 2147483648
  %v1632 = vor.u32 1.1754944e-38, %v1631
  %v1633 = vsel %vm1630, %v1632, %v1628
  %v1634 = vmul.f32 1.0, %v1633
  %v1636 = vrot.slane %v1402, 6
  %v1638 = vmul.f32 %v1614, %v1636
  %v1639 = vmul.f32 %v1595, %v1615
  %v1640 = vadd.f32 %v1638, %v1639
  %v1641 = vtanh.pop %v1640
  %v1642 = vmul.f32 %v1634, %v1641
  %1644 = vst.sshfl [vmem:[#allocation1] sm:$0xff pattern:$0x73625140] %v1642
  %s1645 = scalar_lea.vmem [#allocation1], 2
  %v1646 = vld [vmem:[%s1645] ss:$4 sm:$0xff]
  %1648 = vst [vmem:[#allocation3 + $0xc] sm:$0x3] %v1646
  %v1649 = vld [vmem:[#allocation2 + $0x20] sm:$0xc0]
  %v1650 = vld [vmem:[#allocation2 + $0x28] sm:$0xc0]
  %v1651 = vld [vmem:[#allocation2 + $0x30] sm:$0xc0]
  %v1652 = vld [vmem:[#allocation2 + $0x38] sm:$0xc0]
  %v1653 = vld [vmem:[%s2] sm:$0xff]
  %v1654 = vld [vmem:[%s2 + $0x8] sm:$0xff]
  %v1655 = vld [vmem:[%s2 + $0x10] sm:$0xff]
  %v1656 = vld [vmem:[%s2 + $0x18] sm:$0xff]
  %v1657 = vld [vmem:[%s2 + $0x20] sm:$0xff]
  %v1658 = vld [vmem:[%s2 + $0x28] sm:$0xff]
  %v1659 = vld [vmem:[%s2 + $0x30] sm:$0xff]
  %v1660 = vld [vmem:[%s2 + $0x38] sm:$0xff]
  %v1661 = vld [vmem:[%s2 + $0x40] sm:$0xff]
  %v1662 = vld [vmem:[%s2 + $0x48] sm:$0xff]
  %v1663 = vld [vmem:[%s2 + $0x50] sm:$0xff]
  %v1664 = vld [vmem:[%s2 + $0x58] sm:$0xff]
  %v1665 = vld [vmem:[%s2 + $0x60] sm:$0xff]
  %v1666 = vld [vmem:[%s2 + $0x68] sm:$0xff]
  %v1667 = vld [vmem:[%s2 + $0x70] sm:$0xff]
  %v1668 = vld [vmem:[%s2 + $0x78] sm:$0xff]
  %v1669 = vld [vmem:[%s2 + $0x80] sm:$0xff]
  %v1670 = vld [vmem:[%s2 + $0x88] sm:$0xff]
  %v1671 = vld [vmem:[%s2 + $0x90] sm:$0xff]
  %v1672 = vld [vmem:[%s2 + $0x98] sm:$0xff]
  %v1673 = vld [vmem:[%s2 + $0xa0] sm:$0xff]
  %v1674 = vld [vmem:[%s2 + $0xa8] sm:$0xff]
  %v1675 = vld [vmem:[%s2 + $0xb0] sm:$0xff]
  %v1676 = vld [vmem:[%s2 + $0xb8] sm:$0xff]
  %v1677 = vld [vmem:[%s2 + $0xc0] sm:$0xff]
  %v1678 = vld [vmem:[%s2 + $0xc8] sm:$0xff]
  %v1679 = vld [vmem:[%s2 + $0xd0] sm:$0xff]
  %v1680 = vld [vmem:[%s2 + $0xd8] sm:$0xff]
  %v1681 = vld [vmem:[%s2 + $0xe0] sm:$0xff]
  %v1682 = vld [vmem:[%s2 + $0xe8] sm:$0xff]
  %v1683 = vld [vmem:[%s2 + $0xf0] sm:$0xff]
  %v1684 = vld [vmem:[%s2 + $0xf8] sm:$0xff]
  %v1685 = vld [vmem:[%s2 + $0x100] sm:$0xff]
  %v1686 = vld [vmem:[%s2 + $0x108] sm:$0xff]
  %v1687 = vld [vmem:[%s2 + $0x110] sm:$0xff]
  %v1688 = vld [vmem:[%s2 + $0x118] sm:$0xff]
  %v1689 = vld [vmem:[%s2 + $0x120] sm:$0xff]
  %v1690 = vld [vmem:[%s2 + $0x128] sm:$0xff]
  %v1691 = vld [vmem:[%s2 + $0x130] sm:$0xff]
  %v1692 = vld [vmem:[%s2 + $0x138] sm:$0xff]
  %v1693 = vld [vmem:[%s2 + $0x140] sm:$0xff]
  %v1694 = vld [vmem:[%s2 + $0x148] sm:$0xff]
  %v1695 = vld [vmem:[%s2 + $0x150] sm:$0xff]
  %v1696 = vld [vmem:[%s2 + $0x158] sm:$0xff]
  %v1697 = vld [vmem:[%s2 + $0x160] sm:$0xff]
  %v1698 = vld [vmem:[%s2 + $0x168] sm:$0xff]
  %v1699 = vld [vmem:[%s2 + $0x170] sm:$0xff]
  %v1700 = vld [vmem:[%s2 + $0x178] sm:$0xff]
  %v1701 = vld [vmem:[%s2 + $0x180] sm:$0xff]
  %v1702 = vld [vmem:[%s2 + $0x188] sm:$0xff]
  %v1703 = vld [vmem:[%s2 + $0x190] sm:$0xff]
  %v1704 = vld [vmem:[%s2 + $0x198] sm:$0xff]
  %v1705 = vld [vmem:[%s2 + $0x1a0] sm:$0xff]
  %v1706 = vld [vmem:[%s2 + $0x1a8] sm:$0xff]
  %v1707 = vld [vmem:[%s2 + $0x1b0] sm:$0xff]
  %v1708 = vld [vmem:[%s2 + $0x1b8] sm:$0xff]
  %v1709 = vld [vmem:[%s2 + $0x1c0] sm:$0xff]
  %v1710 = vld [vmem:[%s2 + $0x1c8] sm:$0xff]
  %v1711 = vld [vmem:[%s2 + $0x1d0] sm:$0xff]
  %v1712 = vld [vmem:[%s2 + $0x1d8] sm:$0xff]
  %v1713 = vld [vmem:[%s2 + $0x1e0] sm:$0xff]
  %v1714 = vld [vmem:[%s2 + $0x1e8] sm:$0xff]
  %v1715 = vld [vmem:[%s2 + $0x1f0] sm:$0xff]
  %v1716 = vld [vmem:[%s2 + $0x1f8] sm:$0xff]
  %v1717 = vrot.slane %v1642, 4
  %1719 = vmatpush.msra.mxu0 %v1713
  %1720 = vmatpush.msra.mxu0 %v1709
  %1721 = vmatpush.msra.mxu0 %v1705
  %1722 = vmatpush.msra.mxu0 %v1701
  %1723 = vmatpush.msra.mxu0 %v1697
  %1724 = vmatpush.msra.mxu0 %v1693
  %1725 = vmatpush.msra.mxu0 %v1689
  %1726 = vmatpush.msra.mxu0 %v1685
  %1727 = vmatpush.msra.mxu0 %v1681
  %1728 = vmatpush.msra.mxu0 %v1677
  %1729 = vmatpush.msra.mxu0 %v1673
  %1730 = vmatpush.msra.mxu0 %v1669
  %1731 = vmatpush.msra.mxu0 %v1665
  %1732 = vmatpush.msra.mxu0 %v1661
  %1733 = vmatpush.msra.mxu0 %v1657
  %1734 = vmatpush.msra.mxu0 %v1653
  %1735 = vmatmul.f32.gmra.mxu0 %v1717
  %v1736 = vpop.f32.mrf.mxu0
  %v1737 = vadd.f32 0.0, %v1736
  %1738 = vdwg.mxu0
  %1739 = vmatpush.msra.mxu0 %v1714
  %1740 = vmatpush.msra.mxu0 %v1710
  %1741 = vmatpush.msra.mxu0 %v1706
  %1742 = vmatpush.msra.mxu0 %v1702
  %1743 = vmatpush.msra.mxu0 %v1698
  %1744 = vmatpush.msra.mxu0 %v1694
  %1745 = vmatpush.msra.mxu0 %v1690
  %1746 = vmatpush.msra.mxu0 %v1686
  %1747 = vmatpush.msra.mxu0 %v1682
  %1748 = vmatpush.msra.mxu0 %v1678
  %1749 = vmatpush.msra.mxu0 %v1674
  %1750 = vmatpush.msra.mxu0 %v1670
  %1751 = vmatpush.msra.mxu0 %v1666
  %1752 = vmatpush.msra.mxu0 %v1662
  %1753 = vmatpush.msra.mxu0 %v1658
  %1754 = vmatpush.msra.mxu0 %v1654
  %1755 = vmatmul.f32.gmra.mxu0 %v1717
  %v1756 = vpop.f32.mrf.mxu0
  %v1757 = vadd.f32 0.0, %v1756
  %1758 = vdwg.mxu0
  %1759 = vmatpush.msra.mxu0 %v1715
  %1760 = vmatpush.msra.mxu0 %v1711
  %1761 = vmatpush.msra.mxu0 %v1707
  %1762 = vmatpush.msra.mxu0 %v1703
  %1763 = vmatpush.msra.mxu0 %v1699
  %1764 = vmatpush.msra.mxu0 %v1695
  %1765 = vmatpush.msra.mxu0 %v1691
  %1766 = vmatpush.msra.mxu0 %v1687
  %1767 = vmatpush.msra.mxu0 %v1683
  %1768 = vmatpush.msra.mxu0 %v1679
  %1769 = vmatpush.msra.mxu0 %v1675
  %1770 = vmatpush.msra.mxu0 %v1671
  %1771 = vmatpush.msra.mxu0 %v1667
  %1772 = vmatpush.msra.mxu0 %v1663
  %1773 = vmatpush.msra.mxu0 %v1659
  %1774 = vmatpush.msra.mxu0 %v1655
  %1775 = vmatmul.f32.gmra.mxu0 %v1717
  %v1776 = vpop.f32.mrf.mxu0
  %v1777 = vadd.f32 0.0, %v1776
  %1778 = vdwg.mxu0
  %1779 = vmatpush.msra.mxu0 %v1716
  %1780 = vmatpush.msra.mxu0 %v1712
  %1781 = vmatpush.msra.mxu0 %v1708
  %1782 = vmatpush.msra.mxu0 %v1704
  %1783 = vmatpush.msra.mxu0 %v1700
  %1784 = vmatpush.msra.mxu0 %v1696
  %1785 = vmatpush.msra.mxu0 %v1692
  %1786 = vmatpush.msra.mxu0 %v1688
  %1787 = vmatpush.msra.mxu0 %v1684
  %1788 = vmatpush.msra.mxu0 %v1680
  %1789 = vmatpush.msra.mxu0 %v1676
  %1790 = vmatpush.msra.mxu0 %v1672
  %1791 = vmatpush.msra.mxu0 %v1668
  %1792 = vmatpush.msra.mxu0 %v1664
  %1793 = vmatpush.msra.mxu0 %v1660
  %1794 = vmatpush.msra.mxu0 %v1656
  %1795 = vmatmul.f32.gmra.mxu0 %v1717
  %v1796 = vpop.f32.mrf.mxu0
  %v1797 = vadd.f32 0.0, %v1796
  %1798 = vdwg.mxu0
  %v1803 = vrot.slane %v1737, 2
  %v1804 = vrot.slane %v1757, 2
  %v1805 = vrot.slane %v1777, 2
  %v1806 = vrot.slane %v1797, 2
  %v1811 = vadd.f32 %v1649, %v1803
  %v1812 = vadd.f32 %v1650, %v1804
  %v1813 = vadd.f32 %v1651, %v1805
  %v1814 = vadd.f32 %v1652, %v1806
  %v1815 = vxor.u32 %v1811, 2147483648
  %v1816 = vmul.f32 %v1815, 1.442695
  %v1817 = vpow.pop %v1816
  %v1818 = vadd.f32 %v1817, 1.0
  %v1819 = vrcp.pop %v1818
  %v1820 = vmul.f32 %v1818, %v1819
  %v1821 = vsub.f32 1.0, %v1820
  %v1822 = vmul.f32 %v1819, %v1821
  %v1823 = vadd.f32 %v1819, %v1822
  %vm1824 = vweird.f32 %v1818
  %vm1825 = vweird.f32 %v1819
  %vm1826 = vmor %vm1824, %vm1825
  %v1827 = vsel %vm1826, %v1819, %v1823
  %v1828 = vand.u32 2147483647, %v1818
  %vm1829 = vcmp.eq.f32.partialorder %v1828, 8.507059e+37
  %v1830 = vand.u32 %v1818, 2147483648
  %v1831 = vor.u32 1.1754944e-38, %v1830
  %v1832 = vsel %vm1829, %v1831, %v1827
  %v1833 = vmul.f32 1.0, %v1832
  %v1834 = vxor.u32 %v1812, 2147483648
  %v1835 = vmul.f32 %v1834, 1.442695
  %v1836 = vpow.pop %v1835
  %v1837 = vadd.f32 %v1836, 1.0
  %v1838 = vrcp.pop %v1837
  %v1839 = vmul.f32 %v1837, %v1838
  %v1840 = vsub.f32 1.0, %v1839
  %v1841 = vmul.f32 %v1838, %v1840
  %v1842 = vadd.f32 %v1838, %v1841
  %vm1843 = vweird.f32 %v1837
  %vm1844 = vweird.f32 %v1838
  %vm1845 = vmor %vm1843, %vm1844
  %v1846 = vsel %vm1845, %v1838, %v1842
  %v1847 = vand.u32 2147483647, %v1837
  %vm1848 = vcmp.eq.f32.partialorder %v1847, 8.507059e+37
  %v1849 = vand.u32 %v1837, 2147483648
  %v1850 = vor.u32 1.1754944e-38, %v1849
  %v1851 = vsel %vm1848, %v1850, %v1846
  %v1852 = vmul.f32 1.0, %v1851
  %v1853 = vtanh.pop %v1813
  %v1854 = vxor.u32 %v1814, 2147483648
  %v1855 = vmul.f32 %v1854, 1.442695
  %v1856 = vpow.pop %v1855
  %v1857 = vadd.f32 %v1856, 1.0
  %v1858 = vrcp.pop %v1857
  %v1859 = vmul.f32 %v1857, %v1858
  %v1860 = vsub.f32 1.0, %v1859
  %v1861 = vmul.f32 %v1858, %v1860
  %v1862 = vadd.f32 %v1858, %v1861
  %vm1863 = vweird.f32 %v1857
  %vm1864 = vweird.f32 %v1858
  %vm1865 = vmor %vm1863, %vm1864
  %v1866 = vsel %vm1865, %v1858, %v1862
  %v1867 = vand.u32 2147483647, %v1857
  %vm1868 = vcmp.eq.f32.partialorder %v1867, 8.507059e+37
  %v1869 = vand.u32 %v1857, 2147483648
  %v1870 = vor.u32 1.1754944e-38, %v1869
  %v1871 = vsel %vm1868, %v1870, %v1866
  %v1872 = vmul.f32 1.0, %v1871
  %v1874 = vrot.slane %v1640, 6
  %v1876 = vmul.f32 %v1852, %v1874
  %v1877 = vmul.f32 %v1833, %v1853
  %v1878 = vadd.f32 %v1876, %v1877
  %v1879 = vtanh.pop %v1878
  %v1880 = vmul.f32 %v1872, %v1879
  %1882 = vst.sshfl [vmem:[#allocation1] sm:$0xff pattern:$0x73625140] %v1880
  %s1883 = scalar_lea.vmem [#allocation1], 3
  %v1884 = vld [vmem:[%s1883] ss:$4 sm:$0xff]
  %1886 = vst [vmem:[#allocation3 + $0xe] sm:$0x3] %v1884
  %v1887 = vld [vmem:[#allocation3] sm:$0xff]
  %v1888 = vld [vmem:[#allocation3 + $0x8] sm:$0xff]
  %v1889 = vld [vmem:[%s4] sm:$0xff]
  %v1890 = vld [vmem:[%s4 + $0x8] sm:$0xff]
  %v1891 = vld [vmem:[%s4 + $0x10] sm:$0xff]
  %v1892 = vld [vmem:[%s4 + $0x18] sm:$0xff]
  %v1893 = vld [vmem:[%s4 + $0x20] sm:$0xff]
  %v1894 = vld [vmem:[%s4 + $0x28] sm:$0xff]
  %v1895 = vld [vmem:[%s4 + $0x30] sm:$0xff]
  %v1896 = vld [vmem:[%s4 + $0x38] sm:$0xff]
  %v1897 = vld [vmem:[%s4 + $0x40] sm:$0xff]
  %v1898 = vld [vmem:[%s4 + $0x48] sm:$0xff]
  %v1899 = vld [vmem:[%s4 + $0x50] sm:$0xff]
  %v1900 = vld [vmem:[%s4 + $0x58] sm:$0xff]
  %v1901 = vld [vmem:[%s4 + $0x60] sm:$0xff]
  %v1902 = vld [vmem:[%s4 + $0x68] sm:$0xff]
  %v1903 = vld [vmem:[%s4 + $0x70] sm:$0xff]
  %v1904 = vld [vmem:[%s4 + $0x78] sm:$0xff]
  %v1905 = vld [vmem:[%s4 + $0x80] sm:$0xff]
  %v1906 = vld [vmem:[%s4 + $0x88] sm:$0xff]
  %v1907 = vld [vmem:[%s4 + $0x90] sm:$0xff]
  %v1908 = vld [vmem:[%s4 + $0x98] sm:$0xff]
  %v1909 = vld [vmem:[%s4 + $0xa0] sm:$0xff]
  %v1910 = vld [vmem:[%s4 + $0xa8] sm:$0xff]
  %v1911 = vld [vmem:[%s4 + $0xb0] sm:$0xff]
  %v1912 = vld [vmem:[%s4 + $0xb8] sm:$0xff]
  %v1913 = vld [vmem:[%s4 + $0xc0] sm:$0xff]
  %v1914 = vld [vmem:[%s4 + $0xc8] sm:$0xff]
  %v1915 = vld [vmem:[%s4 + $0xd0] sm:$0xff]
  %v1916 = vld [vmem:[%s4 + $0xd8] sm:$0xff]
  %v1917 = vld [vmem:[%s4 + $0xe0] sm:$0xff]
  %v1918 = vld [vmem:[%s4 + $0xe8] sm:$0xff]
  %v1919 = vld [vmem:[%s4 + $0xf0] sm:$0xff]
  %v1920 = vld [vmem:[%s4 + $0xf8] sm:$0xff]
  %v1921 = vld [vmem:[%s4 + $0x100] sm:$0xff]
  %v1922 = vld [vmem:[%s4 + $0x108] sm:$0xff]
  %v1923 = vld [vmem:[%s4 + $0x110] sm:$0xff]
  %v1924 = vld [vmem:[%s4 + $0x118] sm:$0xff]
  %v1925 = vld [vmem:[%s4 + $0x120] sm:$0xff]
  %v1926 = vld [vmem:[%s4 + $0x128] sm:$0xff]
  %v1927 = vld [vmem:[%s4 + $0x130] sm:$0xff]
  %v1928 = vld [vmem:[%s4 + $0x138] sm:$0xff]
  %v1929 = vld [vmem:[%s4 + $0x140] sm:$0xff]
  %v1930 = vld [vmem:[%s4 + $0x148] sm:$0xff]
  %v1931 = vld [vmem:[%s4 + $0x150] sm:$0xff]
  %v1932 = vld [vmem:[%s4 + $0x158] sm:$0xff]
  %v1933 = vld [vmem:[%s4 + $0x160] sm:$0xff]
  %v1934 = vld [vmem:[%s4 + $0x168] sm:$0xff]
  %v1935 = vld [vmem:[%s4 + $0x170] sm:$0xff]
  %v1936 = vld [vmem:[%s4 + $0x178] sm:$0xff]
  %v1937 = vld [vmem:[%s4 + $0x180] sm:$0xff]
  %v1938 = vld [vmem:[%s4 + $0x188] sm:$0xff]
  %v1939 = vld [vmem:[%s4 + $0x190] sm:$0xff]
  %v1940 = vld [vmem:[%s4 + $0x198] sm:$0xff]
  %v1941 = vld [vmem:[%s4 + $0x1a0] sm:$0xff]
  %v1942 = vld [vmem:[%s4 + $0x1a8] sm:$0xff]
  %v1943 = vld [vmem:[%s4 + $0x1b0] sm:$0xff]
  %v1944 = vld [vmem:[%s4 + $0x1b8] sm:$0xff]
  %v1945 = vld [vmem:[%s4 + $0x1c0] sm:$0xff]
  %v1946 = vld [vmem:[%s4 + $0x1c8] sm:$0xff]
  %v1947 = vld [vmem:[%s4 + $0x1d0] sm:$0xff]
  %v1948 = vld [vmem:[%s4 + $0x1d8] sm:$0xff]
  %v1949 = vld [vmem:[%s4 + $0x1e0] sm:$0xff]
  %v1950 = vld [vmem:[%s4 + $0x1e8] sm:$0xff]
  %v1951 = vld [vmem:[%s4 + $0x1f0] sm:$0xff]
  %v1952 = vld [vmem:[%s4 + $0x1f8] sm:$0xff]
  %v1953 = vld [vmem:[%s4 + $0x200] sm:$0xff]
  %v1954 = vld [vmem:[%s4 + $0x208] sm:$0xff]
  %v1955 = vld [vmem:[%s4 + $0x210] sm:$0xff]
  %v1956 = vld [vmem:[%s4 + $0x218] sm:$0xff]
  %v1957 = vld [vmem:[%s4 + $0x220] sm:$0xff]
  %v1958 = vld [vmem:[%s4 + $0x228] sm:$0xff]
  %v1959 = vld [vmem:[%s4 + $0x230] sm:$0xff]
  %v1960 = vld [vmem:[%s4 + $0x238] sm:$0xff]
  %v1961 = vld [vmem:[%s4 + $0x240] sm:$0xff]
  %v1962 = vld [vmem:[%s4 + $0x248] sm:$0xff]
  %v1963 = vld [vmem:[%s4 + $0x250] sm:$0xff]
  %v1964 = vld [vmem:[%s4 + $0x258] sm:$0xff]
  %v1965 = vld [vmem:[%s4 + $0x260] sm:$0xff]
  %v1966 = vld [vmem:[%s4 + $0x268] sm:$0xff]
  %v1967 = vld [vmem:[%s4 + $0x270] sm:$0xff]
  %v1968 = vld [vmem:[%s4 + $0x278] sm:$0xff]
  %v1969 = vld [vmem:[%s4 + $0x280] sm:$0xff]
  %v1970 = vld [vmem:[%s4 + $0x288] sm:$0xff]
  %v1971 = vld [vmem:[%s4 + $0x290] sm:$0xff]
  %v1972 = vld [vmem:[%s4 + $0x298] sm:$0xff]
  %v1973 = vld [vmem:[%s4 + $0x2a0] sm:$0xff]
  %v1974 = vld [vmem:[%s4 + $0x2a8] sm:$0xff]
  %v1975 = vld [vmem:[%s4 + $0x2b0] sm:$0xff]
  %v1976 = vld [vmem:[%s4 + $0x2b8] sm:$0xff]
  %v1977 = vld [vmem:[%s4 + $0x2c0] sm:$0xff]
  %v1978 = vld [vmem:[%s4 + $0x2c8] sm:$0xff]
  %v1979 = vld [vmem:[%s4 + $0x2d0] sm:$0xff]
  %v1980 = vld [vmem:[%s4 + $0x2d8] sm:$0xff]
  %v1981 = vld [vmem:[%s4 + $0x2e0] sm:$0xff]
  %v1982 = vld [vmem:[%s4 + $0x2e8] sm:$0xff]
  %v1983 = vld [vmem:[%s4 + $0x2f0] sm:$0xff]
  %v1984 = vld [vmem:[%s4 + $0x2f8] sm:$0xff]
  %v1985 = vld [vmem:[%s4 + $0x300] sm:$0xff]
  %v1986 = vld [vmem:[%s4 + $0x308] sm:$0xff]
  %v1987 = vld [vmem:[%s4 + $0x310] sm:$0xff]
  %v1988 = vld [vmem:[%s4 + $0x318] sm:$0xff]
  %v1989 = vld [vmem:[%s4 + $0x320] sm:$0xff]
  %v1990 = vld [vmem:[%s4 + $0x328] sm:$0xff]
  %v1991 = vld [vmem:[%s4 + $0x330] sm:$0xff]
  %v1992 = vld [vmem:[%s4 + $0x338] sm:$0xff]
  %v1993 = vld [vmem:[%s4 + $0x340] sm:$0xff]
  %v1994 = vld [vmem:[%s4 + $0x348] sm:$0xff]
  %v1995 = vld [vmem:[%s4 + $0x350] sm:$0xff]
  %v1996 = vld [vmem:[%s4 + $0x358] sm:$0xff]
  %v1997 = vld [vmem:[%s4 + $0x360] sm:$0xff]
  %v1998 = vld [vmem:[%s4 + $0x368] sm:$0xff]
  %v1999 = vld [vmem:[%s4 + $0x370] sm:$0xff]
  %v2000 = vld [vmem:[%s4 + $0x378] sm:$0xff]
  %v2001 = vld [vmem:[%s4 + $0x380] sm:$0xff]
  %v2002 = vld [vmem:[%s4 + $0x388] sm:$0xff]
  %v2003 = vld [vmem:[%s4 + $0x390] sm:$0xff]
  %v2004 = vld [vmem:[%s4 + $0x398] sm:$0xff]
  %v2005 = vld [vmem:[%s4 + $0x3a0] sm:$0xff]
  %v2006 = vld [vmem:[%s4 + $0x3a8] sm:$0xff]
  %v2007 = vld [vmem:[%s4 + $0x3b0] sm:$0xff]
  %v2008 = vld [vmem:[%s4 + $0x3b8] sm:$0xff]
  %v2009 = vld [vmem:[%s4 + $0x3c0] sm:$0xff]
  %v2010 = vld [vmem:[%s4 + $0x3c8] sm:$0xff]
  %v2011 = vld [vmem:[%s4 + $0x3d0] sm:$0xff]
  %v2012 = vld [vmem:[%s4 + $0x3d8] sm:$0xff]
  %v2013 = vld [vmem:[%s4 + $0x3e0] sm:$0xff]
  %v2014 = vld [vmem:[%s4 + $0x3e8] sm:$0xff]
  %v2015 = vld [vmem:[%s4 + $0x3f0] sm:$0xff]
  %v2016 = vld [vmem:[%s4 + $0x3f8] sm:$0xff]
  %v2017 = vld [vmem:[%s5] sm:$0x3]
  %2020 = vst [vmem:[#allocation1] ss:$4 sm:$0xff] %v1887
  %s2021 = scalar_lea.vmem [#allocation1], 32
  %2022 = vst [vmem:[%s2021] ss:$4 sm:$0xff] %v1888
  %v2023 = vld.sshfl [vmem:[#allocation1] sm:$0xff pattern:$0x73625140]
  %v2024 = vld.sshfl [vmem:[#allocation1 + $0x8] sm:$0xff pattern:$0x73625140]
  %v2025 = vld.sshfl [vmem:[#allocation1 + $0x10] sm:$0xff pattern:$0x73625140]
  %v2026 = vld.sshfl [vmem:[#allocation1 + $0x18] sm:$0xff pattern:$0x73625140]
  %v2027 = vld.sshfl [vmem:[#allocation1 + $0x20] sm:$0xff pattern:$0x73625140]
  %v2028 = vld.sshfl [vmem:[#allocation1 + $0x28] sm:$0xff pattern:$0x73625140]
  %v2029 = vld.sshfl [vmem:[#allocation1 + $0x30] sm:$0xff pattern:$0x73625140]
  %v2030 = vld.sshfl [vmem:[#allocation1 + $0x38] sm:$0xff pattern:$0x73625140]
  %2039 = vmatpush.msra.mxu0 %v1904
  %2040 = vmatpush.msra.mxu0 %v1903
  %2041 = vmatpush.msra.mxu0 %v1902
  %2042 = vmatpush.msra.mxu0 %v1901
  %2043 = vmatpush.msra.mxu0 %v1900
  %2044 = vmatpush.msra.mxu0 %v1899
  %2045 = vmatpush.msra.mxu0 %v1898
  %2046 = vmatpush.msra.mxu0 %v1897
  %2047 = vmatpush.msra.mxu0 %v1896
  %2048 = vmatpush.msra.mxu0 %v1895
  %2049 = vmatpush.msra.mxu0 %v1894
  %2050 = vmatpush.msra.mxu0 %v1893
  %2051 = vmatpush.msra.mxu0 %v1892
  %2052 = vmatpush.msra.mxu0 %v1891
  %2053 = vmatpush.msra.mxu0 %v1890
  %2054 = vmatpush.msra.mxu0 %v1889
  %2055 = vmatmul.f32.gmra.mxu0 %v2023
  %v2056 = vpop.f32.mrf.mxu0
  %v2057 = vadd.f32 %v2017, %v2056
  %2058 = vdwg.mxu0
  %2059 = vmatpush.msra.mxu0 %v1920
  %2060 = vmatpush.msra.mxu0 %v1919
  %2061 = vmatpush.msra.mxu0 %v1918
  %2062 = vmatpush.msra.mxu0 %v1917
  %2063 = vmatpush.msra.mxu0 %v1916
  %2064 = vmatpush.msra.mxu0 %v1915
  %2065 = vmatpush.msra.mxu0 %v1914
  %2066 = vmatpush.msra.mxu0 %v1913
  %2067 = vmatpush.msra.mxu0 %v1912
  %2068 = vmatpush.msra.mxu0 %v1911
  %2069 = vmatpush.msra.mxu0 %v1910
  %2070 = vmatpush.msra.mxu0 %v1909
  %2071 = vmatpush.msra.mxu0 %v1908
  %2072 = vmatpush.msra.mxu0 %v1907
  %2073 = vmatpush.msra.mxu0 %v1906
  %2074 = vmatpush.msra.mxu0 %v1905
  %2075 = vmatmul.f32.gmra.mxu0 %v2024
  %v2076 = vpop.f32.mrf.mxu0
  %v2077 = vadd.f32 %v2057, %v2076
  %2078 = vdwg.mxu0
  %2079 = vmatpush.msra.mxu0 %v1936
  %2080 = vmatpush.msra.mxu0 %v1935
  %2081 = vmatpush.msra.mxu0 %v1934
  %2082 = vmatpush.msra.mxu0 %v1933
  %2083 = vmatpush.msra.mxu0 %v1932
  %2084 = vmatpush.msra.mxu0 %v1931
  %2085 = vmatpush.msra.mxu0 %v1930
  %2086 = vmatpush.msra.mxu0 %v1929
  %2087 = vmatpush.msra.mxu0 %v1928
  %2088 = vmatpush.msra.mxu0 %v1927
  %2089 = vmatpush.msra.mxu0 %v1926
  %2090 = vmatpush.msra.mxu0 %v1925
  %2091 = vmatpush.msra.mxu0 %v1924
  %2092 = vmatpush.msra.mxu0 %v1923
  %2093 = vmatpush.msra.mxu0 %v1922
  %2094 = vmatpush.msra.mxu0 %v1921
  %2095 = vmatmul.f32.gmra.mxu0 %v2025
  %v2096 = vpop.f32.mrf.mxu0
  %v2097 = vadd.f32 %v2077, %v2096
  %2098 = vdwg.mxu0
  %2099 = vmatpush.msra.mxu0 %v1952
  %2100 = vmatpush.msra.mxu0 %v1951
  %2101 = vmatpush.msra.mxu0 %v1950
  %2102 = vmatpush.msra.mxu0 %v1949
  %2103 = vmatpush.msra.mxu0 %v1948
  %2104 = vmatpush.msra.mxu0 %v1947
  %2105 = vmatpush.msra.mxu0 %v1946
  %2106 = vmatpush.msra.mxu0 %v1945
  %2107 = vmatpush.msra.mxu0 %v1944
  %2108 = vmatpush.msra.mxu0 %v1943
  %2109 = vmatpush.msra.mxu0 %v1942
  %2110 = vmatpush.msra.mxu0 %v1941
  %2111 = vmatpush.msra.mxu0 %v1940
  %2112 = vmatpush.msra.mxu0 %v1939
  %2113 = vmatpush.msra.mxu0 %v1938
  %2114 = vmatpush.msra.mxu0 %v1937
  %2115 = vmatmul.f32.gmra.mxu0 %v2026
  %v2116 = vpop.f32.mrf.mxu0
  %v2117 = vadd.f32 %v2097, %v2116
  %2118 = vdwg.mxu0
  %2119 = vmatpush.msra.mxu0 %v1968
  %2120 = vmatpush.msra.mxu0 %v1967
  %2121 = vmatpush.msra.mxu0 %v1966
  %2122 = vmatpush.msra.mxu0 %v1965
  %2123 = vmatpush.msra.mxu0 %v1964
  %2124 = vmatpush.msra.mxu0 %v1963
  %2125 = vmatpush.msra.mxu0 %v1962
  %2126 = vmatpush.msra.mxu0 %v1961
  %2127 = vmatpush.msra.mxu0 %v1960
  %2128 = vmatpush.msra.mxu0 %v1959
  %2129 = vmatpush.msra.mxu0 %v1958
  %2130 = vmatpush.msra.mxu0 %v1957
  %2131 = vmatpush.msra.mxu0 %v1956
  %2132 = vmatpush.msra.mxu0 %v1955
  %2133 = vmatpush.msra.mxu0 %v1954
  %2134 = vmatpush.msra.mxu0 %v1953
  %2135 = vmatmul.f32.gmra.mxu0 %v2027
  %v2136 = vpop.f32.mrf.mxu0
  %v2137 = vadd.f32 %v2117, %v2136
  %2138 = vdwg.mxu0
  %2139 = vmatpush.msra.mxu0 %v1984
  %2140 = vmatpush.msra.mxu0 %v1983
  %2141 = vmatpush.msra.mxu0 %v1982
  %2142 = vmatpush.msra.mxu0 %v1981
  %2143 = vmatpush.msra.mxu0 %v1980
  %2144 = vmatpush.msra.mxu0 %v1979
  %2145 = vmatpush.msra.mxu0 %v1978
  %2146 = vmatpush.msra.mxu0 %v1977
  %2147 = vmatpush.msra.mxu0 %v1976
  %2148 = vmatpush.msra.mxu0 %v1975
  %2149 = vmatpush.msra.mxu0 %v1974
  %2150 = vmatpush.msra.mxu0 %v1973
  %2151 = vmatpush.msra.mxu0 %v1972
  %2152 = vmatpush.msra.mxu0 %v1971
  %2153 = vmatpush.msra.mxu0 %v1970
  %2154 = vmatpush.msra.mxu0 %v1969
  %2155 = vmatmul.f32.gmra.mxu0 %v2028
  %v2156 = vpop.f32.mrf.mxu0
  %v2157 = vadd.f32 %v2137, %v2156
  %2158 = vdwg.mxu0
  %2159 = vmatpush.msra.mxu0 %v2000
  %2160 = vmatpush.msra.mxu0 %v1999
  %2161 = vmatpush.msra.mxu0 %v1998
  %2162 = vmatpush.msra.mxu0 %v1997
  %2163 = vmatpush.msra.mxu0 %v1996
  %2164 = vmatpush.msra.mxu0 %v1995
  %2165 = vmatpush.msra.mxu0 %v1994
  %2166 = vmatpush.msra.mxu0 %v1993
  %2167 = vmatpush.msra.mxu0 %v1992
  %2168 = vmatpush.msra.mxu0 %v1991
  %2169 = vmatpush.msra.mxu0 %v1990
  %2170 = vmatpush.msra.mxu0 %v1989
  %2171 = vmatpush.msra.mxu0 %v1988
  %2172 = vmatpush.msra.mxu0 %v1987
  %2173 = vmatpush.msra.mxu0 %v1986
  %2174 = vmatpush.msra.mxu0 %v1985
  %2175 = vmatmul.f32.gmra.mxu0 %v2029
  %v2176 = vpop.f32.mrf.mxu0
  %v2177 = vadd.f32 %v2157, %v2176
  %2178 = vdwg.mxu0
  %2179 = vmatpush.msra.mxu0 %v2016
  %2180 = vmatpush.msra.mxu0 %v2015
  %2181 = vmatpush.msra.mxu0 %v2014
  %2182 = vmatpush.msra.mxu0 %v2013
  %2183 = vmatpush.msra.mxu0 %v2012
  %2184 = vmatpush.msra.mxu0 %v2011
  %2185 = vmatpush.msra.mxu0 %v2010
  %2186 = vmatpush.msra.mxu0 %v2009
  %2187 = vmatpush.msra.mxu0 %v2008
  %2188 = vmatpush.msra.mxu0 %v2007
  %2189 = vmatpush.msra.mxu0 %v2006
  %2190 = vmatpush.msra.mxu0 %v2005
  %2191 = vmatpush.msra.mxu0 %v2004
  %2192 = vmatpush.msra.mxu0 %v2003
  %2193 = vmatpush.msra.mxu0 %v2002
  %2194 = vmatpush.msra.mxu0 %v2001
  %2195 = vmatmul.f32.gmra.mxu0 %v2030
  %v2196 = vpop.f32.mrf.mxu0
  %v2197 = vadd.f32 %v2177, %v2196
  %2198 = vdwg.mxu0
  %v2199 = vmax.f32 %v2197, 0.0
  %v2200 = vld [vmem:[%s6] sm:$0xff]
  %v2201 = vld [vmem:[%s6 + $0x8] sm:$0xff]
  %v2202 = vld [vmem:[%s6 + $0x10] sm:$0xff]
  %v2203 = vld [vmem:[%s6 + $0x18] sm:$0xff]
  %v2204 = vld [vmem:[%s7] sm:$0x3]
  %vm2205 = vcmask 261120
  %v2207 = vsel %vm2205, %v2199, 0
  %2209 = vmatpush.msra.mxu0 0.0
  %2210 = vmatpush.msra.mxu0 0.0
  %2211 = vmatpush.msra.mxu0 0.0
  %2212 = vmatpush.msra.mxu0 0.0
  %2213 = vmatpush.msra.mxu0 0.0
  %2214 = vmatpush.msra.mxu0 0.0
  %2215 = vmatpush.msra.mxu0 0.0
  %2216 = vmatpush.msra.mxu0 0.0
  %2217 = vmatpush.msra.mxu0 0.0
  %2218 = vmatpush.msra.mxu0 0.0
  %2219 = vmatpush.msra.mxu0 0.0
  %2220 = vmatpush.msra.mxu0 0.0
  %2221 = vmatpush.msra.mxu0 %v2203
  %2222 = vmatpush.msra.mxu0 %v2202
  %2223 = vmatpush.msra.mxu0 %v2201
  %2224 = vmatpush.msra.mxu0 %v2200
  %2225 = vmatmul.f32.gmra.mxu0 %v2207
  %v2226 = vpop.f32.mrf.mxu0
  %v2227 = vadd.f32 %v2204, %v2226
  %2228 = vdwg.mxu0
  %v2229 = vmax.f32 %v2227, 0.0
  %s2230 = scalar_lea.vmem %s6, 32
  %v2231 = vld [vmem:[%s2230] sm:$0xff]
  %v2232 = vld [vmem:[%s2230 + $0x8] sm:$0xff]
  %v2233 = vld [vmem:[%s2230 + $0x10] sm:$0xff]
  %v2234 = vld [vmem:[%s2230 + $0x18] sm:$0xff]
  %s2235 = scalar_lea.vmem %s7, 2
  %v2236 = vld [vmem:[%s2235] sm:$0x3]
  %v2238 = vsel %vm2205, %v2229, 0
  %2240 = vmatpush.msra.mxu0 0.0
  %2241 = vmatpush.msra.mxu0 0.0
  %2242 = vmatpush.msra.mxu0 0.0
  %2243 = vmatpush.msra.mxu0 0.0
  %2244 = vmatpush.msra.mxu0 0.0
  %2245 = vmatpush.msra.mxu0 0.0
  %2246 = vmatpush.msra.mxu0 0.0
  %2247 = vmatpush.msra.mxu0 0.0
  %2248 = vmatpush.msra.mxu0 0.0
  %2249 = vmatpush.msra.mxu0 0.0
  %2250 = vmatpush.msra.mxu0 0.0
  %2251 = vmatpush.msra.mxu0 0.0
  %2252 = vmatpush.msra.mxu0 %v2234
  %2253 = vmatpush.msra.mxu0 %v2233
  %2254 = vmatpush.msra.mxu0 %v2232
  %2255 = vmatpush.msra.mxu0 %v2231
  %2256 = vmatmul.f32.gmra.mxu0 %v2238
  %v2257 = vpop.f32.mrf.mxu0
  %v2258 = vadd.f32 %v2236, %v2257
  %2259 = vdwg.mxu0
  %v2260 = vmax.f32 %v2258, 0.0
  %s2261 = scalar_lea.vmem %s6, 64
  %v2262 = vld [vmem:[%s2261] sm:$0xff]
  %v2263 = vld [vmem:[%s2261 + $0x8] sm:$0xff]
  %v2264 = vld [vmem:[%s2261 + $0x10] sm:$0xff]
  %v2265 = vld [vmem:[%s2261 + $0x18] sm:$0xff]
  %s2266 = scalar_lea.vmem %s7, 4
  %v2267 = vld [vmem:[%s2266] sm:$0x3]
  %v2269 = vsel %vm2205, %v2260, 0
  %2271 = vmatpush.msra.mxu0 0.0
  %2272 = vmatpush.msra.mxu0 0.0
  %2273 = vmatpush.msra.mxu0 0.0
  %2274 = vmatpush.msra.mxu0 0.0
  %2275 = vmatpush.msra.mxu0 0.0
  %2276 = vmatpush.msra.mxu0 0.0
  %2277 = vmatpush.msra.mxu0 0.0
  %2278 = vmatpush.msra.mxu0 0.0
  %2279 = vmatpush.msra.mxu0 0.0
  %2280 = vmatpush.msra.mxu0 0.0
  %2281 = vmatpush.msra.mxu0 0.0
  %2282 = vmatpush.msra.mxu0 0.0
  %2283 = vmatpush.msra.mxu0 %v2265
  %2284 = vmatpush.msra.mxu0 %v2264
  %2285 = vmatpush.msra.mxu0 %v2263
  %2286 = vmatpush.msra.mxu0 %v2262
  %2287 = vmatmul.f32.gmra.mxu0 %v2269
  %v2288 = vpop.f32.mrf.mxu0
  %v2289 = vadd.f32 %v2267, %v2288
  %2290 = vdwg.mxu0
  %v2291 = vmax.f32 %v2289, 0.0
  %s2292 = scalar_lea.vmem %s6, 96
  %v2293 = vld [vmem:[%s2292] sm:$0xff]
  %v2294 = vld [vmem:[%s2292 + $0x8] sm:$0xff]
  %v2295 = vld [vmem:[%s2292 + $0x10] sm:$0xff]
  %v2296 = vld [vmem:[%s2292 + $0x18] sm:$0xff]
  %s2297 = scalar_lea.vmem %s7, 6
  %v2298 = vld [vmem:[%s2297] sm:$0x3]
  %v2300 = vsel %vm2205, %v2291, 0
  %2302 = vmatpush.msra.mxu0 0.0
  %2303 = vmatpush.msra.mxu0 0.0
  %2304 = vmatpush.msra.mxu0 0.0
  %2305 = vmatpush.msra.mxu0 0.0
  %2306 = vmatpush.msra.mxu0 0.0
  %2307 = vmatpush.msra.mxu0 0.0
  %2308 = vmatpush.msra.mxu0 0.0
  %2309 = vmatpush.msra.mxu0 0.0
  %2310 = vmatpush.msra.mxu0 0.0
  %2311 = vmatpush.msra.mxu0 0.0
  %2312 = vmatpush.msra.mxu0 0.0
  %2313 = vmatpush.msra.mxu0 0.0
  %2314 = vmatpush.msra.mxu0 %v2296
  %2315 = vmatpush.msra.mxu0 %v2295
  %2316 = vmatpush.msra.mxu0 %v2294
  %2317 = vmatpush.msra.mxu0 %v2293
  %2318 = vmatmul.f32.gmra.mxu0 %v2300
  %v2319 = vpop.f32.mrf.mxu0
  %v2320 = vadd.f32 %v2298, %v2319
  %2321 = vdwg.mxu0
  %v2322 = vmax.f32 %v2320, 0.0
  %s2323 = scalar_lea.vmem %s6, 128
  %v2324 = vld [vmem:[%s2323] sm:$0xff]
  %v2325 = vld [vmem:[%s2323 + $0x8] sm:$0xff]
  %v2326 = vld [vmem:[%s2323 + $0x10] sm:$0xff]
  %v2327 = vld [vmem:[%s2323 + $0x18] sm:$0xff]
  %s2328 = scalar_lea.vmem %s7, 8
  %v2329 = vld [vmem:[%s2328] sm:$0x3]
  %v2331 = vsel %vm2205, %v2322, 0
  %2333 = vmatpush.msra.mxu0 0.0
  %2334 = vmatpush.msra.mxu0 0.0
  %2335 = vmatpush.msra.mxu0 0.0
  %2336 = vmatpush.msra.mxu0 0.0
  %2337 = vmatpush.msra.mxu0 0.0
  %2338 = vmatpush.msra.mxu0 0.0
  %2339 = vmatpush.msra.mxu0 0.0
  %2340 = vmatpush.msra.mxu0 0.0
  %2341 = vmatpush.msra.mxu0 0.0
  %2342 = vmatpush.msra.mxu0 0.0
  %2343 = vmatpush.msra.mxu0 0.0
  %2344 = vmatpush.msra.mxu0 0.0
  %2345 = vmatpush.msra.mxu0 %v2327
  %2346 = vmatpush.msra.mxu0 %v2326
  %2347 = vmatpush.msra.mxu0 %v2325
  %2348 = vmatpush.msra.mxu0 %v2324
  %2349 = vmatmul.f32.gmra.mxu0 %v2331
  %v2350 = vpop.f32.mrf.mxu0
  %v2351 = vadd.f32 %v2329, %v2350
  %2352 = vdwg.mxu0
  %v2353 = vmax.f32 %v2351, 0.0
  %s2354 = scalar_lea.vmem %s6, 160
  %v2355 = vld [vmem:[%s2354] sm:$0xff]
  %v2356 = vld [vmem:[%s2354 + $0x8] sm:$0xff]
  %v2357 = vld [vmem:[%s2354 + $0x10] sm:$0xff]
  %v2358 = vld [vmem:[%s2354 + $0x18] sm:$0xff]
  %s2359 = scalar_lea.vmem %s7, 10
  %v2360 = vld [vmem:[%s2359] sm:$0x3]
  %v2362 = vsel %vm2205, %v2353, 0
  %2364 = vmatpush.msra.mxu0 0.0
  %2365 = vmatpush.msra.mxu0 0.0
  %2366 = vmatpush.msra.mxu0 0.0
  %2367 = vmatpush.msra.mxu0 0.0
  %2368 = vmatpush.msra.mxu0 0.0
  %2369 = vmatpush.msra.mxu0 0.0
  %2370 = vmatpush.msra.mxu0 0.0
  %2371 = vmatpush.msra.mxu0 0.0
  %2372 = vmatpush.msra.mxu0 0.0
  %2373 = vmatpush.msra.mxu0 0.0
  %2374 = vmatpush.msra.mxu0 0.0
  %2375 = vmatpush.msra.mxu0 0.0
  %2376 = vmatpush.msra.mxu0 %v2358
  %2377 = vmatpush.msra.mxu0 %v2357
  %2378 = vmatpush.msra.mxu0 %v2356
  %2379 = vmatpush.msra.mxu0 %v2355
  %2380 = vmatmul.f32.gmra.mxu0 %v2362
  %v2381 = vpop.f32.mrf.mxu0
  %v2382 = vadd.f32 %v2360, %v2381
  %2383 = vdwg.mxu0
  %v2384 = vmax.f32 %v2382, 0.0
  %s2385 = scalar_lea.vmem %s6, 192
  %v2386 = vld [vmem:[%s2385] sm:$0xff]
  %v2387 = vld [vmem:[%s2385 + $0x8] sm:$0xff]
  %v2388 = vld [vmem:[%s2385 + $0x10] sm:$0xff]
  %v2389 = vld [vmem:[%s2385 + $0x18] sm:$0xff]
  %s2390 = scalar_lea.vmem %s7, 12
  %v2391 = vld [vmem:[%s2390] sm:$0x3]
  %v2393 = vsel %vm2205, %v2384, 0
  %2395 = vmatpush.msra.mxu0 0.0
  %2396 = vmatpush.msra.mxu0 0.0
  %2397 = vmatpush.msra.mxu0 0.0
  %2398 = vmatpush.msra.mxu0 0.0
  %2399 = vmatpush.msra.mxu0 0.0
  %2400 = vmatpush.msra.mxu0 0.0
  %2401 = vmatpush.msra.mxu0 0.0
  %2402 = vmatpush.msra.mxu0 0.0
  %2403 = vmatpush.msra.mxu0 0.0
  %2404 = vmatpush.msra.mxu0 0.0
  %2405 = vmatpush.msra.mxu0 0.0
  %2406 = vmatpush.msra.mxu0 0.0
  %2407 = vmatpush.msra.mxu0 %v2389
  %2408 = vmatpush.msra.mxu0 %v2388
  %2409 = vmatpush.msra.mxu0 %v2387
  %2410 = vmatpush.msra.mxu0 %v2386
  %2411 = vmatmul.f32.gmra.mxu0 %v2393
  %v2412 = vpop.f32.mrf.mxu0
  %v2413 = vadd.f32 %v2391, %v2412
  %2414 = vdwg.mxu0
  %v2415 = vmax.f32 %v2413, 0.0
  %s2416 = scalar_lea.vmem %s6, 224
  %v2417 = vld [vmem:[%s2416] sm:$0xff]
  %v2418 = vld [vmem:[%s2416 + $0x8] sm:$0xff]
  %v2419 = vld [vmem:[%s2416 + $0x10] sm:$0xff]
  %v2420 = vld [vmem:[%s2416 + $0x18] sm:$0xff]
  %s2421 = scalar_lea.vmem %s7, 14
  %v2422 = vld [vmem:[%s2421] sm:$0x3]
  %v2424 = vsel %vm2205, %v2415, 0
  %2426 = vmatpush.msra.mxu0 0.0
  %2427 = vmatpush.msra.mxu0 0.0
  %2428 = vmatpush.msra.mxu0 0.0
  %2429 = vmatpush.msra.mxu0 0.0
  %2430 = vmatpush.msra.mxu0 0.0
  %2431 = vmatpush.msra.mxu0 0.0
  %2432 = vmatpush.msra.mxu0 0.0
  %2433 = vmatpush.msra.mxu0 0.0
  %2434 = vmatpush.msra.mxu0 0.0
  %2435 = vmatpush.msra.mxu0 0.0
  %2436 = vmatpush.msra.mxu0 0.0
  %2437 = vmatpush.msra.mxu0 0.0
  %2438 = vmatpush.msra.mxu0 %v2420
  %2439 = vmatpush.msra.mxu0 %v2419
  %2440 = vmatpush.msra.mxu0 %v2418
  %2441 = vmatpush.msra.mxu0 %v2417
  %2442 = vmatmul.f32.gmra.mxu0 %v2424
  %v2443 = vpop.f32.mrf.mxu0
  %v2444 = vadd.f32 %v2422, %v2443
  %2445 = vdwg.mxu0
  %v2446 = vmax.f32 %v2444, 0.0
  %s2447 = scalar_lea.vmem %s6, 256
  %v2448 = vld [vmem:[%s2447] sm:$0xff]
  %v2449 = vld [vmem:[%s2447 + $0x8] sm:$0xff]
  %v2450 = vld [vmem:[%s2447 + $0x10] sm:$0xff]
  %v2451 = vld [vmem:[%s2447 + $0x18] sm:$0xff]
  %s2452 = scalar_lea.vmem %s7, 16
  %v2453 = vld [vmem:[%s2452] sm:$0x3]
  %v2455 = vsel %vm2205, %v2446, 0
  %2457 = vmatpush.msra.mxu0 0.0
  %2458 = vmatpush.msra.mxu0 0.0
  %2459 = vmatpush.msra.mxu0 0.0
  %2460 = vmatpush.msra.mxu0 0.0
  %2461 = vmatpush.msra.mxu0 0.0
  %2462 = vmatpush.msra.mxu0 0.0
  %2463 = vmatpush.msra.mxu0 0.0
  %2464 = vmatpush.msra.mxu0 0.0
  %2465 = vmatpush.msra.mxu0 0.0
  %2466 = vmatpush.msra.mxu0 0.0
  %2467 = vmatpush.msra.mxu0 0.0
  %2468 = vmatpush.msra.mxu0 0.0
  %2469 = vmatpush.msra.mxu0 %v2451
  %2470 = vmatpush.msra.mxu0 %v2450
  %2471 = vmatpush.msra.mxu0 %v2449
  %2472 = vmatpush.msra.mxu0 %v2448
  %2473 = vmatmul.f32.gmra.mxu0 %v2455
  %v2474 = vpop.f32.mrf.mxu0
  %v2475 = vadd.f32 %v2453, %v2474
  %2476 = vdwg.mxu0
  %v2477 = vmax.f32 %v2475, 0.0
  %v2478 = vld [vmem:[%s8] sm:$0xff]
  %v2479 = vld [vmem:[%s8 + $0x8] sm:$0xff]
  %v2480 = vld [vmem:[%s8 + $0x10] sm:$0xff]
  %v2481 = vld [vmem:[%s8 + $0x18] sm:$0xff]
  %v2482 = vld [vmem:[%s9] sm:$0x3]
  %v2484 = vsel %vm2205, %v2477, 0
  %2486 = vmatpush.msra.mxu0 0.0
  %2487 = vmatpush.msra.mxu0 0.0
  %2488 = vmatpush.msra.mxu0 0.0
  %2489 = vmatpush.msra.mxu0 0.0
  %2490 = vmatpush.msra.mxu0 0.0
  %2491 = vmatpush.msra.mxu0 0.0
  %2492 = vmatpush.msra.mxu0 0.0
  %2493 = vmatpush.msra.mxu0 0.0
  %2494 = vmatpush.msra.mxu0 0.0
  %2495 = vmatpush.msra.mxu0 0.0
  %2496 = vmatpush.msra.mxu0 0.0
  %2497 = vmatpush.msra.mxu0 0.0
  %2498 = vmatpush.msra.mxu0 %v2481
  %2499 = vmatpush.msra.mxu0 %v2480
  %2500 = vmatpush.msra.mxu0 %v2479
  %2501 = vmatpush.msra.mxu0 %v2478
  %2502 = vmatmul.f32.gmra.mxu0 %v2484
  %v2503 = vpop.f32.mrf.mxu0
  %v2504 = vadd.f32 %v2482, %v2503
  %2505 = vdwg.mxu0
  %2506 = vst [vmem:[%s10] sm:$0x3] %v2504
  // Predicated region
  $region42: #{lstm_forecaster_forward.1} parent=0 // pred_check
    _
  $region43: #{lstm_forecaster_forward.1} parent=0 // pred_check_branch
    %2508 = sbr.rel (0) target = $region45
  $region44: #{lstm_forecaster_forward.1} parent=0 // pred_region
    _
  $region45: #{lstm_forecaster_forward.1} parent=0 // pred_fallthru
    _
  // Predicated region
  $region46: #{lstm_forecaster_forward.1} parent=0 // pred_check
    _
  $region47: #{lstm_forecaster_forward.1} parent=0 // pred_check_branch
    %2510 = sbr.rel (0) target = $region49
  $region48: #{lstm_forecaster_forward.1} parent=0 // pred_region
    _
  $region49: #{lstm_forecaster_forward.1} parent=0 // pred_fallthru
    _

</llo_original>
